<compile_context>
chip_gen: v5e
topology: v5e:2x2
jax: 0.10.0
libtpu: 0.0.40
codegen_flags: <defaults>
</compile_context>

<pallas_src>
import functools

import jax
import jax.numpy as jnp
from jax.experimental import pallas as pl
from jax.experimental.pallas import tpu as pltpu

LEAKY_SLOPE = 0.01           # nn.LeakyReLU() default
BN_EPS = 1e-5                # nn.BatchNorm2d default
CH_PAD = 32                  # channel padding unit (4*CH_PAD = 128 MXU lanes)
LANE = 128

# Per-copy tile byte budgets (double buffering + pinned weights stay < 48 MiB).
P1_TILE_BYTES = 2 * 1024 * 1024      # deconv pass 1 (input tile + output tile)
P2_TILE_BYTES = 4 * 1024 * 1024      # BN/LeakyReLU streaming pass
P3_TILE_BYTES = 2 * 1024 * 1024      # final 3x3 conv
VMEM_LIMIT = 48 * 1024 * 1024


def _round_up(x, m):
    return (x + m - 1) // m * m


def _pick_div(total, cap, mult=1):
    """Largest divisor of `total` <= cap that is == total or a multiple of `mult`."""
    cap = max(1, min(cap, total))
    for d in range(cap, 0, -1):
        if total % d == 0 and (d == total or d % mult == 0):
            return d
    return total


def _params(rank):
    return pltpu.CompilerParams(
        dimension_semantics=("parallel",) * rank,
        vmem_limit_bytes=VMEM_LIMIT,
    )


def _bottom_halo(x, th):
    # halo[b, i] = x[b, (i+1)*th]  (zeros below the bottom edge); (n, g, w, c)
    return jnp.pad(x[:, th::th], ((0, 0), (0, 1), (0, 0), (0, 0)))


def _top_halo(x, th, g):
    # halo[b, i] = x[b, i*th - 1]  (zeros above the top edge); (n, g, w, c)
    return jnp.pad(x[:, th - 1::th][:, :g - 1],
                   ((0, 0), (1, 0), (0, 0), (0, 0)))


# ----------------------------- Pallas kernels ------------------------------

def _linear_kernel(x_ref, w_ref, b_ref, o_ref):
    # decoder_input: z @ W + b  (tiny; intentionally untiled)
    o_ref[...] = (
        jnp.dot(x_ref[...], w_ref[...], preferred_element_type=jnp.float32)
        + b_ref[...]
    )


def _deconv_phase_kernel(x_ref, hb_ref, w_ref, b_ref, o_ref, stats_ref):
    # x_ref:  (1, th, w, ci)        bf16 NHWC input row tile
    # hb_ref: (1, 1,  w, ci)        bf16 bottom halo row (input row below tile)
    # w_ref:  (4*ci, 4*co)          bf16 phase weights: rows = taps
    #                               [t00|t01|t10|t11], cols = (dy, dx, ch)
    # b_ref:  (1, 4*co)             f32 bias tiled over the 4 phases
    # o_ref:  (1, th, 2, w, 2*co)   bf16 de-phased activation (row-major == NHWC)
    # stats_ref: (1, 1, 8, 4*co)    f32, row 0 = sum, row 1 = sum of squares
    _, th, w, ci = x_ref.shape
    co4 = w_ref.shape[1]
    co2 = co4 // 2

    xt = x_ref[0]                                           # (th, w, ci)
    xe = jnp.concatenate([xt, hb_ref[0]], axis=0)           # (th+1, w, ci)
    zc = jnp.zeros((th + 1, 1, ci), xe.dtype)
    xe = jnp.concatenate([xe, zc], axis=1)                  # (th+1, w+1, ci)

    acc = jnp.zeros((th * w, co4), jnp.float32) + b_ref[...]
    for k, (dy, dx) in enumerate(((0, 0), (0, 1), (1, 0), (1, 1))):
        tap = xe[dy:dy + th, dx:dx + w, :].reshape(th * w, ci)
        acc += jnp.dot(tap, w_ref[k * ci:(k + 1) * ci, :],
                       preferred_element_type=jnp.float32)

    # BN partial statistics from the f32 accumulator (NOT the bf16 store).
    s = jnp.sum(acc, axis=0, keepdims=True)
    sq = jnp.sum(acc * acc, axis=0, keepdims=True)
    row = jax.lax.broadcasted_iota(jnp.int32, (8, co4), 0)
    stats_ref[0, 0] = jnp.where(row == 0, s, 0.0) + jnp.where(row == 1, sq, 0.0)

    # De-phased bf16 store; acc column order is (dy, dx, ch).
    o_ref[0, :, 0, :, :] = acc[:, :co2].reshape(th, w, co2).astype(o_ref.dtype)
    o_ref[0, :, 1, :, :] = acc[:, co2:].reshape(th, w, co2).astype(o_ref.dtype)


def _bn_lrelu_kernel(a_ref, scale_ref, shift_ref, o_ref):
    # y = LeakyReLU(a * scale + shift); upcast bf16 -> f32 (v5e VPU has no bf16).
    a = a_ref[...].astype(jnp.float32)
    y = a * scale_ref[...] + shift_ref[...]
    o_ref[...] = jnp.where(y > 0.0, y, LEAKY_SLOPE * y).astype(o_ref.dtype)


def _conv3_tanh_kernel(x_ref, ht_ref, hb_ref, w_ref, b_ref, o_ref):
    # Final Conv2d(k=3, p=1) with in-kernel tap formation, fused Tanh.
    _, th, W, c = x_ref.shape
    co = w_ref.shape[1]

    xe = jnp.concatenate([ht_ref[0], x_ref[0], hb_ref[0]], axis=0)  # (th+2, W, c)
    zc = jnp.zeros((th + 2, 1, c), xe.dtype)
    xe = jnp.concatenate([zc, xe, zc], axis=1)                      # (th+2, W+2, c)

    acc = jnp.zeros((th * W, co), jnp.float32) + b_ref[...]
    for t in range(9):
        ky, kx = t // 3, t % 3
        tap = xe[ky:ky + th, kx:kx + W, :].reshape(th * W, c)
        acc += jnp.dot(tap, w_ref[t * c:(t + 1) * c, :],
                       preferred_element_type=jnp.float32)
    o_ref[0] = jnp.tanh(acc).reshape(th, W, co)


# --------------------------- pallas_call wrappers ---------------------------

def _linear(z, w, b):
    n = z.shape[0]
    m = w.shape[1]
    vmem = pl.BlockSpec(memory_space=pltpu.MemorySpace.VMEM)
    return pl.pallas_call(
        _linear_kernel,
        out_shape=jax.ShapeDtypeStruct((n, m), jnp.float32),
        in_specs=[vmem, vmem, vmem],
        out_specs=vmem,
    )(z, w, b)


def _deconv_phase(x, w_big, bias):
    """Pass 1: phase-decomposed ConvTranspose2d(k3,s2,p1,op1) + bias.

    Returns:
      acc5:  (n, h, 2, w, 2*co) bf16  -- row-major flattening == NHWC (n,2h,2w,co)
      stats: (n, g, 8, 4*co)    f32   -- rows 0/1 = per-tile sum / sum-of-squares
    """
    n, h, w, ci = x.shape
    co4 = w_big.shape[1]
    co = co4 // 4

    bytes_per_row = w * (2 * ci + 8 * co) + 16
    th = _pick_div(h, max(1, P1_TILE_BYTES // bytes_per_row))
    g = h // th
    hb = _bottom_halo(x, th)

    return pl.pallas_call(
        _deconv_phase_kernel,
        grid=(n, g),
        in_specs=[
            pl.BlockSpec((1, th, w, ci), lambda b, i: (b, i, 0, 0)),
            pl.BlockSpec((1, 1, w, ci), lambda b, i: (b, i, 0, 0)),
            pl.BlockSpec((4 * ci, co4), lambda b, i: (0, 0)),   # pinned weights
            pl.BlockSpec((1, co4), lambda b, i: (0, 0)),        # pinned bias
        ],
        out_specs=(
            pl.BlockSpec((1, th, 2, w, 2 * co), lambda b, i: (b, i, 0, 0, 0)),
            pl.BlockSpec((1, 1, 8, co4), lambda b, i: (b, i, 0, 0)),
        ),
        out_shape=(
            jax.ShapeDtypeStruct((n, h, 2, w, 2 * co), jnp.bfloat16),
            jax.ShapeDtypeStruct((n, g, 8, co4), jnp.float32),
        ),
        compiler_params=_params(2),
    )(x, hb, w_big, bias)


def _bn_lrelu(acc2, scale_row, shift_row):
    """Pass 2: streaming BN-apply + LeakyReLU over the lane-dense 2-D view."""
    r, c = acc2.shape
    tr = _pick_div(r, max(8, P2_TILE_BYTES // (4 * c)), mult=8)
    g = r // tr
    return pl.pallas_call(
        _bn_lrelu_kernel,
        grid=(g,),
        in_specs=[
            pl.BlockSpec((tr, c), lambda i: (i, 0)),
            pl.BlockSpec((1, c), lambda i: (0, 0)),
            pl.BlockSpec((1, c), lambda i: (0, 0)),
        ],
        out_specs=pl.BlockSpec((tr, c), lambda i: (i, 0)),
        out_shape=jax.ShapeDtypeStruct((r, c), jnp.bfloat16),
        compiler_params=_params(1),
    )(acc2, scale_row, shift_row)


def _conv3_tanh(x, w_mat, bias):
    n, H, W, c = x.shape
    co = w_mat.shape[1]
    bytes_per_row = W * (2 * c + 4 * co) + 16
    th = _pick_div(H, max(1, P3_TILE_BYTES // bytes_per_row))
    g = H // th
    ht = _top_halo(x, th, g)
    hb = _bottom_halo(x, th)
    return pl.pallas_call(
        _conv3_tanh_kernel,
        grid=(n, g),
        in_specs=[
            pl.BlockSpec((1, th, W, c), lambda b, i: (b, i, 0, 0)),
            pl.BlockSpec((1, 1, W, c), lambda b, i: (b, i, 0, 0)),
            pl.BlockSpec((1, 1, W, c), lambda b, i: (b, i, 0, 0)),
            pl.BlockSpec((9 * c, co), lambda b, i: (0, 0)),     # pinned weights
            pl.BlockSpec((1, co), lambda b, i: (0, 0)),         # pinned bias
        ],
        out_specs=pl.BlockSpec((1, th, W, co), lambda b, i: (b, i, 0, 0)),
        out_shape=jax.ShapeDtypeStruct((n, H, W, co), jnp.float32),
        compiler_params=_params(2),
    )(x, ht, hb, w_mat, bias)


# ------------------------------- layer glue ---------------------------------

def _deconv_bn_lrelu(x, layer):
    # x: (n, h, w, ci_pad) NHWC bf16 (padded channels are exactly zero).
    n, h, w, _ = x.shape
    co = layer["gamma"].shape[0]

    acc5, stats = _deconv_phase(x, layer["w"], layer["b"])

    # Global training-mode BatchNorm2d statistics over all n*(2h)*(2w) pixels
    # (biased variance), reduced over the 4 phase column groups.
    col_sum = jnp.sum(stats[:, :, 0, :], axis=(0, 1)).reshape(4, co).sum(0)
    col_sq = jnp.sum(stats[:, :, 1, :], axis=(0, 1)).reshape(4, co).sum(0)
    cnt = jnp.float32(n * 2 * h * 2 * w)
    mean = col_sum / cnt
    # TODO(synk): E[x^2]-mean^2 in f32 can lose precision for very large
    # batch*spatial counts; switch to a compensated / two-pass reduction there.
    var = jnp.maximum(col_sq / cnt - mean * mean, 0.0)
    inv = jax.lax.rsqrt(var + BN_EPS)
    scale = layer["gamma"] * inv
    shift = layer["beta"] - mean * scale

    c2 = 2 * w * co                      # lane-dense row width of the NHWC view
    scale_row = jnp.tile(scale, 2 * w).reshape(1, c2)
    shift_row = jnp.tile(shift, 2 * w).reshape(1, c2)

    acc2 = acc5.reshape(n * 2 * h, c2)   # free reshape (row-major == NHWC)
    y = _bn_lrelu(acc2, scale_row, shift_row)
    return y.reshape(n, 2 * h, 2 * w, co)


# ------------------------------ parameters ----------------------------------

def init_params(key, out_channels, latent_dim, hidden_dims, ph):
    keys = iter(jax.random.split(key, 2 * len(hidden_dims) + 8))
    s = 0.05

    params = {
        "lin_w": s * jax.random.normal(
            next(keys), (latent_dim, hidden_dims[0] * ph * ph), jnp.float32),
        "lin_b": s * jax.random.normal(
            next(keys), (1, hidden_dims[0] * ph * ph), jnp.float32),
    }

    def make_deconv(kw, kb, ci, co):
        ci_pad = _round_up(ci, CH_PAD)
        co_pad = _round_up(co, CH_PAD)
        wt = s * jax.random.normal(kw, (ci, co, 3, 3), jnp.float32)  # torch layout
        b = s * jax.random.normal(kb, (co,), jnp.float32)
        wp = jnp.zeros((ci_pad, co_pad, 3, 3), jnp.float32).at[:ci, :co].set(wt)
        z = jnp.zeros((ci_pad, co_pad), jnp.float32)
        # 2x2 sub-pixel form of ConvTranspose2d(k=3, s=2, p=1, op=1):
        # rows = taps [t00|t01|t10|t11], cols = phases (dy,dx) channel-minor,
        # with W[ky,kx] = wt[:, :, ky, kx].
        w_big = jnp.block([
            [wp[:, :, 1, 1], wp[:, :, 1, 2], wp[:, :, 2, 1], wp[:, :, 2, 2]],
            [z,              wp[:, :, 1, 0], z,              wp[:, :, 2, 0]],
            [z,              z,              wp[:, :, 0, 1], wp[:, :, 0, 2]],
            [z,              z,              z,              wp[:, :, 0, 0]],
        ])
        b_pad = jnp.zeros((co_pad,), jnp.float32).at[:co].set(b)
        return dict(
            w=w_big.astype(jnp.bfloat16),
            b=jnp.tile(b_pad, 4).reshape(1, 4 * co_pad),
            gamma=jnp.zeros((co_pad,), jnp.float32).at[:co].set(1.0),
            beta=jnp.zeros((co_pad,), jnp.float32),
        )

    dec = []
    for i in range(len(hidden_dims) - 1):
        dec.append(make_deconv(next(keys), next(keys),
                               hidden_dims[i], hidden_dims[i + 1]))
    params["decoder"] = dec
    params["final_ct"] = make_deconv(next(keys), next(keys),
                                     hidden_dims[-1], hidden_dims[-1])

    # Final Conv2d(hidden[-1], out_channels, k=3, p=1), lane-dense 128 output.
    ci = hidden_dims[-1]
    ci_pad = _round_up(ci, CH_PAD)
    co_pad = _round_up(out_channels, LANE)
    wc = s * jax.random.normal(next(keys), (out_channels, ci, 3, 3), jnp.float32)
    bc = s * jax.random.normal(next(keys), (out_channels,), jnp.float32)
    wcp = jnp.zeros((out_channels, ci_pad, 3, 3), jnp.float32).at[:, :ci].set(wc)
    w_mat = jnp.transpose(wcp, (2, 3, 1, 0)).reshape(9 * ci_pad, out_channels)
    w_mat = jnp.zeros((9 * ci_pad, co_pad),
                      jnp.float32).at[:, :out_channels].set(w_mat)
    params["final_conv_w"] = w_mat.astype(jnp.bfloat16)
    params["final_conv_b"] = (
        jnp.zeros((1, co_pad), jnp.float32).at[0, :out_channels].set(bc))
    return params


# ------------------------------ Decoder model -------------------------------

def decoder_forward(z, params, hidden_dims, patch_size_hidden, out_channels):
    n = z.shape[0]
    ph = patch_size_hidden
    c0 = hidden_dims[0]
    c0_pad = _round_up(c0, CH_PAD)

    # self.decoder_input(z)  -- Linear(latent_dim, hidden_dims[0] * ph**2)
    h = _linear(z, params["lin_w"], params["lin_b"])

    # result.view(-1, hidden_dims[0], ph, ph) -> NHWC, zero-pad channels, bf16.
    x = h.reshape(n, c0, ph, ph)
    x = jnp.transpose(x, (0, 2, 3, 1))
    if c0_pad != c0:
        x = jnp.pad(x, ((0, 0), (0, 0), (0, 0), (0, c0_pad - c0)))
    x = x.astype(jnp.bfloat16)

    # self.decoder: ConvTranspose2d + BN + LeakyReLU blocks
    for layer in params["decoder"]:
        x = _deconv_bn_lrelu(x, layer)

    # final_layer part 1: ConvTranspose2d + BN + LeakyReLU
    x = _deconv_bn_lrelu(x, params["final_ct"])

    # final_layer part 2: Conv2d(k=3, p=1) + Tanh
    y = _conv3_tanh(x, params["final_conv_w"], params["final_conv_b"])
    y = y[:, :, :, :out_channels]
    return jnp.transpose(y, (0, 3, 1, 2))                  # back to NCHW


# ---------------------------------- main ------------------------------------

if __name__ == "__main__":
    OUT_CHANNELS = 3
    LATENT_DIM = 8
    HIDDEN_DIMS = [32, 16]   # reversed hidden dims, small stand-in for [512,...,32]
    PH = 4                   # patch_size_hidden
    N = 2

    key = jax.random.PRNGKey(0)
    kz, kp = jax.random.split(key)
    z = jax.random.normal(kz, (N, LATENT_DIM), dtype=jnp.float32)
    params = init_params(kp, OUT_CHANNELS, LATENT_DIM, HIDDEN_DIMS, PH)

    fwd = jax.jit(functools.partial(
        decoder_forward, hidden_dims=HIDDEN_DIMS,
        patch_size_hidden=PH, out_channels=OUT_CHANNELS))
    out = jax.block_until_ready(fwd(z, params))

    # ph=4, two stride-2 transposed convs -> 16x16 output, NCHW like PyTorch.
    expected_hw = PH * (2 ** len(HIDDEN_DIMS))
    assert out.shape == (N, OUT_CHANNELS, expected_hw, expected_hw), out.shape
    assert bool(jnp.all(jnp.isfinite(out)))
    print("KERNEL_OK")
</pallas_src>

<mosaic_0001>
module attributes {stable_mosaic.version = 11 : i64} {
  func.func @_linear_kernel(%arg0: memref<2x8xf32, #tpu.memory_space<vmem>>, %arg1: memref<8x512xf32, #tpu.memory_space<vmem>>, %arg2: memref<1x512xf32, #tpu.memory_space<vmem>>, %arg3: memref<2x512xf32, #tpu.memory_space<vmem>>) attributes {dimension_semantics = [], scalar_prefetch = 0 : i64, scratch_operands = 0 : i64, tpu.core_type = #tpu.core_type<tc>} {
    %c0 = arith.constant 0 : index
    %c0_0 = arith.constant 0 : index
    %0 = vector.load %arg0[%c0, %c0_0] : memref<2x8xf32, #tpu.memory_space<vmem>>, vector<2x8xf32>
    %c0_1 = arith.constant 0 : index
    %c0_2 = arith.constant 0 : index
    %1 = vector.load %arg1[%c0_1, %c0_2] : memref<8x512xf32, #tpu.memory_space<vmem>>, vector<8x512xf32>
    %cst = arith.constant dense<0.000000e+00> : vector<2x512xf32>
    %2 = tpu.matmul %0, %1, %cst {dimension_numbers = #tpu.dot_dimension_numbers<[1], [0], [0], [1], [0, 0, 1, 1], [], []>} : vector<2x8xf32>, vector<8x512xf32>, vector<2x512xf32> -> vector<2x512xf32>
    %c0_3 = arith.constant 0 : index
    %c0_4 = arith.constant 0 : index
    %3 = vector.load %arg2[%c0_3, %c0_4] : memref<1x512xf32, #tpu.memory_space<vmem>>, vector<1x512xf32>
    %4 = vector.broadcast %3 : vector<1x512xf32> to vector<2x512xf32>
    %5 = arith.addf %2, %4 : vector<2x512xf32>
    %c0_5 = arith.constant 0 : index
    %c0_6 = arith.constant 0 : index
    %6 = vector.load %arg3[%c0_5, %c0_6] : memref<2x512xf32, #tpu.memory_space<vmem>>, vector<2x512xf32>
    tpu.vector_store %arg3[%c0_5, %c0_6], %5 {strides = array<i32>} : memref<2x512xf32, #tpu.memory_space<vmem>>, vector<2x512xf32>,
    return
  }
}

module attributes {stable_mosaic.version = 11 : i64} {
  func.func @_deconv_phase_kernel(%arg0: i32, %arg1: i32, %arg2: memref<1x4x4x32xbf16, #tpu.memory_space<vmem>>, %arg3: memref<1x1x4x32xbf16, #tpu.memory_space<vmem>>, %arg4: memref<128x128xbf16, #tpu.memory_space<vmem>>, %arg5: memref<1x128xf32, #tpu.memory_space<vmem>>, %arg6: memref<1x4x2x4x64xbf16, #tpu.memory_space<vmem>>, %arg7: memref<1x1x8x128xf32, #tpu.memory_space<vmem>>) attributes {dimension_semantics = [#tpu.dimension_semantics<parallel>, #tpu.dimension_semantics<parallel>], iteration_bounds = array<i64: 2, 1>, scalar_prefetch = 0 : i64, scratch_operands = 0 : i64, tpu.core_type = #tpu.core_type<tc>, window_params = [{transform_indices = @transform_0, window_bounds = array<i64: 1, 4, 4, 32>}, {transform_indices = @transform_1, window_bounds = array<i64: 1, 1, 4, 32>}, {pipeline_mode = #tpu.pipeline_mode<synchronous>, transform_indices = @transform_2, window_bounds = array<i64: 128, 128>}, {pipeline_mode = #tpu.pipeline_mode<synchronous>, transform_indices = @transform_3, window_bounds = array<i64: 1, 128>}, {transform_indices = @transform_4, window_bounds = array<i64: 1, 4, 2, 4, 64>}, {transform_indices = @transform_5, window_bounds = array<i64: 1, 1, 8, 128>}]} {
    %c0 = arith.constant 0 : index
    %c0_0 = arith.constant 0 : index
    %c0_1 = arith.constant 0 : index
    %c0_2 = arith.constant 0 : index
    %0 = vector.load %arg2[%c0, %c0_0, %c0_1, %c0_2] : memref<1x4x4x32xbf16, #tpu.memory_space<vmem>>, vector<1x4x4x32xbf16>
    %1 = vector.shape_cast %0 : vector<1x4x4x32xbf16> to vector<4x4x32xbf16>
    %c0_3 = arith.constant 0 : index
    %c0_4 = arith.constant 0 : index
    %c0_5 = arith.constant 0 : index
    %c0_6 = arith.constant 0 : index
    %2 = vector.load %arg3[%c0_3, %c0_4, %c0_5, %c0_6] : memref<1x1x4x32xbf16, #tpu.memory_space<vmem>>, vector<1x1x4x32xbf16>
    %3 = vector.shape_cast %2 : vector<1x1x4x32xbf16> to vector<1x4x32xbf16>
    %4 = tpu.concatenate %1, %3 in 0 : vector<4x4x32xbf16>, vector<1x4x32xbf16> -> vector<5x4x32xbf16>
    %cst = arith.constant 0.000000e+00 : bf16
    %5 = vector.broadcast %cst : bf16 to vector<5x1x32xbf16>
    %6 = tpu.concatenate %4, %5 in 1 : vector<5x4x32xbf16>, vector<5x1x32xbf16> -> vector<5x5x32xbf16>
    %cst_7 = arith.constant 0.000000e+00 : f32
    %7 = vector.broadcast %cst_7 : f32 to vector<16x128xf32>
    %c0_8 = arith.constant 0 : index
    %c0_9 = arith.constant 0 : index
    %8 = vector.load %arg5[%c0_8, %c0_9] : memref<1x128xf32, #tpu.memory_space<vmem>>, vector<1x128xf32>
    %9 = vector.broadcast %8 : vector<1x128xf32> to vector<16x128xf32>
    %10 = arith.addf %7, %9 : vector<16x128xf32>
    %11 = vector.extract_strided_slice %6 {offsets = [0, 0, 0], sizes = [4, 4, 32], strides = [1, 1, 1]} : vector<5x5x32xbf16> to vector<4x4x32xbf16>
    %12 = vector.shape_cast %11 : vector<4x4x32xbf16> to vector<16x32xbf16>
    %c0_10 = arith.constant 0 : index
    %c0_11 = arith.constant 0 : index
    %13 = vector.load %arg4[%c0_10, %c0_11] : memref<128x128xbf16, #tpu.memory_space<vmem>>, vector<32x128xbf16>
    %cst_12 = arith.constant dense<0.000000e+00> : vector<16x128xf32>
    %14 = tpu.matmul %12, %13, %cst_12 {dimension_numbers = #tpu.dot_dimension_numbers<[1], [0], [0], [1], [0, 0, 1, 1], [], []>} : vector<16x32xbf16>, vector<32x128xbf16>, vector<16x128xf32> -> vector<16x128xf32>
    %15 = arith.addf %10, %14 : vector<16x128xf32>
    %16 = vector.extract_strided_slice %6 {offsets = [0, 1, 0], sizes = [4, 4, 32], strides = [1, 1, 1]} : vector<5x5x32xbf16> to vector<4x4x32xbf16>
    %17 = vector.shape_cast %16 : vector<4x4x32xbf16> to vector<16x32xbf16>
    %c32 = arith.constant 32 : index
    %c0_13 = arith.constant 0 : index
    %18 = vector.load %arg4[%c32, %c0_13] : memref<128x128xbf16, #tpu.memory_space<vmem>>, vector<32x128xbf16>
    %cst_14 = arith.constant dense<0.000000e+00> : vector<16x128xf32>
    %19 = tpu.matmul %17, %18, %cst_14 {dimension_numbers = #tpu.dot_dimension_numbers<[1], [0], [0], [1], [0, 0, 1, 1], [], []>} : vector<16x32xbf16>, vector<32x128xbf16>, vector<16x128xf32> -> vector<16x128xf32>
    %20 = arith.addf %15, %19 : vector<16x128xf32>
    %21 = vector.extract_strided_slice %6 {offsets = [1, 0, 0], sizes = [4, 4, 32], strides = [1, 1, 1]} : vector<5x5x32xbf16> to vector<4x4x32xbf16>
    %22 = vector.shape_cast %21 : vector<4x4x32xbf16> to vector<16x32xbf16>
    %c64 = arith.constant 64 : index
    %c0_15 = arith.constant 0 : index
    %23 = vector.load %arg4[%c64, %c0_15] : memref<128x128xbf16, #tpu.memory_space<vmem>>, vector<32x128xbf16>
    %cst_16 = arith.constant dense<0.000000e+00> : vector<16x128xf32>
    %24 = tpu.matmul %22, %23, %cst_16 {dimension_numbers = #tpu.dot_dimension_numbers<[1], [0], [0], [1], [0, 0, 1, 1], [], []>} : vector<16x32xbf16>, vector<32x128xbf16>, vector<16x128xf32> -> vector<16x128xf32>
    %25 = arith.addf %20, %24 : vector<16x128xf32>
    %26 = vector.extract_strided_slice %6 {offsets = [1, 1, 0], sizes = [4, 4, 32], strides = [1, 1, 1]} : vector<5x5x32xbf16> to vector<4x4x32xbf16>
    %27 = vector.shape_cast %26 : vector<4x4x32xbf16> to vector<16x32xbf16>
    %c96 = arith.constant 96 : index
    %c0_17 = arith.constant 0 : index
    %28 = vector.load %arg4[%c96, %c0_17] : memref<128x128xbf16, #tpu.memory_space<vmem>>, vector<32x128xbf16>
    %cst_18 = arith.constant dense<0.000000e+00> : vector<16x128xf32>
    %29 = tpu.matmul %27, %28, %cst_18 {dimension_numbers = #tpu.dot_dimension_numbers<[1], [0], [0], [1], [0, 0, 1, 1], [], []>} : vector<16x32xbf16>, vector<32x128xbf16>, vector<16x128xf32> -> vector<16x128xf32>
    %30 = arith.addf %25, %29 : vector<16x128xf32>
    %cst_19 = arith.constant dense<0.000000e+00> : vector<128xf32>
    %31 = vector.multi_reduction <add>, %30, %cst_19 [0] : vector<16x128xf32> to vector<128xf32>
    %32 = vector.shape_cast %31 : vector<128xf32> to vector<1x128xf32>
    %33 = arith.mulf %30, %30 : vector<16x128xf32>
    %cst_20 = arith.constant dense<0.000000e+00> : vector<128xf32>
    %34 = vector.multi_reduction <add>, %33, %cst_20 [0] : vector<16x128xf32> to vector<128xf32>
    %35 = vector.shape_cast %34 : vector<128xf32> to vector<1x128xf32>
    %36 = tpu.iota {dimensions = array<i32: 0>} : vector<8x128xi32>
    %c0_i32 = arith.constant 0 : i32
    %37 = vector.broadcast %c0_i32 : i32 to vector<8x128xi32>
    %38 = arith.cmpi eq, %36, %37 : vector<8x128xi32>
    %cst_21 = arith.constant 0.000000e+00 : f32
    %39 = vector.shape_cast %32 : vector<1x128xf32> to vector<1x128xf32>
    %40 = vector.broadcast %39 : vector<1x128xf32> to vector<8x128xf32>
    %41 = vector.broadcast %cst_21 : f32 to vector<8x128xf32>
    %42 = arith.select %38, %40, %41 : vector<8x128xi1>, vector<8x128xf32>
    %c1_i32 = arith.constant 1 : i32
    %43 = vector.broadcast %c1_i32 : i32 to vector<8x128xi32>
    %44 = arith.cmpi eq, %36, %43 : vector<8x128xi32>
    %cst_22 = arith.constant 0.000000e+00 : f32
    %45 = vector.shape_cast %35 : vector<1x128xf32> to vector<1x128xf32>
    %46 = vector.broadcast %45 : vector<1x128xf32> to vector<8x128xf32>
    %47 = vector.broadcast %cst_22 : f32 to vector<8x128xf32>
    %48 = arith.select %44, %46, %47 : vector<8x128xi1>, vector<8x128xf32>
    %49 = arith.addf %42, %48 : vector<8x128xf32>
    %c0_23 = arith.constant 0 : index
    %c0_24 = arith.constant 0 : index
    %c0_25 = arith.constant 0 : index
    %c0_26 = arith.constant 0 : index
    %50 = vector.load %arg7[%c0_23, %c0_24, %c0_25, %c0_26] : memref<1x1x8x128xf32, #tpu.memory_space<vmem>>, vector<1x1x8x128xf32>
    %51 = vector.shape_cast %50 : vector<1x1x8x128xf32> to vector<8x128xf32>
    %52 = vector.shape_cast %49 : vector<8x128xf32> to vector<1x1x8x128xf32>
    tpu.vector_store %arg7[%c0_23, %c0_24, %c0_25, %c0_26], %52 {strides = array<i32>} : memref<1x1x8x128xf32, #tpu.memory_space<vmem>>, vector<1x1x8x128xf32>,
    %53 = vector.extract_strided_slice %30 {offsets = [0, 0], sizes = [16, 64], strides = [1, 1]} : vector<16x128xf32> to vector<16x64xf32>
    %54 = vector.shape_cast %53 : vector<16x64xf32> to vector<4x4x64xf32>
    %55 = arith.truncf %54 : vector<4x4x64xf32> to vector<4x4x64xbf16>
    %c0_27 = arith.constant 0 : index
    %c0_28 = arith.constant 0 : index
    %c0_29 = arith.constant 0 : index
    %c0_30 = arith.constant 0 : index
    %c0_31 = arith.constant 0 : index
    %56 = vector.load %arg6[%c0_27, %c0_28, %c0_29, %c0_30, %c0_31] : memref<1x4x2x4x64xbf16, #tpu.memory_space<vmem>>, vector<1x4x1x4x64xbf16>
    %57 = vector.shape_cast %56 : vector<1x4x1x4x64xbf16> to vector<4x4x64xbf16>
    %58 = vector.shape_cast %55 : vector<4x4x64xbf16> to vector<1x4x1x4x64xbf16>
    tpu.vector_store %arg6[%c0_27, %c0_28, %c0_29, %c0_30, %c0_31], %58 {strides = array<i32>} : memref<1x4x2x4x64xbf16, #tpu.memory_space<vmem>>, vector<1x4x1x4x64xbf16>,
    %59 = vector.extract_strided_slice %30 {offsets = [0, 64], sizes = [16, 64], strides = [1, 1]} : vector<16x128xf32> to vector<16x64xf32>
    %60 = vector.shape_cast %59 : vector<16x64xf32> to vector<4x4x64xf32>
    %61 = arith.truncf %60 : vector<4x4x64xf32> to vector<4x4x64xbf16>
    %c0_32 = arith.constant 0 : index
    %c0_33 = arith.constant 0 : index
    %c1 = arith.constant 1 : index
    %c0_34 = arith.constant 0 : index
    %c0_35 = arith.constant 0 : index
    %62 = vector.load %arg6[%c0_32, %c0_33, %c1, %c0_34, %c0_35] : memref<1x4x2x4x64xbf16, #tpu.memory_space<vmem>>, vector<1x4x1x4x64xbf16>
    %63 = vector.shape_cast %62 : vector<1x4x1x4x64xbf16> to vector<4x4x64xbf16>
    %64 = vector.shape_cast %61 : vector<4x4x64xbf16> to vector<1x4x1x4x64xbf16>
    tpu.vector_store %arg6[%c0_32, %c0_33, %c1, %c0_34, %c0_35], %64 {strides = array<i32>} : memref<1x4x2x4x64xbf16, #tpu.memory_space<vmem>>, vector<1x4x1x4x64xbf16>,
    return
  }
  func.func @transform_0(%arg0: i32, %arg1: i32) -> (i32, i32, i32, i32) {
    %c0_i32 = arith.constant 0 : i32
    %c0_i32_0 = arith.constant 0 : i32
    %c0_i32_1 = arith.constant 0 : i32
    return %arg0, %arg1, %c0_i32, %c0_i32_0 : i32, i32, i32, i32
  }
  func.func @transform_1(%arg0: i32, %arg1: i32) -> (i32, i32, i32, i32) {
    %c0_i32 = arith.constant 0 : i32
    %c0_i32_0 = arith.constant 0 : i32
    %c0_i32_1 = arith.constant 0 : i32
    return %arg0, %arg1, %c0_i32, %c0_i32_0 : i32, i32, i32, i32
  }
  func.func @transform_2(%arg0: i32, %arg1: i32) -> (i32, i32) {
    %c0_i32 = arith.constant 0 : i32
    %c0_i32_0 = arith.constant 0 : i32
    %c0_i32_1 = arith.constant 0 : i32
    return %c0_i32, %c0_i32_0 : i32, i32
  }
  func.func @transform_3(%arg0: i32, %arg1: i32) -> (i32, i32) {
    %c0_i32 = arith.constant 0 : i32
    %c0_i32_0 = arith.constant 0 : i32
    %c0_i32_1 = arith.constant 0 : i32
    return %c0_i32, %c0_i32_0 : i32, i32
  }
  func.func @transform_4(%arg0: i32, %arg1: i32) -> (i32, i32, i32, i32, i32) {
    %c0_i32 = arith.constant 0 : i32
    %c0_i32_0 = arith.constant 0 : i32
    %c0_i32_1 = arith.constant 0 : i32
    %c0_i32_2 = arith.constant 0 : i32
    return %arg0, %arg1, %c0_i32, %c0_i32_0, %c0_i32_1 : i32, i32, i32, i32, i32
  }
  func.func @transform_5(%arg0: i32, %arg1: i32) -> (i32, i32, i32, i32) {
    %c0_i32 = arith.constant 0 : i32
    %c0_i32_0 = arith.constant 0 : i32
    %c0_i32_1 = arith.constant 0 : i32
    return %arg0, %arg1, %c0_i32, %c0_i32_0 : i32, i32, i32, i32
  }
}

module attributes {stable_mosaic.version = 11 : i64} {
  func.func @_bn_lrelu_kernel(%arg0: i32, %arg1: memref<16x256xbf16, #tpu.memory_space<vmem>>, %arg2: memref<1x256xf32, #tpu.memory_space<vmem>>, %arg3: memref<1x256xf32, #tpu.memory_space<vmem>>, %arg4: memref<16x256xbf16, #tpu.memory_space<vmem>>) attributes {dimension_semantics = [#tpu.dimension_semantics<parallel>], iteration_bounds = array<i64: 1>, scalar_prefetch = 0 : i64, scratch_operands = 0 : i64, tpu.core_type = #tpu.core_type<tc>, window_params = [{transform_indices = @transform_0, window_bounds = array<i64: 16, 256>}, {pipeline_mode = #tpu.pipeline_mode<synchronous>, transform_indices = @transform_1, window_bounds = array<i64: 1, 256>}, {pipeline_mode = #tpu.pipeline_mode<synchronous>, transform_indices = @transform_2, window_bounds = array<i64: 1, 256>}, {transform_indices = @transform_3, window_bounds = array<i64: 16, 256>}]} {
    %c0 = arith.constant 0 : index
    %c0_0 = arith.constant 0 : index
    %0 = vector.load %arg1[%c0, %c0_0] : memref<16x256xbf16, #tpu.memory_space<vmem>>, vector<16x256xbf16>
    %1 = arith.extf %0 : vector<16x256xbf16> to vector<16x256xf32>
    %c0_1 = arith.constant 0 : index
    %c0_2 = arith.constant 0 : index
    %2 = vector.load %arg2[%c0_1, %c0_2] : memref<1x256xf32, #tpu.memory_space<vmem>>, vector<1x256xf32>
    %3 = vector.broadcast %2 : vector<1x256xf32> to vector<16x256xf32>
    %4 = arith.mulf %1, %3 : vector<16x256xf32>
    %c0_3 = arith.constant 0 : index
    %c0_4 = arith.constant 0 : index
    %5 = vector.load %arg3[%c0_3, %c0_4] : memref<1x256xf32, #tpu.memory_space<vmem>>, vector<1x256xf32>
    %6 = vector.broadcast %5 : vector<1x256xf32> to vector<16x256xf32>
    %7 = arith.addf %4, %6 : vector<16x256xf32>
    %cst = arith.constant 0.000000e+00 : f32
    %8 = vector.broadcast %cst : f32 to vector<16x256xf32>
    %9 = arith.cmpf ogt, %7, %8 : vector<16x256xf32>
    %cst_5 = arith.constant 0.00999999977 : f32
    %10 = vector.broadcast %cst_5 : f32 to vector<16x256xf32>
    %11 = arith.mulf %10, %7 : vector<16x256xf32>
    %12 = arith.select %9, %7, %11 : vector<16x256xi1>, vector<16x256xf32>
    %13 = arith.truncf %12 : vector<16x256xf32> to vector<16x256xbf16>
    %c0_6 = arith.constant 0 : index
    %c0_7 = arith.constant 0 : index
    %14 = vector.load %arg4[%c0_6, %c0_7] : memref<16x256xbf16, #tpu.memory_space<vmem>>, vector<16x256xbf16>
    tpu.vector_store %arg4[%c0_6, %c0_7], %13 {strides = array<i32>} : memref<16x256xbf16, #tpu.memory_space<vmem>>, vector<16x256xbf16>,
    return
  }
  func.func @transform_0(%arg0: i32) -> (i32, i32) {
    %c0_i32 = arith.constant 0 : i32
    %c0_i32_0 = arith.constant 0 : i32
    return %arg0, %c0_i32 : i32, i32
  }
  func.func @transform_1(%arg0: i32) -> (i32, i32) {
    %c0_i32 = arith.constant 0 : i32
    %c0_i32_0 = arith.constant 0 : i32
    %c0_i32_1 = arith.constant 0 : i32
    return %c0_i32, %c0_i32_0 : i32, i32
  }
  func.func @transform_2(%arg0: i32) -> (i32, i32) {
    %c0_i32 = arith.constant 0 : i32
    %c0_i32_0 = arith.constant 0 : i32
    %c0_i32_1 = arith.constant 0 : i32
    return %c0_i32, %c0_i32_0 : i32, i32
  }
  func.func @transform_3(%arg0: i32) -> (i32, i32) {
    %c0_i32 = arith.constant 0 : i32
    %c0_i32_0 = arith.constant 0 : i32
    return %arg0, %c0_i32 : i32, i32
  }
}

module attributes {stable_mosaic.version = 11 : i64} {
  func.func @_deconv_phase_kernel(%arg0: i32, %arg1: i32, %arg2: memref<1x8x8x32xbf16, #tpu.memory_space<vmem>>, %arg3: memref<1x1x8x32xbf16, #tpu.memory_space<vmem>>, %arg4: memref<128x128xbf16, #tpu.memory_space<vmem>>, %arg5: memref<1x128xf32, #tpu.memory_space<vmem>>, %arg6: memref<1x8x2x8x64xbf16, #tpu.memory_space<vmem>>, %arg7: memref<1x1x8x128xf32, #tpu.memory_space<vmem>>) attributes {dimension_semantics = [#tpu.dimension_semantics<parallel>, #tpu.dimension_semantics<parallel>], iteration_bounds = array<i64: 2, 1>, scalar_prefetch = 0 : i64, scratch_operands = 0 : i64, tpu.core_type = #tpu.core_type<tc>, window_params = [{transform_indices = @transform_0, window_bounds = array<i64: 1, 8, 8, 32>}, {transform_indices = @transform_1, window_bounds = array<i64: 1, 1, 8, 32>}, {pipeline_mode = #tpu.pipeline_mode<synchronous>, transform_indices = @transform_2, window_bounds = array<i64: 128, 128>}, {pipeline_mode = #tpu.pipeline_mode<synchronous>, transform_indices = @transform_3, window_bounds = array<i64: 1, 128>}, {transform_indices = @transform_4, window_bounds = array<i64: 1, 8, 2, 8, 64>}, {transform_indices = @transform_5, window_bounds = array<i64: 1, 1, 8, 128>}]} {
    %c0 = arith.constant 0 : index
    %c0_0 = arith.constant 0 : index
    %c0_1 = arith.constant 0 : index
    %c0_2 = arith.constant 0 : index
    %0 = vector.load %arg2[%c0, %c0_0, %c0_1, %c0_2] : memref<1x8x8x32xbf16, #tpu.memory_space<vmem>>, vector<1x8x8x32xbf16>
    %1 = vector.shape_cast %0 : vector<1x8x8x32xbf16> to vector<8x8x32xbf16>
    %c0_3 = arith.constant 0 : index
    %c0_4 = arith.constant 0 : index
    %c0_5 = arith.constant 0 : index
    %c0_6 = arith.constant 0 : index
    %2 = vector.load %arg3[%c0_3, %c0_4, %c0_5, %c0_6] : memref<1x1x8x32xbf16, #tpu.memory_space<vmem>>, vector<1x1x8x32xbf16>
    %3 = vector.shape_cast %2 : vector<1x1x8x32xbf16> to vector<1x8x32xbf16>
    %4 = tpu.concatenate %1, %3 in 0 : vector<8x8x32xbf16>, vector<1x8x32xbf16> -> vector<9x8x32xbf16>
    %cst = arith.constant 0.000000e+00 : bf16
    %5 = vector.broadcast %cst : bf16 to vector<9x1x32xbf16>
    %6 = tpu.concatenate %4, %5 in 1 : vector<9x8x32xbf16>, vector<9x1x32xbf16> -> vector<9x9x32xbf16>
    %cst_7 = arith.constant 0.000000e+00 : f32
    %7 = vector.broadcast %cst_7 : f32 to vector<64x128xf32>
    %c0_8 = arith.constant 0 : index
    %c0_9 = arith.constant 0 : index
    %8 = vector.load %arg5[%c0_8, %c0_9] : memref<1x128xf32, #tpu.memory_space<vmem>>, vector<1x128xf32>
    %9 = vector.broadcast %8 : vector<1x128xf32> to vector<64x128xf32>
    %10 = arith.addf %7, %9 : vector<64x128xf32>
    %11 = vector.extract_strided_slice %6 {offsets = [0, 0, 0], sizes = [8, 8, 32], strides = [1, 1, 1]} : vector<9x9x32xbf16> to vector<8x8x32xbf16>
    %12 = vector.shape_cast %11 : vector<8x8x32xbf16> to vector<64x32xbf16>
    %c0_10 = arith.constant 0 : index
    %c0_11 = arith.constant 0 : index
    %13 = vector.load %arg4[%c0_10, %c0_11] : memref<128x128xbf16, #tpu.memory_space<vmem>>, vector<32x128xbf16>
    %cst_12 = arith.constant dense<0.000000e+00> : vector<64x128xf32>
    %14 = tpu.matmul %12, %13, %cst_12 {dimension_numbers = #tpu.dot_dimension_numbers<[1], [0], [0], [1], [0, 0, 1, 1], [], []>} : vector<64x32xbf16>, vector<32x128xbf16>, vector<64x128xf32> -> vector<64x128xf32>
    %15 = arith.addf %10, %14 : vector<64x128xf32>
    %16 = vector.extract_strided_slice %6 {offsets = [0, 1, 0], sizes = [8, 8, 32], strides = [1, 1, 1]} : vector<9x9x32xbf16> to vector<8x8x32xbf16>
    %17 = vector.shape_cast %16 : vector<8x8x32xbf16> to vector<64x32xbf16>
    %c32 = arith.constant 32 : index
    %c0_13 = arith.constant 0 : index
    %18 = vector.load %arg4[%c32, %c0_13] : memref<128x128xbf16, #tpu.memory_space<vmem>>, vector<32x128xbf16>
    %cst_14 = arith.constant dense<0.000000e+00> : vector<64x128xf32>
    %19 = tpu.matmul %17, %18, %cst_14 {dimension_numbers = #tpu.dot_dimension_numbers<[1], [0], [0], [1], [0, 0, 1, 1], [], []>} : vector<64x32xbf16>, vector<32x128xbf16>, vector<64x128xf32> -> vector<64x128xf32>
    %20 = arith.addf %15, %19 : vector<64x128xf32>
    %21 = vector.extract_strided_slice %6 {offsets = [1, 0, 0], sizes = [8, 8, 32], strides = [1, 1, 1]} : vector<9x9x32xbf16> to vector<8x8x32xbf16>
    %22 = vector.shape_cast %21 : vector<8x8x32xbf16> to vector<64x32xbf16>
    %c64 = arith.constant 64 : index
    %c0_15 = arith.constant 0 : index
    %23 = vector.load %arg4[%c64, %c0_15] : memref<128x128xbf16, #tpu.memory_space<vmem>>, vector<32x128xbf16>
    %cst_16 = arith.constant dense<0.000000e+00> : vector<64x128xf32>
    %24 = tpu.matmul %22, %23, %cst_16 {dimension_numbers = #tpu.dot_dimension_numbers<[1], [0], [0], [1], [0, 0, 1, 1], [], []>} : vector<64x32xbf16>, vector<32x128xbf16>, vector<64x128xf32> -> vector<64x128xf32>
    %25 = arith.addf %20, %24 : vector<64x128xf32>
    %26 = vector.extract_strided_slice %6 {offsets = [1, 1, 0], sizes = [8, 8, 32], strides = [1, 1, 1]} : vector<9x9x32xbf16> to vector<8x8x32xbf16>
    %27 = vector.shape_cast %26 : vector<8x8x32xbf16> to vector<64x32xbf16>
    %c96 = arith.constant 96 : index
    %c0_17 = arith.constant 0 : index
    %28 = vector.load %arg4[%c96, %c0_17] : memref<128x128xbf16, #tpu.memory_space<vmem>>, vector<32x128xbf16>
    %cst_18 = arith.constant dense<0.000000e+00> : vector<64x128xf32>
    %29 = tpu.matmul %27, %28, %cst_18 {dimension_numbers = #tpu.dot_dimension_numbers<[1], [0], [0], [1], [0, 0, 1, 1], [], []>} : vector<64x32xbf16>, vector<32x128xbf16>, vector<64x128xf32> -> vector<64x128xf32>
    %30 = arith.addf %25, %29 : vector<64x128xf32>
    %cst_19 = arith.constant dense<0.000000e+00> : vector<128xf32>
    %31 = vector.multi_reduction <add>, %30, %cst_19 [0] : vector<64x128xf32> to vector<128xf32>
    %32 = vector.shape_cast %31 : vector<128xf32> to vector<1x128xf32>
    %33 = arith.mulf %30, %30 : vector<64x128xf32>
    %cst_20 = arith.constant dense<0.000000e+00> : vector<128xf32>
    %34 = vector.multi_reduction <add>, %33, %cst_20 [0] : vector<64x128xf32> to vector<128xf32>
    %35 = vector.shape_cast %34 : vector<128xf32> to vector<1x128xf32>
    %36 = tpu.iota {dimensions = array<i32: 0>} : vector<8x128xi32>
    %c0_i32 = arith.constant 0 : i32
    %37 = vector.broadcast %c0_i32 : i32 to vector<8x128xi32>
    %38 = arith.cmpi eq, %36, %37 : vector<8x128xi32>
    %cst_21 = arith.constant 0.000000e+00 : f32
    %39 = vector.shape_cast %32 : vector<1x128xf32> to vector<1x128xf32>
    %40 = vector.broadcast %39 : vector<1x128xf32> to vector<8x128xf32>
    %41 = vector.broadcast %cst_21 : f32 to vector<8x128xf32>
    %42 = arith.select %38, %40, %41 : vector<8x128xi1>, vector<8x128xf32>
    %c1_i32 = arith.constant 1 : i32
    %43 = vector.broadcast %c1_i32 : i32 to vector<8x128xi32>
    %44 = arith.cmpi eq, %36, %43 : vector<8x128xi32>
    %cst_22 = arith.constant 0.000000e+00 : f32
    %45 = vector.shape_cast %35 : vector<1x128xf32> to vector<1x128xf32>
    %46 = vector.broadcast %45 : vector<1x128xf32> to vector<8x128xf32>
    %47 = vector.broadcast %cst_22 : f32 to vector<8x128xf32>
    %48 = arith.select %44, %46, %47 : vector<8x128xi1>, vector<8x128xf32>
    %49 = arith.addf %42, %48 : vector<8x128xf32>
    %c0_23 = arith.constant 0 : index
    %c0_24 = arith.constant 0 : index
    %c0_25 = arith.constant 0 : index
    %c0_26 = arith.constant 0 : index
    %50 = vector.load %arg7[%c0_23, %c0_24, %c0_25, %c0_26] : memref<1x1x8x128xf32, #tpu.memory_space<vmem>>, vector<1x1x8x128xf32>
    %51 = vector.shape_cast %50 : vector<1x1x8x128xf32> to vector<8x128xf32>
    %52 = vector.shape_cast %49 : vector<8x128xf32> to vector<1x1x8x128xf32>
    tpu.vector_store %arg7[%c0_23, %c0_24, %c0_25, %c0_26], %52 {strides = array<i32>} : memref<1x1x8x128xf32, #tpu.memory_space<vmem>>, vector<1x1x8x128xf32>,
    %53 = vector.extract_strided_slice %30 {offsets = [0, 0], sizes = [64, 64], strides = [1, 1]} : vector<64x128xf32> to vector<64x64xf32>
    %54 = vector.shape_cast %53 : vector<64x64xf32> to vector<8x8x64xf32>
    %55 = arith.truncf %54 : vector<8x8x64xf32> to vector<8x8x64xbf16>
    %c0_27 = arith.constant 0 : index
    %c0_28 = arith.constant 0 : index
    %c0_29 = arith.constant 0 : index
    %c0_30 = arith.constant 0 : index
    %c0_31 = arith.constant 0 : index
    %56 = vector.load %arg6[%c0_27, %c0_28, %c0_29, %c0_30, %c0_31] : memref<1x8x2x8x64xbf16, #tpu.memory_space<vmem>>, vector<1x8x1x8x64xbf16>
    %57 = vector.shape_cast %56 : vector<1x8x1x8x64xbf16> to vector<8x8x64xbf16>
    %58 = vector.shape_cast %55 : vector<8x8x64xbf16> to vector<1x8x1x8x64xbf16>
    tpu.vector_store %arg6[%c0_27, %c0_28, %c0_29, %c0_30, %c0_31], %58 {strides = array<i32>} : memref<1x8x2x8x64xbf16, #tpu.memory_space<vmem>>, vector<1x8x1x8x64xbf16>,
    %59 = vector.extract_strided_slice %30 {offsets = [0, 64], sizes = [64, 64], strides = [1, 1]} : vector<64x128xf32> to vector<64x64xf32>
    %60 = vector.shape_cast %59 : vector<64x64xf32> to vector<8x8x64xf32>
    %61 = arith.truncf %60 : vector<8x8x64xf32> to vector<8x8x64xbf16>
    %c0_32 = arith.constant 0 : index
    %c0_33 = arith.constant 0 : index
    %c1 = arith.constant 1 : index
    %c0_34 = arith.constant 0 : index
    %c0_35 = arith.constant 0 : index
    %62 = vector.load %arg6[%c0_32, %c0_33, %c1, %c0_34, %c0_35] : memref<1x8x2x8x64xbf16, #tpu.memory_space<vmem>>, vector<1x8x1x8x64xbf16>
    %63 = vector.shape_cast %62 : vector<1x8x1x8x64xbf16> to vector<8x8x64xbf16>
    %64 = vector.shape_cast %61 : vector<8x8x64xbf16> to vector<1x8x1x8x64xbf16>
    tpu.vector_store %arg6[%c0_32, %c0_33, %c1, %c0_34, %c0_35], %64 {strides = array<i32>} : memref<1x8x2x8x64xbf16, #tpu.memory_space<vmem>>, vector<1x8x1x8x64xbf16>,
    return
  }
  func.func @transform_0(%arg0: i32, %arg1: i32) -> (i32, i32, i32, i32) {
    %c0_i32 = arith.constant 0 : i32
    %c0_i32_0 = arith.constant 0 : i32
    %c0_i32_1 = arith.constant 0 : i32
    return %arg0, %arg1, %c0_i32, %c0_i32_0 : i32, i32, i32, i32
  }
  func.func @transform_1(%arg0: i32, %arg1: i32) -> (i32, i32, i32, i32) {
    %c0_i32 = arith.constant 0 : i32
    %c0_i32_0 = arith.constant 0 : i32
    %c0_i32_1 = arith.constant 0 : i32
    return %arg0, %arg1, %c0_i32, %c0_i32_0 : i32, i32, i32, i32
  }
  func.func @transform_2(%arg0: i32, %arg1: i32) -> (i32, i32) {
    %c0_i32 = arith.constant 0 : i32
    %c0_i32_0 = arith.constant 0 : i32
    %c0_i32_1 = arith.constant 0 : i32
    return %c0_i32, %c0_i32_0 : i32, i32
  }
  func.func @transform_3(%arg0: i32, %arg1: i32) -> (i32, i32) {
    %c0_i32 = arith.constant 0 : i32
    %c0_i32_0 = arith.constant 0 : i32
    %c0_i32_1 = arith.constant 0 : i32
    return %c0_i32, %c0_i32_0 : i32, i32
  }
  func.func @transform_4(%arg0: i32, %arg1: i32) -> (i32, i32, i32, i32, i32) {
    %c0_i32 = arith.constant 0 : i32
    %c0_i32_0 = arith.constant 0 : i32
    %c0_i32_1 = arith.constant 0 : i32
    %c0_i32_2 = arith.constant 0 : i32
    return %arg0, %arg1, %c0_i32, %c0_i32_0, %c0_i32_1 : i32, i32, i32, i32, i32
  }
  func.func @transform_5(%arg0: i32, %arg1: i32) -> (i32, i32, i32, i32) {
    %c0_i32 = arith.constant 0 : i32
    %c0_i32_0 = arith.constant 0 : i32
    %c0_i32_1 = arith.constant 0 : i32
    return %arg0, %arg1, %c0_i32, %c0_i32_0 : i32, i32, i32, i32
  }
}

module attributes {stable_mosaic.version = 11 : i64} {
  func.func @_bn_lrelu_kernel(%arg0: i32, %arg1: memref<32x512xbf16, #tpu.memory_space<vmem>>, %arg2: memref<1x512xf32, #tpu.memory_space<vmem>>, %arg3: memref<1x512xf32, #tpu.memory_space<vmem>>, %arg4: memref<32x512xbf16, #tpu.memory_space<vmem>>) attributes {dimension_semantics = [#tpu.dimension_semantics<parallel>], iteration_bounds = array<i64: 1>, scalar_prefetch = 0 : i64, scratch_operands = 0 : i64, tpu.core_type = #tpu.core_type<tc>, window_params = [{transform_indices = @transform_0, window_bounds = array<i64: 32, 512>}, {pipeline_mode = #tpu.pipeline_mode<synchronous>, transform_indices = @transform_1, window_bounds = array<i64: 1, 512>}, {pipeline_mode = #tpu.pipeline_mode<synchronous>, transform_indices = @transform_2, window_bounds = array<i64: 1, 512>}, {transform_indices = @transform_3, window_bounds = array<i64: 32, 512>}]} {
    %c0 = arith.constant 0 : index
    %c0_0 = arith.constant 0 : index
    %0 = vector.load %arg1[%c0, %c0_0] : memref<32x512xbf16, #tpu.memory_space<vmem>>, vector<32x512xbf16>
    %1 = arith.extf %0 : vector<32x512xbf16> to vector<32x512xf32>
    %c0_1 = arith.constant 0 : index
    %c0_2 = arith.constant 0 : index
    %2 = vector.load %arg2[%c0_1, %c0_2] : memref<1x512xf32, #tpu.memory_space<vmem>>, vector<1x512xf32>
    %3 = vector.broadcast %2 : vector<1x512xf32> to vector<32x512xf32>
    %4 = arith.mulf %1, %3 : vector<32x512xf32>
    %c0_3 = arith.constant 0 : index
    %c0_4 = arith.constant 0 : index
    %5 = vector.load %arg3[%c0_3, %c0_4] : memref<1x512xf32, #tpu.memory_space<vmem>>, vector<1x512xf32>
    %6 = vector.broadcast %5 : vector<1x512xf32> to vector<32x512xf32>
    %7 = arith.addf %4, %6 : vector<32x512xf32>
    %cst = arith.constant 0.000000e+00 : f32
    %8 = vector.broadcast %cst : f32 to vector<32x512xf32>
    %9 = arith.cmpf ogt, %7, %8 : vector<32x512xf32>
    %cst_5 = arith.constant 0.00999999977 : f32
    %10 = vector.broadcast %cst_5 : f32 to vector<32x512xf32>
    %11 = arith.mulf %10, %7 : vector<32x512xf32>
    %12 = arith.select %9, %7, %11 : vector<32x512xi1>, vector<32x512xf32>
    %13 = arith.truncf %12 : vector<32x512xf32> to vector<32x512xbf16>
    %c0_6 = arith.constant 0 : index
    %c0_7 = arith.constant 0 : index
    %14 = vector.load %arg4[%c0_6, %c0_7] : memref<32x512xbf16, #tpu.memory_space<vmem>>, vector<32x512xbf16>
    tpu.vector_store %arg4[%c0_6, %c0_7], %13 {strides = array<i32>} : memref<32x512xbf16, #tpu.memory_space<vmem>>, vector<32x512xbf16>,
    return
  }
  func.func @transform_0(%arg0: i32) -> (i32, i32) {
    %c0_i32 = arith.constant 0 : i32
    %c0_i32_0 = arith.constant 0 : i32
    return %arg0, %c0_i32 : i32, i32
  }
  func.func @transform_1(%arg0: i32) -> (i32, i32) {
    %c0_i32 = arith.constant 0 : i32
    %c0_i32_0 = arith.constant 0 : i32
    %c0_i32_1 = arith.constant 0 : i32
    return %c0_i32, %c0_i32_0 : i32, i32
  }
  func.func @transform_2(%arg0: i32) -> (i32, i32) {
    %c0_i32 = arith.constant 0 : i32
    %c0_i32_0 = arith.constant 0 : i32
    %c0_i32_1 = arith.constant 0 : i32
    return %c0_i32, %c0_i32_0 : i32, i32
  }
  func.func @transform_3(%arg0: i32) -> (i32, i32) {
    %c0_i32 = arith.constant 0 : i32
    %c0_i32_0 = arith.constant 0 : i32
    return %arg0, %c0_i32 : i32, i32
  }
}

module attributes {stable_mosaic.version = 11 : i64} {
  func.func @_conv3_tanh_kernel(%arg0: i32, %arg1: i32, %arg2: memref<1x16x16x32xbf16, #tpu.memory_space<vmem>>, %arg3: memref<1x1x16x32xbf16, #tpu.memory_space<vmem>>, %arg4: memref<1x1x16x32xbf16, #tpu.memory_space<vmem>>, %arg5: memref<288x128xbf16, #tpu.memory_space<vmem>>, %arg6: memref<1x128xf32, #tpu.memory_space<vmem>>, %arg7: memref<1x16x16x128xf32, #tpu.memory_space<vmem>>) attributes {dimension_semantics = [#tpu.dimension_semantics<parallel>, #tpu.dimension_semantics<parallel>], iteration_bounds = array<i64: 2, 1>, scalar_prefetch = 0 : i64, scratch_operands = 0 : i64, tpu.core_type = #tpu.core_type<tc>, window_params = [{transform_indices = @transform_0, window_bounds = array<i64: 1, 16, 16, 32>}, {transform_indices = @transform_1, window_bounds = array<i64: 1, 1, 16, 32>}, {transform_indices = @transform_2, window_bounds = array<i64: 1, 1, 16, 32>}, {pipeline_mode = #tpu.pipeline_mode<synchronous>, transform_indices = @transform_3, window_bounds = array<i64: 288, 128>}, {pipeline_mode = #tpu.pipeline_mode<synchronous>, transform_indices = @transform_4, window_bounds = array<i64: 1, 128>}, {transform_indices = @transform_5, window_bounds = array<i64: 1, 16, 16, 128>}]} {
    %c0 = arith.constant 0 : index
    %c0_0 = arith.constant 0 : index
    %c0_1 = arith.constant 0 : index
    %c0_2 = arith.constant 0 : index
    %0 = vector.load %arg3[%c0, %c0_0, %c0_1, %c0_2] : memref<1x1x16x32xbf16, #tpu.memory_space<vmem>>, vector<1x1x16x32xbf16>
    %1 = vector.shape_cast %0 : vector<1x1x16x32xbf16> to vector<1x16x32xbf16>
    %c0_3 = arith.constant 0 : index
    %c0_4 = arith.constant 0 : index
    %c0_5 = arith.constant 0 : index
    %c0_6 = arith.constant 0 : index
    %2 = vector.load %arg2[%c0_3, %c0_4, %c0_5, %c0_6] : memref<1x16x16x32xbf16, #tpu.memory_space<vmem>>, vector<1x16x16x32xbf16>
    %3 = vector.shape_cast %2 : vector<1x16x16x32xbf16> to vector<16x16x32xbf16>
    %c0_7 = arith.constant 0 : index
    %c0_8 = arith.constant 0 : index
    %c0_9 = arith.constant 0 : index
    %c0_10 = arith.constant 0 : index
    %4 = vector.load %arg4[%c0_7, %c0_8, %c0_9, %c0_10] : memref<1x1x16x32xbf16, #tpu.memory_space<vmem>>, vector<1x1x16x32xbf16>
    %5 = vector.shape_cast %4 : vector<1x1x16x32xbf16> to vector<1x16x32xbf16>
    %6 = tpu.concatenate %1, %3, %5 in 0 : vector<1x16x32xbf16>, vector<16x16x32xbf16>, vector<1x16x32xbf16> -> vector<18x16x32xbf16>
    %cst = arith.constant 0.000000e+00 : bf16
    %7 = vector.broadcast %cst : bf16 to vector<18x1x32xbf16>
    %8 = tpu.concatenate %7, %6, %7 in 1 : vector<18x1x32xbf16>, vector<18x16x32xbf16>, vector<18x1x32xbf16> -> vector<18x18x32xbf16>
    %cst_11 = arith.constant 0.000000e+00 : f32
    %9 = vector.broadcast %cst_11 : f32 to vector<256x128xf32>
    %c0_12 = arith.constant 0 : index
    %c0_13 = arith.constant 0 : index
    %10 = vector.load %arg6[%c0_12, %c0_13] : memref<1x128xf32, #tpu.memory_space<vmem>>, vector<1x128xf32>
    %11 = vector.broadcast %10 : vector<1x128xf32> to vector<256x128xf32>
    %12 = arith.addf %9, %11 : vector<256x128xf32>
    %13 = vector.extract_strided_slice %8 {offsets = [0, 0, 0], sizes = [16, 16, 32], strides = [1, 1, 1]} : vector<18x18x32xbf16> to vector<16x16x32xbf16>
    %14 = vector.shape_cast %13 : vector<16x16x32xbf16> to vector<256x32xbf16>
    %c0_14 = arith.constant 0 : index
    %c0_15 = arith.constant 0 : index
    %15 = vector.load %arg5[%c0_14, %c0_15] : memref<288x128xbf16, #tpu.memory_space<vmem>>, vector<32x128xbf16>
    %cst_16 = arith.constant dense<0.000000e+00> : vector<256x128xf32>
    %16 = tpu.matmul %14, %15, %cst_16 {dimension_numbers = #tpu.dot_dimension_numbers<[1], [0], [0], [1], [0, 0, 1, 1], [], []>} : vector<256x32xbf16>, vector<32x128xbf16>, vector<256x128xf32> -> vector<256x128xf32>
    %17 = arith.addf %12, %16 : vector<256x128xf32>
    %18 = vector.extract_strided_slice %8 {offsets = [0, 1, 0], sizes = [16, 16, 32], strides = [1, 1, 1]} : vector<18x18x32xbf16> to vector<16x16x32xbf16>
    %19 = vector.shape_cast %18 : vector<16x16x32xbf16> to vector<256x32xbf16>
    %c32 = arith.constant 32 : index
    %c0_17 = arith.constant 0 : index
    %20 = vector.load %arg5[%c32, %c0_17] : memref<288x128xbf16, #tpu.memory_space<vmem>>, vector<32x128xbf16>
    %cst_18 = arith.constant dense<0.000000e+00> : vector<256x128xf32>
    %21 = tpu.matmul %19, %20, %cst_18 {dimension_numbers = #tpu.dot_dimension_numbers<[1], [0], [0], [1], [0, 0, 1, 1], [], []>} : vector<256x32xbf16>, vector<32x128xbf16>, vector<256x128xf32> -> vector<256x128xf32>
    %22 = arith.addf %17, %21 : vector<256x128xf32>
    %23 = vector.extract_strided_slice %8 {offsets = [0, 2, 0], sizes = [16, 16, 32], strides = [1, 1, 1]} : vector<18x18x32xbf16> to vector<16x16x32xbf16>
    %24 = vector.shape_cast %23 : vector<16x16x32xbf16> to vector<256x32xbf16>
    %c64 = arith.constant 64 : index
    %c0_19 = arith.constant 0 : index
    %25 = vector.load %arg5[%c64, %c0_19] : memref<288x128xbf16, #tpu.memory_space<vmem>>, vector<32x128xbf16>
    %cst_20 = arith.constant dense<0.000000e+00> : vector<256x128xf32>
    %26 = tpu.matmul %24, %25, %cst_20 {dimension_numbers = #tpu.dot_dimension_numbers<[1], [0], [0], [1], [0, 0, 1, 1], [], []>} : vector<256x32xbf16>, vector<32x128xbf16>, vector<256x128xf32> -> vector<256x128xf32>
    %27 = arith.addf %22, %26 : vector<256x128xf32>
    %28 = vector.extract_strided_slice %8 {offsets = [1, 0, 0], sizes = [16, 16, 32], strides = [1, 1, 1]} : vector<18x18x32xbf16> to vector<16x16x32xbf16>
    %29 = vector.shape_cast %28 : vector<16x16x32xbf16> to vector<256x32xbf16>
    %c96 = arith.constant 96 : index
    %c0_21 = arith.constant 0 : index
    %30 = vector.load %arg5[%c96, %c0_21] : memref<288x128xbf16, #tpu.memory_space<vmem>>, vector<32x128xbf16>
    %cst_22 = arith.constant dense<0.000000e+00> : vector<256x128xf32>
    %31 = tpu.matmul %29, %30, %cst_22 {dimension_numbers = #tpu.dot_dimension_numbers<[1], [0], [0], [1], [0, 0, 1, 1], [], []>} : vector<256x32xbf16>, vector<32x128xbf16>, vector<256x128xf32> -> vector<256x128xf32>
    %32 = arith.addf %27, %31 : vector<256x128xf32>
    %33 = vector.extract_strided_slice %8 {offsets = [1, 1, 0], sizes = [16, 16, 32], strides = [1, 1, 1]} : vector<18x18x32xbf16> to vector<16x16x32xbf16>
    %34 = vector.shape_cast %33 : vector<16x16x32xbf16> to vector<256x32xbf16>
    %c128 = arith.constant 128 : index
    %c0_23 = arith.constant 0 : index
    %35 = vector.load %arg5[%c128, %c0_23] : memref<288x128xbf16, #tpu.memory_space<vmem>>, vector<32x128xbf16>
    %cst_24 = arith.constant dense<0.000000e+00> : vector<256x128xf32>
    %36 = tpu.matmul %34, %35, %cst_24 {dimension_numbers = #tpu.dot_dimension_numbers<[1], [0], [0], [1], [0, 0, 1, 1], [], []>} : vector<256x32xbf16>, vector<32x128xbf16>, vector<256x128xf32> -> vector<256x128xf32>
    %37 = arith.addf %32, %36 : vector<256x128xf32>
    %38 = vector.extract_strided_slice %8 {offsets = [1, 2, 0], sizes = [16, 16, 32], strides = [1, 1, 1]} : vector<18x18x32xbf16> to vector<16x16x32xbf16>
    %39 = vector.shape_cast %38 : vector<16x16x32xbf16> to vector<256x32xbf16>
    %c160 = arith.constant 160 : index
    %c0_25 = arith.constant 0 : index
    %40 = vector.load %arg5[%c160, %c0_25] : memref<288x128xbf16, #tpu.memory_space<vmem>>, vector<32x128xbf16>
    %cst_26 = arith.constant dense<0.000000e+00> : vector<256x128xf32>
    %41 = tpu.matmul %39, %40, %cst_26 {dimension_numbers = #tpu.dot_dimension_numbers<[1], [0], [0], [1], [0, 0, 1, 1], [], []>} : vector<256x32xbf16>, vector<32x128xbf16>, vector<256x128xf32> -> vector<256x128xf32>
    %42 = arith.addf %37, %41 : vector<256x128xf32>
    %43 = vector.extract_strided_slice %8 {offsets = [2, 0, 0], sizes = [16, 16, 32], strides = [1, 1, 1]} : vector<18x18x32xbf16> to vector<16x16x32xbf16>
    %44 = vector.shape_cast %43 : vector<16x16x32xbf16> to vector<256x32xbf16>
    %c192 = arith.constant 192 : index
    %c0_27 = arith.constant 0 : index
    %45 = vector.load %arg5[%c192, %c0_27] : memref<288x128xbf16, #tpu.memory_space<vmem>>, vector<32x128xbf16>
    %cst_28 = arith.constant dense<0.000000e+00> : vector<256x128xf32>
    %46 = tpu.matmul %44, %45, %cst_28 {dimension_numbers = #tpu.dot_dimension_numbers<[1], [0], [0], [1], [0, 0, 1, 1], [], []>} : vector<256x32xbf16>, vector<32x128xbf16>, vector<256x128xf32> -> vector<256x128xf32>
    %47 = arith.addf %42, %46 : vector<256x128xf32>
    %48 = vector.extract_strided_slice %8 {offsets = [2, 1, 0], sizes = [16, 16, 32], strides = [1, 1, 1]} : vector<18x18x32xbf16> to vector<16x16x32xbf16>
    %49 = vector.shape_cast %48 : vector<16x16x32xbf16> to vector<256x32xbf16>
    %c224 = arith.constant 224 : index
    %c0_29 = arith.constant 0 : index
    %50 = vector.load %arg5[%c224, %c0_29] : memref<288x128xbf16, #tpu.memory_space<vmem>>, vector<32x128xbf16>
    %cst_30 = arith.constant dense<0.000000e+00> : vector<256x128xf32>
    %51 = tpu.matmul %49, %50, %cst_30 {dimension_numbers = #tpu.dot_dimension_numbers<[1], [0], [0], [1], [0, 0, 1, 1], [], []>} : vector<256x32xbf16>, vector<32x128xbf16>, vector<256x128xf32> -> vector<256x128xf32>
    %52 = arith.addf %47, %51 : vector<256x128xf32>
    %53 = vector.extract_strided_slice %8 {offsets = [2, 2, 0], sizes = [16, 16, 32], strides = [1, 1, 1]} : vector<18x18x32xbf16> to vector<16x16x32xbf16>
    %54 = vector.shape_cast %53 : vector<16x16x32xbf16> to vector<256x32xbf16>
    %c256 = arith.constant 256 : index
    %c0_31 = arith.constant 0 : index
    %55 = vector.load %arg5[%c256, %c0_31] : memref<288x128xbf16, #tpu.memory_space<vmem>>, vector<32x128xbf16>
    %cst_32 = arith.constant dense<0.000000e+00> : vector<256x128xf32>
    %56 = tpu.matmul %54, %55, %cst_32 {dimension_numbers = #tpu.dot_dimension_numbers<[1], [0], [0], [1], [0, 0, 1, 1], [], []>} : vector<256x32xbf16>, vector<32x128xbf16>, vector<256x128xf32> -> vector<256x128xf32>
    %57 = arith.addf %52, %56 : vector<256x128xf32>
    %58 = math.tanh %57 : vector<256x128xf32>
    %59 = vector.shape_cast %58 : vector<256x128xf32> to vector<16x16x128xf32>
    %c0_33 = arith.constant 0 : index
    %c0_34 = arith.constant 0 : index
    %c0_35 = arith.constant 0 : index
    %c0_36 = arith.constant 0 : index
    %60 = vector.load %arg7[%c0_33, %c0_34, %c0_35, %c0_36] : memref<1x16x16x128xf32, #tpu.memory_space<vmem>>, vector<1x16x16x128xf32>
    %61 = vector.shape_cast %60 : vector<1x16x16x128xf32> to vector<16x16x128xf32>
    %62 = vector.shape_cast %59 : vector<16x16x128xf32> to vector<1x16x16x128xf32>
    tpu.vector_store %arg7[%c0_33, %c0_34, %c0_35, %c0_36], %62 {strides = array<i32>} : memref<1x16x16x128xf32, #tpu.memory_space<vmem>>, vector<1x16x16x128xf32>,
    return
  }
  func.func @transform_0(%arg0: i32, %arg1: i32) -> (i32, i32, i32, i32) {
    %c0_i32 = arith.constant 0 : i32
    %c0_i32_0 = arith.constant 0 : i32
    %c0_i32_1 = arith.constant 0 : i32
    return %arg0, %arg1, %c0_i32, %c0_i32_0 : i32, i32, i32, i32
  }
  func.func @transform_1(%arg0: i32, %arg1: i32) -> (i32, i32, i32, i32) {
    %c0_i32 = arith.constant 0 : i32
    %c0_i32_0 = arith.constant 0 : i32
    %c0_i32_1 = arith.constant 0 : i32
    return %arg0, %arg1, %c0_i32, %c0_i32_0 : i32, i32, i32, i32
  }
  func.func @transform_2(%arg0: i32, %arg1: i32) -> (i32, i32, i32, i32) {
    %c0_i32 = arith.constant 0 : i32
    %c0_i32_0 = arith.constant 0 : i32
    %c0_i32_1 = arith.constant 0 : i32
    return %arg0, %arg1, %c0_i32, %c0_i32_0 : i32, i32, i32, i32
  }
  func.func @transform_3(%arg0: i32, %arg1: i32) -> (i32, i32) {
    %c0_i32 = arith.constant 0 : i32
    %c0_i32_0 = arith.constant 0 : i32
    %c0_i32_1 = arith.constant 0 : i32
    return %c0_i32, %c0_i32_0 : i32, i32
  }
  func.func @transform_4(%arg0: i32, %arg1: i32) -> (i32, i32) {
    %c0_i32 = arith.constant 0 : i32
    %c0_i32_0 = arith.constant 0 : i32
    %c0_i32_1 = arith.constant 0 : i32
    return %c0_i32, %c0_i32_0 : i32, i32
  }
  func.func @transform_5(%arg0: i32, %arg1: i32) -> (i32, i32, i32, i32) {
    %c0_i32 = arith.constant 0 : i32
    %c0_i32_0 = arith.constant 0 : i32
    %c0_i32_1 = arith.constant 0 : i32
    return %arg0, %arg1, %c0_i32, %c0_i32_0 : i32, i32, i32, i32
  }
}

</mosaic_0001>

<llo_original>
// kernel: tile.28
$region0: #{tile.28}
  #allocation0 [shape = 's32[1]{0}', space=sflag, size = 0x4, scoped, tag = 'scoped memory for tile.28']
  %s0 = inlined_call_operand.vmem [shape: f32[32], index: 0, kind: input, shape index: {}]
  %s1 = inlined_call_operand.vmem [shape: f32[8,32], index: 1, kind: output, shape index: {}]
  // Predicated region
  $region2: #{tile.28} parent=0 // pred_check
    _
  $region3: #{tile.28} parent=0 // pred_check_branch
    %3 = sbr.rel (0) target = $region5
  $region4: #{tile.28} parent=0 // pred_region
    _
  $region5: #{tile.28} parent=0 // pred_fallthru
    _
  %v4 = vld [vmem:[%s0] ss:$0 sm:$0xff]
  %5 = vst [vmem:[%s1] sm:$0xff] %v4

// kernel: tile.29
$region0: #{tile.29}
  %s0 = inlined_call_operand.vmem [shape: f32[8,32], index: 0, kind: input, shape index: {}]
  %s1 = inlined_call_operand.vmem [shape: f32[1,256], index: 1, kind: output, shape index: {}]
  $region1: #{tile.29} parent=0
    #allocation0 [shape = 'u8[8192]{0}', space=vmem, size = 0x2000, scoped, tag = 'scoped mem for output reshape']
    %s2 = smov 3
    %v3 = vld [vmem:[%s0] ss:$4 sm:%s2]
    %vm4 = vcmask 261120
    %5 = vst.msk [vmem:[#allocation0] ss:$8 sm:$0x3] %vm4, %v3
    %s6 = scalar_lea.vmem %s0, 3
    %s7 = smov 3
    %v8 = vld [vmem:[%s6] ss:$4 sm:%s7]
    %9 = vrot.lane.b32.xlu0 %v8, 96
    %v10 = vpop.permute.xlu0 %9
    %vm11 = vcmask 1048320
    %12 = vst.msk [vmem:[#allocation0] ss:$8 sm:$0x3] %vm11, %v10
    %s13 = scalar_lea.vmem %s0, 2
    %s14 = smov 3
    %v15 = vld [vmem:[%s13] ss:$4 sm:%s14]
    %16 = vrot.lane.b32.xlu0 %v15, 64
    %v17 = vpop.permute.xlu0 %16
    %vm18 = vcmask 785920
    %19 = vst.msk [vmem:[#allocation0] ss:$8 sm:$0x3] %vm18, %v17
    %s20 = scalar_lea.vmem %s0, 1
    %s21 = smov 3
    %v22 = vld [vmem:[%s20] ss:$4 sm:%s21]
    %23 = vrot.lane.b32.xlu0 %v22, 32
    %v24 = vpop.permute.xlu0 %23
    %vm25 = vcmask 523520
    %26 = vst.msk [vmem:[#allocation0] ss:$8 sm:$0x3] %vm25, %v24
    %s28 = ssub.s32 2, 1
    %v29 = vld [vmem:[#allocation0] sm:%s28]
    %s31 = ssub.s32 2, 1
    %32 = vst [vmem:[%s1] sm:%s31] %v29
    %s33 = scalar_lea.vmem [#allocation0], 8
    %v34 = vld [vmem:[%s33] sm:%s28]
    %s36 = ssub.s32 2, 1
    %s37 = scalar_lea.vmem %s1, 1
    %38 = vst [vmem:[%s37] sm:%s36] %v34

// kernel: decoder_forward.6
$region0: #{decoder_forward.6}
  #allocation0 [shape = 'u32[]', space=smem, size = 0x4, offset = 0x4, fixed_abs, tag = 'smem constant byte address 0x4 - core index']
  #allocation1 [shape = 'u32[72,128]{1,0:T(1,128)}', space=vmem, size = 0x9000, scoped, tag = 'internal scratch']
  %s0 = inlined_call_operand.hbm [shape: f32[2,8], index: 0, kind: input, shape index: {}]
  %s1 = inlined_call_operand.hbm [shape: f32[8,512], index: 1, kind: input, shape index: {}]
  %s2 = inlined_call_operand.vmem [shape: f32[1,512], index: 2, kind: input, shape index: {}]
  %s3 = inlined_call_operand.vmem [shape: f32[2,512], index: 3, kind: output, shape index: {}]
  %s4 = sld [smem:[#allocation0]]
  $region30: #{decoder_forward.6} parent=0
    _
  %s6 = ssub.s32 1, %s4
  %s7 = scalar_select 0, %s6, %s4
  $region1: #{decoder_forward.6} parent=0
    #allocation2 [shape = 'u8[1024]{0}', space=vmem, size = 0x400, scoped, tag = 'input window, operand 0, single buffered']
    #allocation3 [shape = 's32[1]{0}', space=sflag, size = 0x4, scoped, tag = 'scoped memory for decoder_forward.6']
    #allocation4 [shape = 'u8[16384]{0}', space=vmem, size = 0x4000, scoped, tag = 'input window, operand 1, single buffered']
    #allocation5 [shape = 's32[1]{0}', space=sflag, size = 0x4, scoped, tag = 'scoped memory for decoder_forward.6']
    %8 = vsyncpa [#allocation3], 0
    %9 = vsyncpa [#allocation5], 0
    // Predicated region
    $region2: #{decoder_forward.6} parent=1 // pred_check
      _
    $region3: #{decoder_forward.6} parent=1 // pred_check_branch
      %11 = sbr.rel (0) target = $region5
    $region4: #{decoder_forward.6} parent=1 // pred_region
      %13 = vsyncadd [#allocation3], 0
      %s15 = sshll.u32 %s0, 4
      %s16 = int_to_ptr.hbm [resolvable:$true] %s15
      %s17 = sshll.u32 [#allocation2], 4
      %s18 = int_to_ptr.vmem [resolvable:$true] %s17
      %20 = dma.hbm_to_vmem [thread:$0]  %s16, 32, %s18, [#allocation3]
    $region5: #{decoder_forward.6} parent=1 // pred_fallthru
      _
    // Predicated region
    $region6: #{decoder_forward.6} parent=1 // pred_check
      _
    $region7: #{decoder_forward.6} parent=1 // pred_check_branch
      %22 = sbr.rel (0) target = $region9
    $region8: #{decoder_forward.6} parent=1 // pred_region
      %24 = vsyncadd [#allocation5], 0
      %s26 = sshll.u32 %s1, 4
      %s27 = int_to_ptr.hbm [resolvable:$true] %s26
      %s28 = sshll.u32 [#allocation4], 4
      %s29 = int_to_ptr.vmem [resolvable:$true] %s28
      %31 = dma.hbm_to_vmem [thread:$0]  %s27, 512, %s29, [#allocation5]
    $region9: #{decoder_forward.6} parent=1 // pred_fallthru
      _
    // Predicated region
    $region10: #{decoder_forward.6} parent=1 // pred_check
      _
    $region11: #{decoder_forward.6} parent=1 // pred_check_branch
      %33 = sbr.rel (0) target = $region13
    $region12: #{decoder_forward.6} parent=1 // pred_region
      _
    $region13: #{decoder_forward.6} parent=1 // pred_fallthru
      _
    // Predicated region
    $region14: #{decoder_forward.6} parent=1 // pred_check
      _
    $region15: #{decoder_forward.6} parent=1 // pred_check_branch
      %35 = sbr.rel (0) target = $region17
    $region16: #{decoder_forward.6} parent=1 // pred_region
      %37 = dma.done [#allocation3], 32
    $region17: #{decoder_forward.6} parent=1 // pred_fallthru
      _
    // Predicated region
    $region18: #{decoder_forward.6} parent=1 // pred_check
      _
    $region19: #{decoder_forward.6} parent=1 // pred_check_branch
      %39 = sbr.rel (0) target = $region21
    $region20: #{decoder_forward.6} parent=1 // pred_region
      %41 = dma.done [#allocation5], 512
    $region21: #{decoder_forward.6} parent=1 // pred_fallthru
      _
    %v42 = vld [vmem:[#allocation2] sm:$0x3]
    %v43 = vld [vmem:[#allocation4] sm:$0xff]
    %v44 = vld [vmem:[#allocation4 + $0x8] sm:$0xff]
    %v45 = vld [vmem:[#allocation4 + $0x10] sm:$0xff]
    %v46 = vld [vmem:[#allocation4 + $0x18] sm:$0xff]
    %v47 = vld [vmem:[%s2] sm:$0xf]
    %v49 = vperm.slane %v47, 0
    %v50 = vperm.slane %v47, 1
    %v51 = vperm.slane %v47, 2
    %v52 = vperm.slane %v47, 3
    %vm57 = vcmask 64512
    %v59 = vsel %vm57, %v42, 0
    %61 = vmatpush.msra.mxu0 0.0
    %62 = vmatpush.msra.mxu0 0.0
    %63 = vmatpush.msra.mxu0 0.0
    %64 = vmatpush.msra.mxu0 0.0
    %65 = vmatpush.msra.mxu0 0.0
    %66 = vmatpush.msra.mxu0 0.0
    %67 = vmatpush.msra.mxu0 0.0
    %68 = vmatpush.msra.mxu0 0.0
    %69 = vmatpush.msra.mxu0 0.0
    %70 = vmatpush.msra.mxu0 0.0
    %71 = vmatpush.msra.mxu0 0.0
    %72 = vmatpush.msra.mxu0 0.0
    %73 = vmatpush.msra.mxu0 0.0
    %74 = vmatpush.msra.mxu0 0.0
    %75 = vmatpush.msra.mxu0 0.0
    %76 = vmatpush.msra.mxu0 %v43
    %77 = vmatmul.f32.gmra.mxu0 %v59
    %v78 = vpop.f32.mrf.mxu0
    %v79 = vadd.f32 %v49, %v78
    %80 = vdwg.mxu0
    %81 = vmatpush.msra.mxu0 0.0
    %82 = vmatpush.msra.mxu0 0.0
    %83 = vmatpush.msra.mxu0 0.0
    %84 = vmatpush.msra.mxu0 0.0
    %85 = vmatpush.msra.mxu0 0.0
    %86 = vmatpush.msra.mxu0 0.0
    %87 = vmatpush.msra.mxu0 0.0
    %88 = vmatpush.msra.mxu0 0.0
    %89 = vmatpush.msra.mxu0 0.0
    %90 = vmatpush.msra.mxu0 0.0
    %91 = vmatpush.msra.mxu0 0.0
    %92 = vmatpush.msra.mxu0 0.0
    %93 = vmatpush.msra.mxu0 0.0
    %94 = vmatpush.msra.mxu0 0.0
    %95 = vmatpush.msra.mxu0 0.0
    %96 = vmatpush.msra.mxu0 %v44
    %97 = vmatmul.f32.gmra.mxu0 %v59
    %v98 = vpop.f32.mrf.mxu0
    %v99 = vadd.f32 %v50, %v98
    %100 = vdwg.mxu0
    %101 = vmatpush.msra.mxu0 0.0
    %102 = vmatpush.msra.mxu0 0.0
    %103 = vmatpush.msra.mxu0 0.0
    %104 = vmatpush.msra.mxu0 0.0
    %105 = vmatpush.msra.mxu0 0.0
    %106 = vmatpush.msra.mxu0 0.0
    %107 = vmatpush.msra.mxu0 0.0
    %108 = vmatpush.msra.mxu0 0.0
    %109 = vmatpush.msra.mxu0 0.0
    %110 = vmatpush.msra.mxu0 0.0
    %111 = vmatpush.msra.mxu0 0.0
    %112 = vmatpush.msra.mxu0 0.0
    %113 = vmatpush.msra.mxu0 0.0
    %114 = vmatpush.msra.mxu0 0.0
    %115 = vmatpush.msra.mxu0 0.0
    %116 = vmatpush.msra.mxu0 %v45
    %117 = vmatmul.f32.gmra.mxu0 %v59
    %v118 = vpop.f32.mrf.mxu0
    %v119 = vadd.f32 %v51, %v118
    %120 = vdwg.mxu0
    %121 = vmatpush.msra.mxu0 0.0
    %122 = vmatpush.msra.mxu0 0.0
    %123 = vmatpush.msra.mxu0 0.0
    %124 = vmatpush.msra.mxu0 0.0
    %125 = vmatpush.msra.mxu0 0.0
    %126 = vmatpush.msra.mxu0 0.0
    %127 = vmatpush.msra.mxu0 0.0
    %128 = vmatpush.msra.mxu0 0.0
    %129 = vmatpush.msra.mxu0 0.0
    %130 = vmatpush.msra.mxu0 0.0
    %131 = vmatpush.msra.mxu0 0.0
    %132 = vmatpush.msra.mxu0 0.0
    %133 = vmatpush.msra.mxu0 0.0
    %134 = vmatpush.msra.mxu0 0.0
    %135 = vmatpush.msra.mxu0 0.0
    %136 = vmatpush.msra.mxu0 %v46
    %137 = vmatmul.f32.gmra.mxu0 %v59
    %v138 = vpop.f32.mrf.mxu0
    %v139 = vadd.f32 %v52, %v138
    %140 = vdwg.mxu0
    %v145 = vrot.slane %v99, 6
    %v146 = vrot.slane %v119, 4
    %v147 = vrot.slane %v139, 2
    %vm148 = vcmask 1041408
    %v149 = vsel %vm148, %v79, %v145
    %vm150 = vcmask 1045508
    %v151 = vsel %vm150, %v146, %v147
    %vm152 = vcmask 1043456
    %v153 = vsel %vm152, %v149, %v151
    %155 = vst [vmem:[%s3] sm:$0xff] %v153
    // Predicated region
    $region22: #{decoder_forward.6} parent=1 // pred_check
      _
    $region23: #{decoder_forward.6} parent=1 // pred_check_branch
      %157 = sbr.rel (0) target = $region25
    $region24: #{decoder_forward.6} parent=1 // pred_region
      _
    $region25: #{decoder_forward.6} parent=1 // pred_fallthru
      _
    // Predicated region
    $region26: #{decoder_forward.6} parent=1 // pred_check
      _
    $region27: #{decoder_forward.6} parent=1 // pred_check_branch
      %159 = sbr.rel (0) target = $region29
    $region28: #{decoder_forward.6} parent=1 // pred_region
      _
    $region29: #{decoder_forward.6} parent=1 // pred_fallthru
      _
    %160 = vsyncpa [#allocation3], 1
    %161 = vsyncpa [#allocation5], 1

// kernel: tile.38
$region0: #{tile.38}
  #allocation0 [shape = 's32[1]{0}', space=sflag, size = 0x4, scoped, tag = 'scoped memory for tile.38']
  %s0 = inlined_call_operand.vmem [shape: f32[32], index: 0, kind: input, shape index: {}]
  %s1 = inlined_call_operand.vmem [shape: f32[16,32], index: 1, kind: output, shape index: {}]
  // Predicated region
  $region2: #{tile.38} parent=0 // pred_check
    _
  $region3: #{tile.38} parent=0 // pred_check_branch
    %3 = sbr.rel (0) target = $region5
  $region4: #{tile.38} parent=0 // pred_region
    _
  $region5: #{tile.38} parent=0 // pred_fallthru
    _
  %v4 = vld [vmem:[%s0] ss:$0 sm:$0xff]
  %5 = vst [vmem:[%s1] sm:$0xff] %v4
  %s6 = scalar_lea.vmem %s1, 8
  %7 = vst [vmem:[%s6] sm:$0xff] %v4

// kernel: tile.39
$region0: #{tile.39}
  %s0 = inlined_call_operand.vmem [shape: f32[16,32], index: 0, kind: input, shape index: {}]
  %s1 = inlined_call_operand.vmem [shape: f32[1,512], index: 1, kind: output, shape index: {}]
  $region1: #{tile.39} parent=0
    #allocation0 [shape = 'u8[16384]{0}', space=vmem, size = 0x4000, scoped, tag = 'scoped mem for output reshape']
    %v2 = vld [vmem:[%s0] ss:$4 sm:$0xf]
    %vm3 = vcmask 261120
    %4 = vst.msk [vmem:[#allocation0] ss:$8 sm:$0xf] %vm3, %v2
    %s5 = scalar_lea.vmem %s0, 3
    %v6 = vld [vmem:[%s5] ss:$4 sm:$0xf]
    %7 = vrot.lane.b32.xlu0 %v6, 96
    %v8 = vpop.permute.xlu0 %7
    %vm9 = vcmask 1048320
    %10 = vst.msk [vmem:[#allocation0] ss:$8 sm:$0xf] %vm9, %v8
    %s11 = scalar_lea.vmem %s0, 2
    %v12 = vld [vmem:[%s11] ss:$4 sm:$0xf]
    %13 = vrot.lane.b32.xlu0 %v12, 64
    %v14 = vpop.permute.xlu0 %13
    %vm15 = vcmask 785920
    %16 = vst.msk [vmem:[#allocation0] ss:$8 sm:$0xf] %vm15, %v14
    %s17 = scalar_lea.vmem %s0, 1
    %v18 = vld [vmem:[%s17] ss:$4 sm:$0xf]
    %19 = vrot.lane.b32.xlu0 %v18, 32
    %v20 = vpop.permute.xlu0 %19
    %vm21 = vcmask 523520
    %22 = vst.msk [vmem:[#allocation0] ss:$8 sm:$0xf] %vm21, %v20
    %s24 = ssub.s32 2, 1
    %v25 = vld [vmem:[#allocation0] sm:%s24]
    %s27 = ssub.s32 2, 1
    %28 = vst [vmem:[%s1] sm:%s27] %v25
    %s29 = scalar_lea.vmem [#allocation0], 8
    %v30 = vld [vmem:[%s29] sm:%s24]
    %s32 = ssub.s32 2, 1
    %s33 = scalar_lea.vmem %s1, 1
    %34 = vst [vmem:[%s33] sm:%s32] %v30
    %s35 = scalar_lea.vmem [#allocation0], 16
    %v36 = vld [vmem:[%s35] sm:%s24]
    %s38 = ssub.s32 2, 1
    %s39 = scalar_lea.vmem %s1, 2
    %40 = vst [vmem:[%s39] sm:%s38] %v36
    %s41 = scalar_lea.vmem [#allocation0], 24
    %v42 = vld [vmem:[%s41] sm:%s24]
    %s44 = ssub.s32 2, 1
    %s45 = scalar_lea.vmem %s1, 3
    %46 = vst [vmem:[%s45] sm:%s44] %v42

// kernel: decoder_forward.8
$region0: #{decoder_forward.8}
  #allocation0 [shape = 'u32[]', space=smem, size = 0x4, offset = 0x4, fixed_abs, tag = 'smem constant byte address 0x4 - core index']
  #allocation1 [shape = 'u32[72,128]{1,0:T(1,128)}', space=vmem, size = 0x9000, scoped, tag = 'internal scratch']
  %s0 = inlined_call_operand.vmem [shape: bf16[16,256], index: 0, kind: input, shape index: {}]
  %s1 = inlined_call_operand.vmem [shape: f32[1,256], index: 1, kind: input, shape index: {}]
  %s2 = inlined_call_operand.vmem [shape: f32[1,256], index: 2, kind: input, shape index: {}]
  %s3 = inlined_call_operand.vmem [shape: bf16[16,256], index: 3, kind: output, shape index: {}]
  %s4 = sld [smem:[#allocation0]]
  $region22: #{decoder_forward.8} parent=0
    _
  %s6 = ssub.s32 1, %s4
  %s7 = scalar_select 0, %s6, %s4
  // Predicated region
  $region2: #{decoder_forward.8} parent=0 // pred_check
    _
  $region3: #{decoder_forward.8} parent=0 // pred_check_branch
    %9 = sbr.rel (0) target = $region5
  $region4: #{decoder_forward.8} parent=0 // pred_region
    _
  $region5: #{decoder_forward.8} parent=0 // pred_fallthru
    _
  // Predicated region
  $region6: #{decoder_forward.8} parent=0 // pred_check
    _
  $region7: #{decoder_forward.8} parent=0 // pred_check_branch
    %11 = sbr.rel (0) target = $region9
  $region8: #{decoder_forward.8} parent=0 // pred_region
    _
  $region9: #{decoder_forward.8} parent=0 // pred_fallthru
    _
  // Predicated region
  $region10: #{decoder_forward.8} parent=0 // pred_check
    _
  $region11: #{decoder_forward.8} parent=0 // pred_check_branch
    %13 = sbr.rel (0) target = $region13
  $region12: #{decoder_forward.8} parent=0 // pred_region
    _
  $region13: #{decoder_forward.8} parent=0 // pred_fallthru
    _
  %v14 = vld [vmem:[%s0] sm:$0xff]
  %v15 = vld [vmem:[%s0 + $0x8] sm:$0xff]
  %v16 = vunpack.c.l.bf16 %v14
  %v17 = vunpack.c.h.bf16 %v14
  %v18 = vunpack.c.l.bf16 %v15
  %v19 = vunpack.c.h.bf16 %v15
  %v20 = vld [vmem:[%s1] sm:$0x3]
  %v22 = vperm.slane %v20, 0
  %v23 = vperm.slane %v20, 1
  %v26 = vmul.f32 %v16, %v22
  %v27 = vmul.f32 %v17, %v23
  %v28 = vmul.f32 %v18, %v22
  %v29 = vmul.f32 %v19, %v23
  %v30 = vld [vmem:[%s2] sm:$0x3]
  %v32 = vperm.slane %v30, 0
  %v33 = vperm.slane %v30, 1
  %v36 = vadd.f32 %v26, %v32
  %v37 = vadd.f32 %v27, %v33
  %v38 = vadd.f32 %v28, %v32
  %v39 = vadd.f32 %v29, %v33
  %vm40 = vcmp.gt.f32.partialorder %v36, 0.0
  %vm41 = vcmp.gt.f32.partialorder %v37, 0.0
  %vm42 = vcmp.gt.f32.partialorder %v38, 0.0
  %vm43 = vcmp.gt.f32.partialorder %v39, 0.0
  %v44 = vmul.f32 %v36, 0.01
  %v45 = vmul.f32 %v37, 0.01
  %v46 = vmul.f32 %v38, 0.01
  %v47 = vmul.f32 %v39, 0.01
  %v48 = vsel %vm40, %v36, %v44
  %v49 = vsel %vm41, %v37, %v45
  %v50 = vsel %vm42, %v38, %v46
  %v51 = vsel %vm43, %v39, %v47
  %v52 = vpack.c.bf16 %v49, %v48
  %v53 = vpack.c.bf16 %v51, %v50
  %54 = vst [vmem:[%s3] sm:$0xff] %v52
  %55 = vst [vmem:[%s3 + $0x8] sm:$0xff] %v53
  // Predicated region
  $region14: #{decoder_forward.8} parent=0 // pred_check
    _
  $region15: #{decoder_forward.8} parent=0 // pred_check_branch
    %57 = sbr.rel (0) target = $region17
  $region16: #{decoder_forward.8} parent=0 // pred_region
    _
  $region17: #{decoder_forward.8} parent=0 // pred_fallthru
    _
  // Predicated region
  $region18: #{decoder_forward.8} parent=0 // pred_check
    _
  $region19: #{decoder_forward.8} parent=0 // pred_check_branch
    %59 = sbr.rel (0) target = $region21
  $region20: #{decoder_forward.8} parent=0 // pred_region
    _
  $region21: #{decoder_forward.8} parent=0 // pred_fallthru
    _

// kernel: decoder_forward.7
$region0: #{decoder_forward.7}
  #allocation0 [shape = 'u32[]', space=smem, size = 0x4, offset = 0x4, fixed_abs, tag = 'smem constant byte address 0x4 - core index']
  #allocation1 [shape = 'u32[72,128]{1,0:T(1,128)}', space=vmem, size = 0x9000, scoped, tag = 'internal scratch']
  %s0 = inlined_call_operand.vmem [shape: bf16[2,4,4,32], index: 0, kind: input, shape index: {}]
  %s1 = inlined_call_operand.vmem [shape: bf16[2,1,4,32], index: 1, kind: input, shape index: {}]
  %s2 = inlined_call_operand.vmem [shape: bf16[128,128], index: 2, kind: input, shape index: {}]
  %s3 = inlined_call_operand.vmem [shape: f32[1,128], index: 3, kind: input, shape index: {}]
  %s4 = inlined_call_operand.vmem [shape: bf16[2,4,2,4,64], index: 4, kind: output, shape index: {0}]
  %s5 = inlined_call_operand.vmem [shape: f32[2,1,8,128], index: 5, kind: output, shape index: {1}]
  %6 = xla_tuple %s4, %s5
  %s7 = sld [smem:[#allocation0]]
  $region57: #{decoder_forward.7} parent=0
    _
  %s9 = ssub.s32 1, %s7
  %s10 = scalar_select 0, %s9, %s7
  loop: start=0, step=1, limit=4
  $region2: #{decoder_forward.7} parent=0 // loop_pre_header
    _
  $region3: #{decoder_forward.7} parent=0 // loop_header
    %s12 = sphi 0, %s16
    %p13 = scmp.ge.s32.totalorder %s12, 4
    %s19 = sphi 0, %s31
    %s20 = sphi 0, %s27
    %s21 = sphi 0, %s19
    %s22 = sphi 0, %s20
    %s23 = sphi 0, %s21
    %s24 = sphi 0, %s22
    %s36 = sphi 0, %s38
    %s39 = sphi 0, %s36
    %s40 = sphi 0, %s39
    %s56 = sphi 0, %s40
    %s64 = sphi 0, %s66
    %s67 = sphi 0, %s64
    %s68 = sphi 0, %s67
    %s84 = sphi 0, %s68
    %s88 = sphi 0, %s88
    %s90 = sphi 0, %s88
    %s91 = sphi 0, %s90
    %s105 = sphi 0, %s91
    %s109 = sphi 0, %s109
    %s111 = sphi 0, %s109
    %s112 = sphi 0, %s111
    %s126 = sphi 0, %s112
    %s134 = sphi 0, %s136
    %s137 = sphi 0, %s134
    %s138 = sphi 0, %s137
    %s154 = sphi 0, %s138
    %s162 = sphi 0, %s164
    %s165 = sphi 0, %s162
    %s166 = sphi 0, %s165
    %s182 = sphi 0, %s166
  $region4: #{decoder_forward.7} parent=0 // loop_header_branch
    %15 = sbr.rel (%p13) target = $region8
  $region5: #{decoder_forward.7} parent=0 // loop_body
    %s17 = ssub.s32 %s12, 1
    %s18 = ssub.s32 %s12, 2
    %s25 = sadd.s32 1, %s20
    %p26 = scmp.ge.s32.totalorder %s25, 1
    %s27 = scalar_select %p26, 0, %s25
    %s28 = sadd.s32 1, %s19
    %s29 = scalar_select %p26, %s28, %s19
    %p30 = scmp.ge.s32.totalorder %s29, 2
    %s31 = scalar_select %p30, 0, %s29
    %s32 = ssub.s32 %s19, %s31
    %s33 = ssub.s32 %s20, %s27
    %s34 = sor.u32 %s32, %s33
    %p35 = scmp.eq.s32.totalorder %s34, 0
    %s37 = sadd.s32 %s36, 1
    %s38 = scalar_select %p35, %s36, %s37
    %p41 = pneg %p35
    %p42 = scmp.eq.s32.totalorder %s12, 1
    %p43 = por %p41, %p42
    %p44 = scmp.ne.s32.totalorder %s36, %s39
    %p45 = scmp.eq.s32.totalorder %s12, 0
    %p46 = por %p44, %p45
    %p47 = scmp.ne.s32.totalorder %s36, %s39
    %p48 = scmp.eq.s32.totalorder %s17, 1
    %p49 = por %p47, %p48
    %p50 = scmp.ne.s32.totalorder %s39, %s40
    %p51 = scmp.eq.s32.totalorder %s17, 0
    %p52 = por %p50, %p51
    %p53 = scmp.ne.s32.totalorder %s39, %s40
    %p54 = scmp.eq.s32.totalorder %s18, 1
    %p55 = por %p53, %p54
    %p57 = scmp.ne.s32.totalorder %s40, %s56
    %p58 = scmp.eq.s32.totalorder %s18, 0
    %p59 = por %p57, %p58
    %s60 = ssub.s32 %s19, %s31
    %s61 = ssub.s32 %s20, %s27
    %s62 = sor.u32 %s60, %s61
    %p63 = scmp.eq.s32.totalorder %s62, 0
    %s65 = sadd.s32 %s64, 1
    %s66 = scalar_select %p63, %s64, %s65
    %p69 = pneg %p63
    %p70 = scmp.eq.s32.totalorder %s12, 1
    %p71 = por %p69, %p70
    %p72 = scmp.ne.s32.totalorder %s64, %s67
    %p73 = scmp.eq.s32.totalorder %s12, 0
    %p74 = por %p72, %p73
    %p75 = scmp.ne.s32.totalorder %s64, %s67
    %p76 = scmp.eq.s32.totalorder %s17, 1
    %p77 = por %p75, %p76
    %p78 = scmp.ne.s32.totalorder %s67, %s68
    %p79 = scmp.eq.s32.totalorder %s17, 0
    %p80 = por %p78, %p79
    %p81 = scmp.ne.s32.totalorder %s67, %s68
    %p82 = scmp.eq.s32.totalorder %s18, 1
    %p83 = por %p81, %p82
    %p85 = scmp.ne.s32.totalorder %s68, %s84
    %p86 = scmp.eq.s32.totalorder %s18, 0
    %p87 = por %p85, %p86
    %s89 = sadd.s32 %s88, 1
    %p92 = scmp.eq.s32.totalorder %s12, 1
    %p93 = scmp.ne.s32.totalorder %s88, %s90
    %p94 = scmp.eq.s32.totalorder %s12, 0
    %p95 = por %p93, %p94
    %p96 = scmp.ne.s32.totalorder %s88, %s90
    %p97 = scmp.eq.s32.totalorder %s17, 1
    %p98 = por %p96, %p97
    %p99 = scmp.ne.s32.totalorder %s90, %s91
    %p100 = scmp.eq.s32.totalorder %s17, 0
    %p101 = por %p99, %p100
    %p102 = scmp.ne.s32.totalorder %s90, %s91
    %p103 = scmp.eq.s32.totalorder %s18, 1
    %p104 = por %p102, %p103
    %p106 = scmp.ne.s32.totalorder %s91, %s105
    %p107 = scmp.eq.s32.totalorder %s18, 0
    %p108 = por %p106, %p107
    %s110 = sadd.s32 %s109, 1
    %p113 = scmp.eq.s32.totalorder %s12, 1
    %p114 = scmp.ne.s32.totalorder %s109, %s111
    %p115 = scmp.eq.s32.totalorder %s12, 0
    %p116 = por %p114, %p115
    %p117 = scmp.ne.s32.totalorder %s109, %s111
    %p118 = scmp.eq.s32.totalorder %s17, 1
    %p119 = por %p117, %p118
    %p120 = scmp.ne.s32.totalorder %s111, %s112
    %p121 = scmp.eq.s32.totalorder %s17, 0
    %p122 = por %p120, %p121
    %p123 = scmp.ne.s32.totalorder %s111, %s112
    %p124 = scmp.eq.s32.totalorder %s18, 1
    %p125 = por %p123, %p124
    %p127 = scmp.ne.s32.totalorder %s112, %s126
    %p128 = scmp.eq.s32.totalorder %s18, 0
    %p129 = por %p127, %p128
    %s130 = ssub.s32 %s19, %s31
    %s131 = ssub.s32 %s20, %s27
    %s132 = sor.u32 %s130, %s131
    %p133 = scmp.eq.s32.totalorder %s132, 0
    %s135 = sadd.s32 %s134, 1
    %s136 = scalar_select %p133, %s134, %s135
    %p139 = pneg %p133
    %p140 = scmp.eq.s32.totalorder %s12, 1
    %p141 = por %p139, %p140
    %p142 = scmp.ne.s32.totalorder %s134, %s137
    %p143 = scmp.eq.s32.totalorder %s12, 0
    %p144 = por %p142, %p143
    %p145 = scmp.ne.s32.totalorder %s134, %s137
    %p146 = scmp.eq.s32.totalorder %s17, 1
    %p147 = por %p145, %p146
    %p148 = scmp.ne.s32.totalorder %s137, %s138
    %p149 = scmp.eq.s32.totalorder %s17, 0
    %p150 = por %p148, %p149
    %p151 = scmp.ne.s32.totalorder %s137, %s138
    %p152 = scmp.eq.s32.totalorder %s18, 1
    %p153 = por %p151, %p152
    %p155 = scmp.ne.s32.totalorder %s138, %s154
    %p156 = scmp.eq.s32.totalorder %s18, 0
    %p157 = por %p155, %p156
    %s158 = ssub.s32 %s19, %s31
    %s159 = ssub.s32 %s20, %s27
    %s160 = sor.u32 %s158, %s159
    %p161 = scmp.eq.s32.totalorder %s160, 0
    %s163 = sadd.s32 %s162, 1
    %s164 = scalar_select %p161, %s162, %s163
    %p167 = pneg %p161
    %p168 = scmp.eq.s32.totalorder %s12, 1
    %p169 = por %p167, %p168
    %p170 = scmp.ne.s32.totalorder %s162, %s165
    %p171 = scmp.eq.s32.totalorder %s12, 0
    %p172 = por %p170, %p171
    %p173 = scmp.ne.s32.totalorder %s162, %s165
    %p174 = scmp.eq.s32.totalorder %s17, 1
    %p175 = por %p173, %p174
    %p176 = scmp.ne.s32.totalorder %s165, %s166
    %p177 = scmp.eq.s32.totalorder %s17, 0
    %p178 = por %p176, %p177
    %p179 = scmp.ne.s32.totalorder %s165, %s166
    %p180 = scmp.eq.s32.totalorder %s18, 1
    %p181 = por %p179, %p180
    %p183 = scmp.ne.s32.totalorder %s166, %s182
    %p184 = scmp.eq.s32.totalorder %s18, 0
    %p185 = por %p183, %p184
    %p186 = scmp.le.s32.totalorder 1, %s12
    %p187 = scmp.lt.s32.totalorder %s12, 3
    %p188 = pnand %p186, %p187
    %p189 = pneg %p188
    // Predicated region
    $region9: #{decoder_forward.7} parent=5 // pred_check
      _
    $region10: #{decoder_forward.7} parent=5 // pred_check_branch
      %191 = sbr.rel (%p188) target = $region12
    $region11: #{decoder_forward.7} parent=5 // pred_region
      %s192 = ssub.s32 %s12, 1
      // Predicated region
      $region13: #{decoder_forward.7} parent=11 // pred_check
        %p193 = pneg %p101
      $region14: #{decoder_forward.7} parent=11 // pred_check_branch
        %195 = sbr.rel (%p193) target = $region16
      $region15: #{decoder_forward.7} parent=11 // pred_region
        _
      $region16: #{decoder_forward.7} parent=11 // pred_fallthru
        _
      // Predicated region
      $region17: #{decoder_forward.7} parent=11 // pred_check
        %p196 = pneg %p122
      $region18: #{decoder_forward.7} parent=11 // pred_check_branch
        %198 = sbr.rel (%p196) target = $region20
      $region19: #{decoder_forward.7} parent=11 // pred_region
        _
      $region20: #{decoder_forward.7} parent=11 // pred_fallthru
        _
    $region12: #{decoder_forward.7} parent=5 // pred_fallthru
      _
    %p199 = scmp.lt.s32.totalorder %s12, 2
    // Predicated region
    $region21: #{decoder_forward.7} parent=5 // pred_check
      %p200 = pneg %p199
    $region22: #{decoder_forward.7} parent=5 // pred_check_branch
      %202 = sbr.rel (%p200) target = $region24
    $region23: #{decoder_forward.7} parent=5 // pred_region
      // Predicated region
      $region25: #{decoder_forward.7} parent=23 // pred_check
        %p203 = pneg %p46
      $region26: #{decoder_forward.7} parent=23 // pred_check_branch
        %205 = sbr.rel (%p203) target = $region28
      $region27: #{decoder_forward.7} parent=23 // pred_region
        %s206 = smul.u32 4, %s20
        %p207 = scmp.lt.s32.totalorder %s19, 1
        %s208 = scalar_select %p207, %s19, 1
        %p209 = scmp.lt.s32.totalorder %s206, 3
        %s210 = scalar_select %p209, %s206, 3
        %s211 = smul.addr %s208, 4
        %s212 = sadd.s32 %s210, %s211
        %s213 = smul.addr %s212, 2
        %s214 = scalar_lea.vmem %s0, %s213
        %s215 = smul.u32 4, %s20
      $region28: #{decoder_forward.7} parent=23 // pred_fallthru
        _
      // Predicated region
      $region29: #{decoder_forward.7} parent=23 // pred_check
        %p216 = pneg %p74
      $region30: #{decoder_forward.7} parent=23 // pred_check_branch
        %218 = sbr.rel (%p216) target = $region32
      $region31: #{decoder_forward.7} parent=23 // pred_region
        %p219 = scmp.lt.s32.totalorder %s19, 1
        %s220 = scalar_select %p219, %s19, 1
        %p221 = scmp.lt.s32.totalorder %s20, 0
        %s222 = scalar_select %p221, %s20, 0
        %s223 = sadd.s32 %s222, %s220
        %s224 = smul.addr %s223, 2
        %s225 = scalar_lea.vmem %s1, %s224
      $region32: #{decoder_forward.7} parent=23 // pred_fallthru
        _
    $region24: #{decoder_forward.7} parent=5 // pred_fallthru
      _
    %p226 = scmp.le.s32.totalorder 1, %s12
    %p227 = scmp.lt.s32.totalorder %s12, 3
    %p228 = pnand %p226, %p227
    %p229 = pneg %p228
    // Predicated region
    $region33: #{decoder_forward.7} parent=5 // pred_check
      _
    $region34: #{decoder_forward.7} parent=5 // pred_check_branch
      %231 = sbr.rel (%p228) target = $region36
    $region35: #{decoder_forward.7} parent=5 // pred_region
      %s232 = ssub.s32 %s12, 1
      %s233 = smul.u32 4, %s22
      %p234 = scmp.lt.s32.totalorder %s21, 1
      %s235 = scalar_select %p234, %s21, 1
      %p236 = scmp.lt.s32.totalorder %s233, 3
      %s237 = scalar_select %p236, %s233, 3
      %s238 = smul.addr %s235, 4
      %s239 = sadd.s32 %s237, %s238
      %s240 = smul.addr %s239, 2
      %s241 = scalar_lea.vmem %s0, %s240
      %p242 = pneg %p52
      %p243 = pneg %p49
      %p244 = scmp.lt.s32.totalorder %s21, 1
      %s245 = scalar_select %p244, %s21, 1
      %p246 = scmp.lt.s32.totalorder %s22, 0
      %s247 = scalar_select %p246, %s22, 0
      %s248 = sadd.s32 %s247, %s245
      %s249 = smul.addr %s248, 2
      %s250 = scalar_lea.vmem %s1, %s249
      %p251 = pneg %p80
      %p252 = pneg %p77
      %p253 = pneg %p101
      %p254 = pneg %p98
      %p255 = pneg %p122
      %p256 = pneg %p119
      %p257 = pneg %p150
      %p258 = pneg %p147
      %s259 = smul.u32 4, %s22
      %p260 = scmp.lt.s32.totalorder %s21, 1
      %s261 = scalar_select %p260, %s21, 1
      %p262 = scmp.lt.s32.totalorder %s259, 3
      %s263 = scalar_select %p262, %s259, 3
      %s264 = smul.addr %s263, 2
      %s265 = smul.addr %s261, 8
      %s266 = sadd.s32 %s264, %s265
      %s267 = smul.addr %s266, 2
      %s268 = scalar_lea.vmem %s4, %s267
      %p269 = pneg %p178
      %p270 = pneg %p175
      %p271 = scmp.lt.s32.totalorder %s21, 1
      %s272 = scalar_select %p271, %s21, 1
      %p273 = scmp.lt.s32.totalorder %s22, 0
      %s274 = scalar_select %p273, %s22, 0
      %s275 = sadd.s32 %s274, %s272
      %s276 = smul.addr %s275, 8
      %s277 = scalar_lea.vmem %s5, %s276
      %s278 = smul.u32 4, %s22
      %p279 = scmp.lt.s32.totalorder %s21, 1
      %s280 = scalar_select %p279, %s21, 1
      %p281 = scmp.lt.s32.totalorder %s278, 3
      %s282 = scalar_select %p281, %s278, 3
      %s283 = smul.addr %s280, 4
      %s284 = sadd.s32 %s282, %s283
      %s285 = smul.addr %s284, 2
      %s286 = scalar_lea.vmem %s0, %s285
      %s287 = smul.u32 4, %s22
      %p288 = scmp.lt.s32.totalorder %s21, 1
      %s289 = scalar_select %p288, %s21, 1
      %p290 = scmp.lt.s32.totalorder %s22, 0
      %s291 = scalar_select %p290, %s22, 0
      %s292 = sadd.s32 %s291, %s289
      %s293 = smul.addr %s292, 2
      %s294 = scalar_lea.vmem %s1, %s293
      %s295 = smul.u32 4, %s22
      %p296 = scmp.lt.s32.totalorder %s21, 1
      %s297 = scalar_select %p296, %s21, 1
      %p298 = scmp.lt.s32.totalorder %s295, 3
      %s299 = scalar_select %p298, %s295, 3
      %s300 = smul.addr %s299, 2
      %s301 = smul.addr %s297, 8
      %s302 = sadd.s32 %s300, %s301
      %s303 = smul.addr %s302, 2
      %s304 = scalar_lea.vmem %s4, %s303
      %s305 = smul.u32 4, %s22
      %p306 = scmp.lt.s32.totalorder %s21, 1
      %s307 = scalar_select %p306, %s21, 1
      %p308 = scmp.lt.s32.totalorder %s22, 0
      %s309 = scalar_select %p308, %s22, 0
      %s310 = sadd.s32 %s309, %s307
      %s311 = smul.addr %s310, 8
      %s312 = scalar_lea.vmem %s5, %s311
      %v314 = vld [vmem:[%s286] sm:$0x3]
      %v315 = vld [vmem:[%s286 + $0x2] sm:$0x3]
      %v316 = vld [vmem:[%s286 + $0x4] sm:$0x3]
      %v317 = vld [vmem:[%s286 + $0x6] sm:$0x3]
      %v318 = vld [vmem:[%s294] sm:$0x3]
      %vm319 = vcmask 1041408
      %v322 = vsel %vm319, %v314, 0
      %v324 = vsel %vm319, %v315, 0
      %v326 = vsel %vm319, %v316, 0
      %v328 = vsel %vm319, %v317, 0
      %v330 = vsel %vm319, %v318, 0
      %v331 = vld [vmem:[%s3] sm:$0x1]
      %v333 = vperm.slane %v331, 0
      %v335 = vadd.f32 %v333, 0.0
      %v336 = vld [vmem:[%s2] sm:$0xf]
      %v337 = vld [vmem:[%s2 + $0x4] sm:$0xf]
      %v338 = vld [vmem:[%s2 + $0x8] sm:$0xf]
      %v339 = vld [vmem:[%s2 + $0xc] sm:$0xf]
      %340 = vst [vmem:[#allocation1] ss:$4 sm:$0xff] %v322
      %s341 = scalar_lea.vmem [#allocation1], 1
      %342 = vst [vmem:[%s341] ss:$4 sm:$0xff] %v324
      %s343 = scalar_lea.vmem [#allocation1], 2
      %344 = vst [vmem:[%s343] ss:$4 sm:$0xff] %v326
      %s345 = scalar_lea.vmem [#allocation1], 3
      %346 = vst [vmem:[%s345] ss:$4 sm:$0xff] %v328
      %v347 = vld.sshfl [vmem:[#allocation1] sm:$0xff pattern:$0x73625140]
      %v352 = vunpack.c.l.b16 %v336
      %v353 = vunpack.c.l.b16 %v337
      %v354 = vunpack.c.l.b16 %v338
      %v355 = vunpack.c.l.b16 %v339
      %v356 = vpack.c.b16 %v353, %v352
      %v357 = vpack.c.b16 %v355, %v354
      %vm360 = vcmask 261120
      %v361 = vsel %vm360, %v347, 0
      %363 = vmatpush.bf16.msra.mxu0 0
      %364 = vmatpush.bf16.msra.mxu0 0
      %365 = vmatpush.bf16.msra.mxu0 0
      %366 = vmatpush.bf16.msra.mxu0 0
      %367 = vmatpush.bf16.msra.mxu0 0
      %368 = vmatpush.bf16.msra.mxu0 0
      %369 = vmatpush.bf16.msra.mxu0 %v357
      %370 = vmatpush.bf16.msra.mxu0 %v356
      %371 = vmatmul.bf16.gmra.mxu0 %v361
      %v372 = vpop.f32.mrf.mxu0
      %v373 = vadd.f32 0.0, %v372
      %v374 = vpop.f32.mrf.mxu0
      %v375 = vadd.f32 0.0, %v374
      %376 = vdwg.mxu0
      %v377 = vadd.f32 %v335, %v373
      %v378 = vadd.f32 %v335, %v375
      %v383 = vrot.slane %v322, 2
      %v384 = vrot.slane %v324, 2
      %v385 = vrot.slane %v326, 2
      %v386 = vrot.slane %v328, 2
      %vm387 = vsmask.f32 1280
      %vm388 = vsmask.f32 3336
      %vm389 = vmor %vm387, %vm388
      %vm390 = vsmask.f32 5392
      %vm391 = vmor %vm389, %vm390
      %vm392 = vsmask.f32 7448
      %vm393 = vmor %vm391, %vm392
      %v394 = vshrl.u32 %v322, 16
      %v396 = vrot.slane %v394, 6
      %v397 = vshll.u32 %v322, 16
      %v399 = vrot.slane %v397, 7
      %v400 = vor.u32 %v396, %v399
      %v401 = vrot.slane %v400, 2
      %v403 = vshll.u32 %v383, 16
      %v405 = vrot.slane %v403, 7
      %v406 = vsel %vm393, %v401, %v405
      %v407 = vshrl.u32 %v324, 16
      %v409 = vrot.slane %v407, 6
      %v410 = vshll.u32 %v324, 16
      %v412 = vrot.slane %v410, 7
      %v413 = vor.u32 %v409, %v412
      %v414 = vrot.slane %v413, 2
      %v416 = vshll.u32 %v384, 16
      %v418 = vrot.slane %v416, 7
      %v419 = vsel %vm393, %v414, %v418
      %v420 = vshrl.u32 %v326, 16
      %v422 = vrot.slane %v420, 6
      %v423 = vshll.u32 %v326, 16
      %v425 = vrot.slane %v423, 7
      %v426 = vor.u32 %v422, %v425
      %v427 = vrot.slane %v426, 2
      %v429 = vshll.u32 %v385, 16
      %v431 = vrot.slane %v429, 7
      %v432 = vsel %vm393, %v427, %v431
      %v433 = vshrl.u32 %v328, 16
      %v435 = vrot.slane %v433, 6
      %v436 = vshll.u32 %v328, 16
      %v438 = vrot.slane %v436, 7
      %v439 = vor.u32 %v435, %v438
      %v440 = vrot.slane %v439, 2
      %v442 = vshll.u32 %v386, 16
      %v444 = vrot.slane %v442, 7
      %v445 = vsel %vm393, %v440, %v444
      %v446 = vld [vmem:[%s2 + $0x10] sm:$0xf]
      %v447 = vld [vmem:[%s2 + $0x14] sm:$0xf]
      %v448 = vld [vmem:[%s2 + $0x18] sm:$0xf]
      %v449 = vld [vmem:[%s2 + $0x1c] sm:$0xf]
      %451 = vst [vmem:[#allocation1] ss:$4 sm:$0xff] %v406
      %s453 = scalar_lea.vmem [#allocation1], 1
      %454 = vst [vmem:[%s453] ss:$4 sm:$0xff] %v419
      %s456 = scalar_lea.vmem [#allocation1], 2
      %457 = vst [vmem:[%s456] ss:$4 sm:$0xff] %v432
      %s459 = scalar_lea.vmem [#allocation1], 3
      %460 = vst [vmem:[%s459] ss:$4 sm:$0xff] %v445
      %v461 = vld.sshfl [vmem:[#allocation1] sm:$0xff pattern:$0x73625140]
      %v466 = vunpack.c.l.b16 %v446
      %v467 = vunpack.c.l.b16 %v447
      %v468 = vunpack.c.l.b16 %v448
      %v469 = vunpack.c.l.b16 %v449
      %v470 = vpack.c.b16 %v467, %v466
      %v471 = vpack.c.b16 %v469, %v468
      %v474 = vsel %vm360, %v461, 0
      %476 = vmatpush.bf16.msra.mxu0 0
      %477 = vmatpush.bf16.msra.mxu0 0
      %478 = vmatpush.bf16.msra.mxu0 0
      %479 = vmatpush.bf16.msra.mxu0 0
      %480 = vmatpush.bf16.msra.mxu0 0
      %481 = vmatpush.bf16.msra.mxu0 0
      %482 = vmatpush.bf16.msra.mxu0 %v471
      %483 = vmatpush.bf16.msra.mxu0 %v470
      %484 = vmatmul.bf16.gmra.mxu0 %v474
      %v485 = vpop.f32.mrf.mxu0
      %v486 = vadd.f32 0.0, %v485
      %v487 = vpop.f32.mrf.mxu0
      %v488 = vadd.f32 0.0, %v487
      %489 = vdwg.mxu0
      %v490 = vadd.f32 %v377, %v486
      %v491 = vadd.f32 %v378, %v488
      %v492 = vld [vmem:[%s2 + $0x20] sm:$0xf]
      %v493 = vld [vmem:[%s2 + $0x24] sm:$0xf]
      %v494 = vld [vmem:[%s2 + $0x28] sm:$0xf]
      %v495 = vld [vmem:[%s2 + $0x2c] sm:$0xf]
      %496 = vst [vmem:[#allocation1] ss:$4 sm:$0xff] %v324
      %s497 = scalar_lea.vmem [#allocation1], 1
      %498 = vst [vmem:[%s497] ss:$4 sm:$0xff] %v326
      %s499 = scalar_lea.vmem [#allocation1], 2
      %500 = vst [vmem:[%s499] ss:$4 sm:$0xff] %v328
      %s501 = scalar_lea.vmem [#allocation1], 3
      %502 = vst [vmem:[%s501] ss:$4 sm:$0xff] %v330
      %v503 = vld.sshfl [vmem:[#allocation1] sm:$0xff pattern:$0x73625140]
      %v508 = vunpack.c.l.b16 %v492
      %v509 = vunpack.c.l.b16 %v493
      %v510 = vunpack.c.l.b16 %v494
      %v511 = vunpack.c.l.b16 %v495
      %v512 = vpack.c.b16 %v509, %v508
      %v513 = vpack.c.b16 %v511, %v510
      %v516 = vsel %vm360, %v503, 0
      %518 = vmatpush.bf16.msra.mxu0 0
      %519 = vmatpush.bf16.msra.mxu0 0
      %520 = vmatpush.bf16.msra.mxu0 0
      %521 = vmatpush.bf16.msra.mxu0 0
      %522 = vmatpush.bf16.msra.mxu0 0
      %523 = vmatpush.bf16.msra.mxu0 0
      %524 = vmatpush.bf16.msra.mxu0 %v513
      %525 = vmatpush.bf16.msra.mxu0 %v512
      %526 = vmatmul.bf16.gmra.mxu0 %v516
      %v527 = vpop.f32.mrf.mxu0
      %v528 = vadd.f32 0.0, %v527
      %v529 = vpop.f32.mrf.mxu0
      %v530 = vadd.f32 0.0, %v529
      %531 = vdwg.mxu0
      %v532 = vadd.f32 %v490, %v528
      %v533 = vadd.f32 %v491, %v530
      %v535 = vrot.slane %v330, 2
      %v536 = vshrl.u32 %v330, 16
      %v538 = vrot.slane %v536, 6
      %v539 = vshll.u32 %v330, 16
      %v541 = vrot.slane %v539, 7
      %v542 = vor.u32 %v538, %v541
      %v543 = vrot.slane %v542, 2
      %v545 = vshll.u32 %v535, 16
      %v547 = vrot.slane %v545, 7
      %v548 = vsel %vm393, %v543, %v547
      %v549 = vld [vmem:[%s2 + $0x30] sm:$0xf]
      %v550 = vld [vmem:[%s2 + $0x34] sm:$0xf]
      %v551 = vld [vmem:[%s2 + $0x38] sm:$0xf]
      %v552 = vld [vmem:[%s2 + $0x3c] sm:$0xf]
      %553 = vst [vmem:[#allocation1] ss:$4 sm:$0xff] %v419
      %s554 = scalar_lea.vmem [#allocation1], 1
      %555 = vst [vmem:[%s554] ss:$4 sm:$0xff] %v432
      %s556 = scalar_lea.vmem [#allocation1], 2
      %557 = vst [vmem:[%s556] ss:$4 sm:$0xff] %v445
      %s559 = scalar_lea.vmem [#allocation1], 3
      %560 = vst [vmem:[%s559] ss:$4 sm:$0xff] %v548
      %v561 = vld.sshfl [vmem:[#allocation1] sm:$0xff pattern:$0x73625140]
      %v566 = vunpack.c.l.b16 %v549
      %v567 = vunpack.c.l.b16 %v550
      %v568 = vunpack.c.l.b16 %v551
      %v569 = vunpack.c.l.b16 %v552
      %v570 = vpack.c.b16 %v567, %v566
      %v571 = vpack.c.b16 %v569, %v568
      %v574 = vsel %vm360, %v561, 0
      %576 = vmatpush.bf16.msra.mxu0 0
      %577 = vmatpush.bf16.msra.mxu0 0
      %578 = vmatpush.bf16.msra.mxu0 0
      %579 = vmatpush.bf16.msra.mxu0 0
      %580 = vmatpush.bf16.msra.mxu0 0
      %581 = vmatpush.bf16.msra.mxu0 0
      %582 = vmatpush.bf16.msra.mxu0 %v571
      %583 = vmatpush.bf16.msra.mxu0 %v570
      %584 = vmatmul.bf16.gmra.mxu0 %v574
      %v585 = vpop.f32.mrf.mxu0
      %v586 = vadd.f32 0.0, %v585
      %v587 = vpop.f32.mrf.mxu0
      %v588 = vadd.f32 0.0, %v587
      %589 = vdwg.mxu0
      %v590 = vadd.f32 %v532, %v586
      %v591 = vadd.f32 %v533, %v588
      %v592 = vadd.f32 %v590, %v591
      %v593 = vrot.slane %v592, 4
      %v594 = vadd.f32 %v592, %v593
      %v595 = vrot.slane %v594, 2
      %v596 = vadd.f32 %v594, %v595
      %v597 = vrot.slane %v596, 1
      %v598 = vadd.f32 %v596, %v597
      %v599 = vmul.f32 %v590, %v590
      %v600 = vmul.f32 %v591, %v591
      %v601 = vadd.f32 %v599, %v600
      %v602 = vrot.slane %v601, 4
      %v603 = vadd.f32 %v601, %v602
      %v604 = vrot.slane %v603, 2
      %v605 = vadd.f32 %v603, %v604
      %v606 = vrot.slane %v605, 1
      %v607 = vadd.f32 %v605, %v606
      %v608 = vlaneseq
      %v609 = vshrl.u32 %v608, 7
      %vm610 = vcmp.eq.s32.totalorder %v609, 0
      %v611 = vsel %vm610, %v598, 0.0
      %vm612 = vcmp.eq.s32.totalorder %v609, 1
      %v613 = vsel %vm612, %v607, 0.0
      %v614 = vadd.f32 %v611, %v613
      %615 = vst [vmem:[%s312] sm:$0xff] %v614
      %v618 = vrot.slane %v590, 4
      %v619 = vrot.slane %v591, 4
      %v622 = vpack.c.bf16 %v590, %v590
      %v623 = vpack.c.bf16 %v618, %v618
      %v624 = vpack.c.bf16 %v591, %v591
      %v625 = vpack.c.bf16 %v619, %v619
      %vm626 = vcmask 517120
      %627 = vst.msk [vmem:[%s304] sm:$0x3] %vm626, %v622
      %628 = vst.msk [vmem:[%s304 + $0x4] sm:$0x3] %vm626, %v623
      %629 = vst.msk [vmem:[%s304 + $0x8] sm:$0x3] %vm626, %v624
      %630 = vst.msk [vmem:[%s304 + $0xc] sm:$0x3] %vm626, %v625
      %v635 = vrot.slane %v622, 2
      %v636 = vrot.slane %v623, 2
      %v637 = vrot.slane %v624, 2
      %v638 = vrot.slane %v625, 2
      %v641 = vsel %vm319, %v622, %v635
      %v645 = vsel %vm319, %v623, %v636
      %v649 = vsel %vm319, %v624, %v637
      %v653 = vsel %vm319, %v625, %v638
      %655 = vrot.lane.b32.xlu0 %v641, 64
      %v656 = vpop.permute.xlu0 %655
      %657 = vrot.lane.b32.xlu0 %v645, 64
      %v658 = vpop.permute.xlu0 %657
      %659 = vrot.lane.b32.xlu0 %v649, 64
      %v660 = vpop.permute.xlu0 %659
      %661 = vrot.lane.b32.xlu0 %v653, 64
      %v662 = vpop.permute.xlu0 %661
      %s667 = scalar_lea.vmem %s304, 2
      %668 = vst.msk [vmem:[%s667] sm:$0x3] %vm626, %v656
      %669 = vst.msk [vmem:[%s667 + $0x4] sm:$0x3] %vm626, %v658
      %670 = vst.msk [vmem:[%s667 + $0x8] sm:$0x3] %vm626, %v660
      %671 = vst.msk [vmem:[%s667 + $0xc] sm:$0x3] %vm626, %v662
      %s672 = smul.u32 4, %s22
      %p673 = scmp.lt.s32.totalorder %s21, 1
      %s674 = scalar_select %p673, %s21, 1
      %p675 = scmp.lt.s32.totalorder %s672, 3
      %s676 = scalar_select %p675, %s672, 3
      %s677 = smul.addr %s676, 2
      %s678 = smul.addr %s674, 8
      %s679 = sadd.s32 %s677, %s678
      %s680 = smul.addr %s679, 2
      %s681 = scalar_lea.vmem %s4, %s680
      %p682 = scmp.lt.s32.totalorder %s21, 1
      %s683 = scalar_select %p682, %s21, 1
      %p684 = scmp.lt.s32.totalorder %s22, 0
      %s685 = scalar_select %p684, %s22, 0
      %s686 = sadd.s32 %s685, %s683
      %s687 = smul.addr %s686, 8
      %s688 = scalar_lea.vmem %s5, %s687
      // Predicated region
      $region37: #{decoder_forward.7} parent=35 // pred_check
        %p689 = pneg %p147
      $region38: #{decoder_forward.7} parent=35 // pred_check_branch
        %691 = sbr.rel (%p689) target = $region40
      $region39: #{decoder_forward.7} parent=35 // pred_region
        %s692 = smul.u32 4, %s22
      $region40: #{decoder_forward.7} parent=35 // pred_fallthru
        _
      // Predicated region
      $region41: #{decoder_forward.7} parent=35 // pred_check
        %p693 = pneg %p175
      $region42: #{decoder_forward.7} parent=35 // pred_check_branch
        %695 = sbr.rel (%p693) target = $region44
      $region43: #{decoder_forward.7} parent=35 // pred_region
        _
      $region44: #{decoder_forward.7} parent=35 // pred_fallthru
        _
    $region36: #{decoder_forward.7} parent=5 // pred_fallthru
      _
    %p696 = scmp.le.s32.totalorder 2, %s12
    // Predicated region
    $region45: #{decoder_forward.7} parent=5 // pred_check
      %p697 = pneg %p696
    $region46: #{decoder_forward.7} parent=5 // pred_check_branch
      %699 = sbr.rel (%p697) target = $region48
    $region47: #{decoder_forward.7} parent=5 // pred_region
      %s700 = ssub.s32 %s12, 2
      // Predicated region
      $region49: #{decoder_forward.7} parent=47 // pred_check
        %p701 = pneg %p153
      $region50: #{decoder_forward.7} parent=47 // pred_check_branch
        %703 = sbr.rel (%p701) target = $region52
      $region51: #{decoder_forward.7} parent=47 // pred_region
        %s704 = smul.u32 4, %s24
        %p705 = scmp.lt.s32.totalorder %s23, 1
        %s706 = scalar_select %p705, %s23, 1
        %p707 = scmp.lt.s32.totalorder %s704, 3
        %s708 = scalar_select %p707, %s704, 3
        %s709 = smul.addr %s708, 2
        %s710 = smul.addr %s706, 8
        %s711 = sadd.s32 %s709, %s710
        %s712 = smul.addr %s711, 2
        %s713 = scalar_lea.vmem %s4, %s712
      $region52: #{decoder_forward.7} parent=47 // pred_fallthru
        _
      // Predicated region
      $region53: #{decoder_forward.7} parent=47 // pred_check
        %p714 = pneg %p181
      $region54: #{decoder_forward.7} parent=47 // pred_check_branch
        %716 = sbr.rel (%p714) target = $region56
      $region55: #{decoder_forward.7} parent=47 // pred_region
        %p717 = scmp.lt.s32.totalorder %s23, 1
        %s718 = scalar_select %p717, %s23, 1
        %p719 = scmp.lt.s32.totalorder %s24, 0
        %s720 = scalar_select %p719, %s24, 0
        %s721 = sadd.s32 %s720, %s718
        %s722 = smul.addr %s721, 8
        %s723 = scalar_lea.vmem %s5, %s722
      $region56: #{decoder_forward.7} parent=47 // pred_fallthru
        _
    $region48: #{decoder_forward.7} parent=5 // pred_fallthru
      _
  $region6: #{decoder_forward.7} parent=0 // loop_footer
    %s16 = sadd.s32 1, %s12
  $region7: #{decoder_forward.7} parent=0 // loop_footer_branch
    %11 = sbr.rel target = $region3
  $region8: #{decoder_forward.7} parent=0 // loop_exit
    _

// kernel: decoder_forward.10
$region0: #{decoder_forward.10}
  #allocation0 [shape = 'u32[]', space=smem, size = 0x4, offset = 0x4, fixed_abs, tag = 'smem constant byte address 0x4 - core index']
  #allocation1 [shape = 'u32[72,128]{1,0:T(1,128)}', space=vmem, size = 0x9000, scoped, tag = 'internal scratch']
  %s0 = inlined_call_operand.vmem [shape: bf16[32,512], index: 0, kind: input, shape index: {}]
  %s1 = inlined_call_operand.vmem [shape: f32[1,512], index: 1, kind: input, shape index: {}]
  %s2 = inlined_call_operand.vmem [shape: f32[1,512], index: 2, kind: input, shape index: {}]
  %s3 = inlined_call_operand.vmem [shape: bf16[32,512], index: 3, kind: output, shape index: {}]
  %s4 = sld [smem:[#allocation0]]
  $region22: #{decoder_forward.10} parent=0
    _
  %s6 = ssub.s32 1, %s4
  %s7 = scalar_select 0, %s6, %s4
  // Predicated region
  $region2: #{decoder_forward.10} parent=0 // pred_check
    _
  $region3: #{decoder_forward.10} parent=0 // pred_check_branch
    %9 = sbr.rel (0) target = $region5
  $region4: #{decoder_forward.10} parent=0 // pred_region
    _
  $region5: #{decoder_forward.10} parent=0 // pred_fallthru
    _
  // Predicated region
  $region6: #{decoder_forward.10} parent=0 // pred_check
    _
  $region7: #{decoder_forward.10} parent=0 // pred_check_branch
    %11 = sbr.rel (0) target = $region9
  $region8: #{decoder_forward.10} parent=0 // pred_region
    _
  $region9: #{decoder_forward.10} parent=0 // pred_fallthru
    _
  // Predicated region
  $region10: #{decoder_forward.10} parent=0 // pred_check
    _
  $region11: #{decoder_forward.10} parent=0 // pred_check_branch
    %13 = sbr.rel (0) target = $region13
  $region12: #{decoder_forward.10} parent=0 // pred_region
    _
  $region13: #{decoder_forward.10} parent=0 // pred_fallthru
    _
  %v14 = vld [vmem:[%s0] sm:$0xff]
  %v15 = vld [vmem:[%s0 + $0x8] sm:$0xff]
  %v16 = vld [vmem:[%s0 + $0x10] sm:$0xff]
  %v17 = vld [vmem:[%s0 + $0x18] sm:$0xff]
  %v18 = vld [vmem:[%s0 + $0x20] sm:$0xff]
  %v19 = vld [vmem:[%s0 + $0x28] sm:$0xff]
  %v20 = vld [vmem:[%s0 + $0x30] sm:$0xff]
  %v21 = vld [vmem:[%s0 + $0x38] sm:$0xff]
  %v22 = vunpack.c.l.bf16 %v14
  %v23 = vunpack.c.h.bf16 %v14
  %v24 = vunpack.c.l.bf16 %v15
  %v25 = vunpack.c.h.bf16 %v15
  %v26 = vunpack.c.l.bf16 %v16
  %v27 = vunpack.c.h.bf16 %v16
  %v28 = vunpack.c.l.bf16 %v17
  %v29 = vunpack.c.h.bf16 %v17
  %v30 = vunpack.c.l.bf16 %v18
  %v31 = vunpack.c.h.bf16 %v18
  %v32 = vunpack.c.l.bf16 %v19
  %v33 = vunpack.c.h.bf16 %v19
  %v34 = vunpack.c.l.bf16 %v20
  %v35 = vunpack.c.h.bf16 %v20
  %v36 = vunpack.c.l.bf16 %v21
  %v37 = vunpack.c.h.bf16 %v21
  %v38 = vld [vmem:[%s1] sm:$0xf]
  %v40 = vperm.slane %v38, 0
  %v41 = vperm.slane %v38, 1
  %v42 = vperm.slane %v38, 2
  %v43 = vperm.slane %v38, 3
  %v48 = vmul.f32 %v22, %v40
  %v49 = vmul.f32 %v23, %v41
  %v50 = vmul.f32 %v24, %v42
  %v51 = vmul.f32 %v25, %v43
  %v52 = vmul.f32 %v26, %v40
  %v53 = vmul.f32 %v27, %v41
  %v54 = vmul.f32 %v28, %v42
  %v55 = vmul.f32 %v29, %v43
  %v56 = vmul.f32 %v30, %v40
  %v57 = vmul.f32 %v31, %v41
  %v58 = vmul.f32 %v32, %v42
  %v59 = vmul.f32 %v33, %v43
  %v60 = vmul.f32 %v34, %v40
  %v61 = vmul.f32 %v35, %v41
  %v62 = vmul.f32 %v36, %v42
  %v63 = vmul.f32 %v37, %v43
  %v64 = vld [vmem:[%s2] sm:$0xf]
  %v66 = vperm.slane %v64, 0
  %v67 = vperm.slane %v64, 1
  %v68 = vperm.slane %v64, 2
  %v69 = vperm.slane %v64, 3
  %v74 = vadd.f32 %v48, %v66
  %v75 = vadd.f32 %v49, %v67
  %v76 = vadd.f32 %v50, %v68
  %v77 = vadd.f32 %v51, %v69
  %v78 = vadd.f32 %v52, %v66
  %v79 = vadd.f32 %v53, %v67
  %v80 = vadd.f32 %v54, %v68
  %v81 = vadd.f32 %v55, %v69
  %v82 = vadd.f32 %v56, %v66
  %v83 = vadd.f32 %v57, %v67
  %v84 = vadd.f32 %v58, %v68
  %v85 = vadd.f32 %v59, %v69
  %v86 = vadd.f32 %v60, %v66
  %v87 = vadd.f32 %v61, %v67
  %v88 = vadd.f32 %v62, %v68
  %v89 = vadd.f32 %v63, %v69
  %vm90 = vcmp.gt.f32.partialorder %v74, 0.0
  %vm91 = vcmp.gt.f32.partialorder %v75, 0.0
  %vm92 = vcmp.gt.f32.partialorder %v76, 0.0
  %vm93 = vcmp.gt.f32.partialorder %v77, 0.0
  %vm94 = vcmp.gt.f32.partialorder %v78, 0.0
  %vm95 = vcmp.gt.f32.partialorder %v79, 0.0
  %vm96 = vcmp.gt.f32.partialorder %v80, 0.0
  %vm97 = vcmp.gt.f32.partialorder %v81, 0.0
  %vm98 = vcmp.gt.f32.partialorder %v82, 0.0
  %vm99 = vcmp.gt.f32.partialorder %v83, 0.0
  %vm100 = vcmp.gt.f32.partialorder %v84, 0.0
  %vm101 = vcmp.gt.f32.partialorder %v85, 0.0
  %vm102 = vcmp.gt.f32.partialorder %v86, 0.0
  %vm103 = vcmp.gt.f32.partialorder %v87, 0.0
  %vm104 = vcmp.gt.f32.partialorder %v88, 0.0
  %vm105 = vcmp.gt.f32.partialorder %v89, 0.0
  %v106 = vmul.f32 %v74, 0.01
  %v107 = vmul.f32 %v75, 0.01
  %v108 = vmul.f32 %v76, 0.01
  %v109 = vmul.f32 %v77, 0.01
  %v110 = vmul.f32 %v78, 0.01
  %v111 = vmul.f32 %v79, 0.01
  %v112 = vmul.f32 %v80, 0.01
  %v113 = vmul.f32 %v81, 0.01
  %v114 = vmul.f32 %v82, 0.01
  %v115 = vmul.f32 %v83, 0.01
  %v116 = vmul.f32 %v84, 0.01
  %v117 = vmul.f32 %v85, 0.01
  %v118 = vmul.f32 %v86, 0.01
  %v119 = vmul.f32 %v87, 0.01
  %v120 = vmul.f32 %v88, 0.01
  %v121 = vmul.f32 %v89, 0.01
  %v122 = vsel %vm90, %v74, %v106
  %v123 = vsel %vm91, %v75, %v107
  %v124 = vsel %vm92, %v76, %v108
  %v125 = vsel %vm93, %v77, %v109
  %v126 = vsel %vm94, %v78, %v110
  %v127 = vsel %vm95, %v79, %v111
  %v128 = vsel %vm96, %v80, %v112
  %v129 = vsel %vm97, %v81, %v113
  %v130 = vsel %vm98, %v82, %v114
  %v131 = vsel %vm99, %v83, %v115
  %v132 = vsel %vm100, %v84, %v116
  %v133 = vsel %vm101, %v85, %v117
  %v134 = vsel %vm102, %v86, %v118
  %v135 = vsel %vm103, %v87, %v119
  %v136 = vsel %vm104, %v88, %v120
  %v137 = vsel %vm105, %v89, %v121
  %v138 = vpack.c.bf16 %v123, %v122
  %v139 = vpack.c.bf16 %v125, %v124
  %v140 = vpack.c.bf16 %v127, %v126
  %v141 = vpack.c.bf16 %v129, %v128
  %v142 = vpack.c.bf16 %v131, %v130
  %v143 = vpack.c.bf16 %v133, %v132
  %v144 = vpack.c.bf16 %v135, %v134
  %v145 = vpack.c.bf16 %v137, %v136
  %146 = vst [vmem:[%s3] sm:$0xff] %v138
  %147 = vst [vmem:[%s3 + $0x8] sm:$0xff] %v139
  %148 = vst [vmem:[%s3 + $0x10] sm:$0xff] %v140
  %149 = vst [vmem:[%s3 + $0x18] sm:$0xff] %v141
  %150 = vst [vmem:[%s3 + $0x20] sm:$0xff] %v142
  %151 = vst [vmem:[%s3 + $0x28] sm:$0xff] %v143
  %152 = vst [vmem:[%s3 + $0x30] sm:$0xff] %v144
  %153 = vst [vmem:[%s3 + $0x38] sm:$0xff] %v145
  // Predicated region
  $region14: #{decoder_forward.10} parent=0 // pred_check
    _
  $region15: #{decoder_forward.10} parent=0 // pred_check_branch
    %155 = sbr.rel (0) target = $region17
  $region16: #{decoder_forward.10} parent=0 // pred_region
    _
  $region17: #{decoder_forward.10} parent=0 // pred_fallthru
    _
  // Predicated region
  $region18: #{decoder_forward.10} parent=0 // pred_check
    _
  $region19: #{decoder_forward.10} parent=0 // pred_check_branch
    %157 = sbr.rel (0) target = $region21
  $region20: #{decoder_forward.10} parent=0 // pred_region
    _
  $region21: #{decoder_forward.10} parent=0 // pred_fallthru
    _

// kernel: decoder_forward.9
$region0: #{decoder_forward.9}
  #allocation0 [shape = 'u32[]', space=smem, size = 0x4, offset = 0x4, fixed_abs, tag = 'smem constant byte address 0x4 - core index']
  #allocation1 [shape = 'u32[72,128]{1,0:T(1,128)}', space=vmem, size = 0x9000, scoped, tag = 'internal scratch']
  %s0 = inlined_call_operand.vmem [shape: bf16[2,8,8,32], index: 0, kind: input, shape index: {}]
  %s1 = inlined_call_operand.vmem [shape: bf16[2,1,8,32], index: 1, kind: input, shape index: {}]
  %s2 = inlined_call_operand.vmem [shape: bf16[128,128], index: 2, kind: input, shape index: {}]
  %s3 = inlined_call_operand.vmem [shape: f32[1,128], index: 3, kind: input, shape index: {}]
  %s4 = inlined_call_operand.vmem [shape: bf16[2,8,2,8,64], index: 4, kind: output, shape index: {0}]
  %s5 = inlined_call_operand.vmem [shape: f32[2,1,8,128], index: 5, kind: output, shape index: {1}]
  %6 = xla_tuple %s4, %s5
  %s7 = sld [smem:[#allocation0]]
  $region57: #{decoder_forward.9} parent=0
    _
  %s9 = ssub.s32 1, %s7
  %s10 = scalar_select 0, %s9, %s7
  loop: start=0, step=1, limit=4
  $region2: #{decoder_forward.9} parent=0 // loop_pre_header
    _
  $region3: #{decoder_forward.9} parent=0 // loop_header
    %s12 = sphi 0, %s16
    %p13 = scmp.ge.s32.totalorder %s12, 4
    %s19 = sphi 0, %s31
    %s20 = sphi 0, %s27
    %s21 = sphi 0, %s19
    %s22 = sphi 0, %s20
    %s23 = sphi 0, %s21
    %s24 = sphi 0, %s22
    %s36 = sphi 0, %s38
    %s39 = sphi 0, %s36
    %s40 = sphi 0, %s39
    %s56 = sphi 0, %s40
    %s64 = sphi 0, %s66
    %s67 = sphi 0, %s64
    %s68 = sphi 0, %s67
    %s84 = sphi 0, %s68
    %s88 = sphi 0, %s88
    %s90 = sphi 0, %s88
    %s91 = sphi 0, %s90
    %s105 = sphi 0, %s91
    %s109 = sphi 0, %s109
    %s111 = sphi 0, %s109
    %s112 = sphi 0, %s111
    %s126 = sphi 0, %s112
    %s134 = sphi 0, %s136
    %s137 = sphi 0, %s134
    %s138 = sphi 0, %s137
    %s154 = sphi 0, %s138
    %s162 = sphi 0, %s164
    %s165 = sphi 0, %s162
    %s166 = sphi 0, %s165
    %s182 = sphi 0, %s166
  $region4: #{decoder_forward.9} parent=0 // loop_header_branch
    %15 = sbr.rel (%p13) target = $region8
  $region5: #{decoder_forward.9} parent=0 // loop_body
    %s17 = ssub.s32 %s12, 1
    %s18 = ssub.s32 %s12, 2
    %s25 = sadd.s32 1, %s20
    %p26 = scmp.ge.s32.totalorder %s25, 1
    %s27 = scalar_select %p26, 0, %s25
    %s28 = sadd.s32 1, %s19
    %s29 = scalar_select %p26, %s28, %s19
    %p30 = scmp.ge.s32.totalorder %s29, 2
    %s31 = scalar_select %p30, 0, %s29
    %s32 = ssub.s32 %s19, %s31
    %s33 = ssub.s32 %s20, %s27
    %s34 = sor.u32 %s32, %s33
    %p35 = scmp.eq.s32.totalorder %s34, 0
    %s37 = sadd.s32 %s36, 1
    %s38 = scalar_select %p35, %s36, %s37
    %p41 = pneg %p35
    %p42 = scmp.eq.s32.totalorder %s12, 1
    %p43 = por %p41, %p42
    %p44 = scmp.ne.s32.totalorder %s36, %s39
    %p45 = scmp.eq.s32.totalorder %s12, 0
    %p46 = por %p44, %p45
    %p47 = scmp.ne.s32.totalorder %s36, %s39
    %p48 = scmp.eq.s32.totalorder %s17, 1
    %p49 = por %p47, %p48
    %p50 = scmp.ne.s32.totalorder %s39, %s40
    %p51 = scmp.eq.s32.totalorder %s17, 0
    %p52 = por %p50, %p51
    %p53 = scmp.ne.s32.totalorder %s39, %s40
    %p54 = scmp.eq.s32.totalorder %s18, 1
    %p55 = por %p53, %p54
    %p57 = scmp.ne.s32.totalorder %s40, %s56
    %p58 = scmp.eq.s32.totalorder %s18, 0
    %p59 = por %p57, %p58
    %s60 = ssub.s32 %s19, %s31
    %s61 = ssub.s32 %s20, %s27
    %s62 = sor.u32 %s60, %s61
    %p63 = scmp.eq.s32.totalorder %s62, 0
    %s65 = sadd.s32 %s64, 1
    %s66 = scalar_select %p63, %s64, %s65
    %p69 = pneg %p63
    %p70 = scmp.eq.s32.totalorder %s12, 1
    %p71 = por %p69, %p70
    %p72 = scmp.ne.s32.totalorder %s64, %s67
    %p73 = scmp.eq.s32.totalorder %s12, 0
    %p74 = por %p72, %p73
    %p75 = scmp.ne.s32.totalorder %s64, %s67
    %p76 = scmp.eq.s32.totalorder %s17, 1
    %p77 = por %p75, %p76
    %p78 = scmp.ne.s32.totalorder %s67, %s68
    %p79 = scmp.eq.s32.totalorder %s17, 0
    %p80 = por %p78, %p79
    %p81 = scmp.ne.s32.totalorder %s67, %s68
    %p82 = scmp.eq.s32.totalorder %s18, 1
    %p83 = por %p81, %p82
    %p85 = scmp.ne.s32.totalorder %s68, %s84
    %p86 = scmp.eq.s32.totalorder %s18, 0
    %p87 = por %p85, %p86
    %s89 = sadd.s32 %s88, 1
    %p92 = scmp.eq.s32.totalorder %s12, 1
    %p93 = scmp.ne.s32.totalorder %s88, %s90
    %p94 = scmp.eq.s32.totalorder %s12, 0
    %p95 = por %p93, %p94
    %p96 = scmp.ne.s32.totalorder %s88, %s90
    %p97 = scmp.eq.s32.totalorder %s17, 1
    %p98 = por %p96, %p97
    %p99 = scmp.ne.s32.totalorder %s90, %s91
    %p100 = scmp.eq.s32.totalorder %s17, 0
    %p101 = por %p99, %p100
    %p102 = scmp.ne.s32.totalorder %s90, %s91
    %p103 = scmp.eq.s32.totalorder %s18, 1
    %p104 = por %p102, %p103
    %p106 = scmp.ne.s32.totalorder %s91, %s105
    %p107 = scmp.eq.s32.totalorder %s18, 0
    %p108 = por %p106, %p107
    %s110 = sadd.s32 %s109, 1
    %p113 = scmp.eq.s32.totalorder %s12, 1
    %p114 = scmp.ne.s32.totalorder %s109, %s111
    %p115 = scmp.eq.s32.totalorder %s12, 0
    %p116 = por %p114, %p115
    %p117 = scmp.ne.s32.totalorder %s109, %s111
    %p118 = scmp.eq.s32.totalorder %s17, 1
    %p119 = por %p117, %p118
    %p120 = scmp.ne.s32.totalorder %s111, %s112
    %p121 = scmp.eq.s32.totalorder %s17, 0
    %p122 = por %p120, %p121
    %p123 = scmp.ne.s32.totalorder %s111, %s112
    %p124 = scmp.eq.s32.totalorder %s18, 1
    %p125 = por %p123, %p124
    %p127 = scmp.ne.s32.totalorder %s112, %s126
    %p128 = scmp.eq.s32.totalorder %s18, 0
    %p129 = por %p127, %p128
    %s130 = ssub.s32 %s19, %s31
    %s131 = ssub.s32 %s20, %s27
    %s132 = sor.u32 %s130, %s131
    %p133 = scmp.eq.s32.totalorder %s132, 0
    %s135 = sadd.s32 %s134, 1
    %s136 = scalar_select %p133, %s134, %s135
    %p139 = pneg %p133
    %p140 = scmp.eq.s32.totalorder %s12, 1
    %p141 = por %p139, %p140
    %p142 = scmp.ne.s32.totalorder %s134, %s137
    %p143 = scmp.eq.s32.totalorder %s12, 0
    %p144 = por %p142, %p143
    %p145 = scmp.ne.s32.totalorder %s134, %s137
    %p146 = scmp.eq.s32.totalorder %s17, 1
    %p147 = por %p145, %p146
    %p148 = scmp.ne.s32.totalorder %s137, %s138
    %p149 = scmp.eq.s32.totalorder %s17, 0
    %p150 = por %p148, %p149
    %p151 = scmp.ne.s32.totalorder %s137, %s138
    %p152 = scmp.eq.s32.totalorder %s18, 1
    %p153 = por %p151, %p152
    %p155 = scmp.ne.s32.totalorder %s138, %s154
    %p156 = scmp.eq.s32.totalorder %s18, 0
    %p157 = por %p155, %p156
    %s158 = ssub.s32 %s19, %s31
    %s159 = ssub.s32 %s20, %s27
    %s160 = sor.u32 %s158, %s159
    %p161 = scmp.eq.s32.totalorder %s160, 0
    %s163 = sadd.s32 %s162, 1
    %s164 = scalar_select %p161, %s162, %s163
    %p167 = pneg %p161
    %p168 = scmp.eq.s32.totalorder %s12, 1
    %p169 = por %p167, %p168
    %p170 = scmp.ne.s32.totalorder %s162, %s165
    %p171 = scmp.eq.s32.totalorder %s12, 0
    %p172 = por %p170, %p171
    %p173 = scmp.ne.s32.totalorder %s162, %s165
    %p174 = scmp.eq.s32.totalorder %s17, 1
    %p175 = por %p173, %p174
    %p176 = scmp.ne.s32.totalorder %s165, %s166
    %p177 = scmp.eq.s32.totalorder %s17, 0
    %p178 = por %p176, %p177
    %p179 = scmp.ne.s32.totalorder %s165, %s166
    %p180 = scmp.eq.s32.totalorder %s18, 1
    %p181 = por %p179, %p180
    %p183 = scmp.ne.s32.totalorder %s166, %s182
    %p184 = scmp.eq.s32.totalorder %s18, 0
    %p185 = por %p183, %p184
    %p186 = scmp.le.s32.totalorder 1, %s12
    %p187 = scmp.lt.s32.totalorder %s12, 3
    %p188 = pnand %p186, %p187
    %p189 = pneg %p188
    // Predicated region
    $region9: #{decoder_forward.9} parent=5 // pred_check
      _
    $region10: #{decoder_forward.9} parent=5 // pred_check_branch
      %191 = sbr.rel (%p188) target = $region12
    $region11: #{decoder_forward.9} parent=5 // pred_region
      %s192 = ssub.s32 %s12, 1
      // Predicated region
      $region13: #{decoder_forward.9} parent=11 // pred_check
        %p193 = pneg %p101
      $region14: #{decoder_forward.9} parent=11 // pred_check_branch
        %195 = sbr.rel (%p193) target = $region16
      $region15: #{decoder_forward.9} parent=11 // pred_region
        _
      $region16: #{decoder_forward.9} parent=11 // pred_fallthru
        _
      // Predicated region
      $region17: #{decoder_forward.9} parent=11 // pred_check
        %p196 = pneg %p122
      $region18: #{decoder_forward.9} parent=11 // pred_check_branch
        %198 = sbr.rel (%p196) target = $region20
      $region19: #{decoder_forward.9} parent=11 // pred_region
        _
      $region20: #{decoder_forward.9} parent=11 // pred_fallthru
        _
    $region12: #{decoder_forward.9} parent=5 // pred_fallthru
      _
    %p199 = scmp.lt.s32.totalorder %s12, 2
    // Predicated region
    $region21: #{decoder_forward.9} parent=5 // pred_check
      %p200 = pneg %p199
    $region22: #{decoder_forward.9} parent=5 // pred_check_branch
      %202 = sbr.rel (%p200) target = $region24
    $region23: #{decoder_forward.9} parent=5 // pred_region
      // Predicated region
      $region25: #{decoder_forward.9} parent=23 // pred_check
        %p203 = pneg %p46
      $region26: #{decoder_forward.9} parent=23 // pred_check_branch
        %205 = sbr.rel (%p203) target = $region28
      $region27: #{decoder_forward.9} parent=23 // pred_region
        %s206 = smul.u32 8, %s20
        %p207 = scmp.lt.s32.totalorder %s19, 1
        %s208 = scalar_select %p207, %s19, 1
        %p209 = scmp.lt.s32.totalorder %s206, 7
        %s210 = scalar_select %p209, %s206, 7
        %s211 = smul.addr %s208, 8
        %s212 = sadd.s32 %s210, %s211
        %s213 = smul.addr %s212, 4
        %s214 = scalar_lea.vmem %s0, %s213
        %s215 = smul.u32 8, %s20
      $region28: #{decoder_forward.9} parent=23 // pred_fallthru
        _
      // Predicated region
      $region29: #{decoder_forward.9} parent=23 // pred_check
        %p216 = pneg %p74
      $region30: #{decoder_forward.9} parent=23 // pred_check_branch
        %218 = sbr.rel (%p216) target = $region32
      $region31: #{decoder_forward.9} parent=23 // pred_region
        %p219 = scmp.lt.s32.totalorder %s19, 1
        %s220 = scalar_select %p219, %s19, 1
        %p221 = scmp.lt.s32.totalorder %s20, 0
        %s222 = scalar_select %p221, %s20, 0
        %s223 = sadd.s32 %s222, %s220
        %s224 = smul.addr %s223, 4
        %s225 = scalar_lea.vmem %s1, %s224
      $region32: #{decoder_forward.9} parent=23 // pred_fallthru
        _
    $region24: #{decoder_forward.9} parent=5 // pred_fallthru
      _
    %p226 = scmp.le.s32.totalorder 1, %s12
    %p227 = scmp.lt.s32.totalorder %s12, 3
    %p228 = pnand %p226, %p227
    %p229 = pneg %p228
    // Predicated region
    $region33: #{decoder_forward.9} parent=5 // pred_check
      _
    $region34: #{decoder_forward.9} parent=5 // pred_check_branch
      %231 = sbr.rel (%p228) target = $region36
    $region35: #{decoder_forward.9} parent=5 // pred_region
      %s232 = ssub.s32 %s12, 1
      %s233 = smul.u32 8, %s22
      %p234 = scmp.lt.s32.totalorder %s21, 1
      %s235 = scalar_select %p234, %s21, 1
      %p236 = scmp.lt.s32.totalorder %s233, 7
      %s237 = scalar_select %p236, %s233, 7
      %s238 = smul.addr %s235, 8
      %s239 = sadd.s32 %s237, %s238
      %s240 = smul.addr %s239, 4
      %s241 = scalar_lea.vmem %s0, %s240
      %p242 = pneg %p52
      %p243 = pneg %p49
      %p244 = scmp.lt.s32.totalorder %s21, 1
      %s245 = scalar_select %p244, %s21, 1
      %p246 = scmp.lt.s32.totalorder %s22, 0
      %s247 = scalar_select %p246, %s22, 0
      %s248 = sadd.s32 %s247, %s245
      %s249 = smul.addr %s248, 4
      %s250 = scalar_lea.vmem %s1, %s249
      %p251 = pneg %p80
      %p252 = pneg %p77
      %p253 = pneg %p101
      %p254 = pneg %p98
      %p255 = pneg %p122
      %p256 = pneg %p119
      %p257 = pneg %p150
      %p258 = pneg %p147
      %s259 = smul.u32 8, %s22
      %p260 = scmp.lt.s32.totalorder %s21, 1
      %s261 = scalar_select %p260, %s21, 1
      %p262 = scmp.lt.s32.totalorder %s259, 7
      %s263 = scalar_select %p262, %s259, 7
      %s264 = smul.addr %s263, 2
      %s265 = smul.addr %s261, 16
      %s266 = sadd.s32 %s264, %s265
      %s267 = smul.addr %s266, 4
      %s268 = scalar_lea.vmem %s4, %s267
      %p269 = pneg %p178
      %p270 = pneg %p175
      %p271 = scmp.lt.s32.totalorder %s21, 1
      %s272 = scalar_select %p271, %s21, 1
      %p273 = scmp.lt.s32.totalorder %s22, 0
      %s274 = scalar_select %p273, %s22, 0
      %s275 = sadd.s32 %s274, %s272
      %s276 = smul.addr %s275, 8
      %s277 = scalar_lea.vmem %s5, %s276
      %s278 = smul.u32 8, %s22
      %p279 = scmp.lt.s32.totalorder %s21, 1
      %s280 = scalar_select %p279, %s21, 1
      %p281 = scmp.lt.s32.totalorder %s278, 7
      %s282 = scalar_select %p281, %s278, 7
      %s283 = smul.addr %s280, 8
      %s284 = sadd.s32 %s282, %s283
      %s285 = smul.addr %s284, 4
      %s286 = scalar_lea.vmem %s0, %s285
      %s287 = smul.u32 8, %s22
      %p288 = scmp.lt.s32.totalorder %s21, 1
      %s289 = scalar_select %p288, %s21, 1
      %p290 = scmp.lt.s32.totalorder %s22, 0
      %s291 = scalar_select %p290, %s22, 0
      %s292 = sadd.s32 %s291, %s289
      %s293 = smul.addr %s292, 4
      %s294 = scalar_lea.vmem %s1, %s293
      %s295 = smul.u32 8, %s22
      %p296 = scmp.lt.s32.totalorder %s21, 1
      %s297 = scalar_select %p296, %s21, 1
      %p298 = scmp.lt.s32.totalorder %s295, 7
      %s299 = scalar_select %p298, %s295, 7
      %s300 = smul.addr %s299, 2
      %s301 = smul.addr %s297, 16
      %s302 = sadd.s32 %s300, %s301
      %s303 = smul.addr %s302, 4
      %s304 = scalar_lea.vmem %s4, %s303
      %s305 = smul.u32 8, %s22
      %p306 = scmp.lt.s32.totalorder %s21, 1
      %s307 = scalar_select %p306, %s21, 1
      %p308 = scmp.lt.s32.totalorder %s22, 0
      %s309 = scalar_select %p308, %s22, 0
      %s310 = sadd.s32 %s309, %s307
      %s311 = smul.addr %s310, 8
      %s312 = scalar_lea.vmem %s5, %s311
      %v314 = vld [vmem:[%s286] sm:$0xf]
      %v315 = vld [vmem:[%s286 + $0x4] sm:$0xf]
      %v316 = vld [vmem:[%s286 + $0x8] sm:$0xf]
      %v317 = vld [vmem:[%s286 + $0xc] sm:$0xf]
      %v318 = vld [vmem:[%s286 + $0x10] sm:$0xf]
      %v319 = vld [vmem:[%s286 + $0x14] sm:$0xf]
      %v320 = vld [vmem:[%s286 + $0x18] sm:$0xf]
      %v321 = vld [vmem:[%s286 + $0x1c] sm:$0xf]
      %v322 = vld [vmem:[%s294] sm:$0xf]
      %vm323 = vcmask 1043456
      %v326 = vsel %vm323, %v314, 0
      %v328 = vsel %vm323, %v315, 0
      %v330 = vsel %vm323, %v316, 0
      %v332 = vsel %vm323, %v317, 0
      %v334 = vsel %vm323, %v318, 0
      %v336 = vsel %vm323, %v319, 0
      %v338 = vsel %vm323, %v320, 0
      %v340 = vsel %vm323, %v321, 0
      %v342 = vsel %vm323, %v322, 0
      %v343 = vld [vmem:[%s3] sm:$0x1]
      %v345 = vperm.slane %v343, 0
      %v347 = vadd.f32 %v345, 0.0
      %v348 = vld [vmem:[%s2] sm:$0xf]
      %v349 = vld [vmem:[%s2 + $0x4] sm:$0xf]
      %v350 = vld [vmem:[%s2 + $0x8] sm:$0xf]
      %v351 = vld [vmem:[%s2 + $0xc] sm:$0xf]
      %v360 = vunpack.c.l.b16 %v326
      %v361 = vunpack.c.l.b16 %v328
      %v362 = vunpack.c.l.b16 %v330
      %v363 = vunpack.c.l.b16 %v332
      %v364 = vunpack.c.l.b16 %v334
      %v365 = vunpack.c.l.b16 %v336
      %v366 = vunpack.c.l.b16 %v338
      %v367 = vunpack.c.l.b16 %v340
      %v368 = vpack.c.b16 %v361, %v360
      %v369 = vpack.c.b16 %v363, %v362
      %v370 = vpack.c.b16 %v365, %v364
      %v371 = vpack.c.b16 %v367, %v366
      %v376 = vunpack.c.l.b16 %v348
      %v377 = vunpack.c.l.b16 %v349
      %v378 = vunpack.c.l.b16 %v350
      %v379 = vunpack.c.l.b16 %v351
      %v380 = vpack.c.b16 %v377, %v376
      %v381 = vpack.c.b16 %v379, %v378
      %vm384 = vcmask 261120
      %v386 = vsel %vm384, %v368, 0
      %v389 = vsel %vm384, %v369, 0
      %v392 = vsel %vm384, %v370, 0
      %v395 = vsel %vm384, %v371, 0
      %397 = vmatpush.bf16.msra.mxu0 0
      %398 = vmatpush.bf16.msra.mxu0 0
      %399 = vmatpush.bf16.msra.mxu0 0
      %400 = vmatpush.bf16.msra.mxu0 0
      %401 = vmatpush.bf16.msra.mxu0 0
      %402 = vmatpush.bf16.msra.mxu0 0
      %403 = vmatpush.bf16.msra.mxu0 %v381
      %404 = vmatpush.bf16.msra.mxu0 %v380
      %405 = vmatmul.bf16.gmra.mxu0 %v386
      %v406 = vpop.f32.mrf.mxu0
      %v407 = vadd.f32 0.0, %v406
      %v408 = vpop.f32.mrf.mxu0
      %v409 = vadd.f32 0.0, %v408
      %410 = vmatmul.bf16.gmra.mxu0 %v389
      %v411 = vpop.f32.mrf.mxu0
      %v412 = vadd.f32 0.0, %v411
      %v413 = vpop.f32.mrf.mxu0
      %v414 = vadd.f32 0.0, %v413
      %415 = vmatmul.bf16.gmra.mxu0 %v392
      %v416 = vpop.f32.mrf.mxu0
      %v417 = vadd.f32 0.0, %v416
      %v418 = vpop.f32.mrf.mxu0
      %v419 = vadd.f32 0.0, %v418
      %420 = vmatmul.bf16.gmra.mxu0 %v395
      %v421 = vpop.f32.mrf.mxu0
      %v422 = vadd.f32 0.0, %v421
      %v423 = vpop.f32.mrf.mxu0
      %v424 = vadd.f32 0.0, %v423
      %425 = vdwg.mxu0
      %v426 = vadd.f32 %v347, %v407
      %v427 = vadd.f32 %v347, %v409
      %v428 = vadd.f32 %v347, %v412
      %v429 = vadd.f32 %v347, %v414
      %v430 = vadd.f32 %v347, %v417
      %v431 = vadd.f32 %v347, %v419
      %v432 = vadd.f32 %v347, %v422
      %v433 = vadd.f32 %v347, %v424
      %v434 = vunpack.c.h.b16 %v326
      %v435 = vunpack.c.h.b16 %v328
      %v436 = vunpack.c.h.b16 %v330
      %v437 = vunpack.c.h.b16 %v332
      %v438 = vunpack.c.h.b16 %v334
      %v439 = vunpack.c.h.b16 %v336
      %v440 = vunpack.c.h.b16 %v338
      %v441 = vunpack.c.h.b16 %v340
      %v442 = vpack.c.b16 %v360, %v360
      %v443 = vpack.c.b16 %v434, %v434
      %v444 = vpack.c.b16 %v361, %v361
      %v445 = vpack.c.b16 %v435, %v435
      %v446 = vpack.c.b16 %v362, %v362
      %v447 = vpack.c.b16 %v436, %v436
      %v448 = vpack.c.b16 %v363, %v363
      %v449 = vpack.c.b16 %v437, %v437
      %v450 = vpack.c.b16 %v364, %v364
      %v451 = vpack.c.b16 %v438, %v438
      %v452 = vpack.c.b16 %v365, %v365
      %v453 = vpack.c.b16 %v439, %v439
      %v454 = vpack.c.b16 %v366, %v366
      %v455 = vpack.c.b16 %v440, %v440
      %v456 = vpack.c.b16 %v367, %v367
      %v457 = vpack.c.b16 %v441, %v441
      %vm458 = vsmask.f32 3328
      %vm459 = vsmask.f32 7440
      %vm460 = vmor %vm458, %vm459
      %v462 = vshrl.u32 %v442, 16
      %v464 = vrot.slane %v462, 4
      %v465 = vshll.u32 %v442, 16
      %v467 = vrot.slane %v465, 5
      %v468 = vor.u32 %v464, %v467
      %v469 = vrot.slane %v468, 4
      %v471 = vshll.u32 %v443, 16
      %v473 = vrot.slane %v471, 5
      %v474 = vsel %vm460, %v469, %v473
      %v476 = vshrl.u32 %v444, 16
      %v478 = vrot.slane %v476, 4
      %v479 = vshll.u32 %v444, 16
      %v481 = vrot.slane %v479, 5
      %v482 = vor.u32 %v478, %v481
      %v483 = vrot.slane %v482, 4
      %v485 = vshll.u32 %v445, 16
      %v487 = vrot.slane %v485, 5
      %v488 = vsel %vm460, %v483, %v487
      %v490 = vshrl.u32 %v446, 16
      %v492 = vrot.slane %v490, 4
      %v493 = vshll.u32 %v446, 16
      %v495 = vrot.slane %v493, 5
      %v496 = vor.u32 %v492, %v495
      %v497 = vrot.slane %v496, 4
      %v499 = vshll.u32 %v447, 16
      %v501 = vrot.slane %v499, 5
      %v502 = vsel %vm460, %v497, %v501
      %v504 = vshrl.u32 %v448, 16
      %v506 = vrot.slane %v504, 4
      %v507 = vshll.u32 %v448, 16
      %v509 = vrot.slane %v507, 5
      %v510 = vor.u32 %v506, %v509
      %v511 = vrot.slane %v510, 4
      %v513 = vshll.u32 %v449, 16
      %v515 = vrot.slane %v513, 5
      %v516 = vsel %vm460, %v511, %v515
      %v518 = vshrl.u32 %v450, 16
      %v520 = vrot.slane %v518, 4
      %v521 = vshll.u32 %v450, 16
      %v523 = vrot.slane %v521, 5
      %v524 = vor.u32 %v520, %v523
      %v525 = vrot.slane %v524, 4
      %v527 = vshll.u32 %v451, 16
      %v529 = vrot.slane %v527, 5
      %v530 = vsel %vm460, %v525, %v529
      %v532 = vshrl.u32 %v452, 16
      %v534 = vrot.slane %v532, 4
      %v535 = vshll.u32 %v452, 16
      %v537 = vrot.slane %v535, 5
      %v538 = vor.u32 %v534, %v537
      %v539 = vrot.slane %v538, 4
      %v541 = vshll.u32 %v453, 16
      %v543 = vrot.slane %v541, 5
      %v544 = vsel %vm460, %v539, %v543
      %v546 = vshrl.u32 %v454, 16
      %v548 = vrot.slane %v546, 4
      %v549 = vshll.u32 %v454, 16
      %v551 = vrot.slane %v549, 5
      %v552 = vor.u32 %v548, %v551
      %v553 = vrot.slane %v552, 4
      %v555 = vshll.u32 %v455, 16
      %v557 = vrot.slane %v555, 5
      %v558 = vsel %vm460, %v553, %v557
      %v560 = vshrl.u32 %v456, 16
      %v562 = vrot.slane %v560, 4
      %v563 = vshll.u32 %v456, 16
      %v565 = vrot.slane %v563, 5
      %v566 = vor.u32 %v562, %v565
      %v567 = vrot.slane %v566, 4
      %v569 = vshll.u32 %v457, 16
      %v571 = vrot.slane %v569, 5
      %v572 = vsel %vm460, %v567, %v571
      %v573 = vld [vmem:[%s2 + $0x10] sm:$0xf]
      %v574 = vld [vmem:[%s2 + $0x14] sm:$0xf]
      %v575 = vld [vmem:[%s2 + $0x18] sm:$0xf]
      %v576 = vld [vmem:[%s2 + $0x1c] sm:$0xf]
      %v577 = vunpack.c.l.b16 %v474
      %v578 = vunpack.c.l.b16 %v488
      %v579 = vunpack.c.l.b16 %v502
      %v580 = vunpack.c.l.b16 %v516
      %v581 = vunpack.c.l.b16 %v530
      %v582 = vunpack.c.l.b16 %v544
      %v583 = vunpack.c.l.b16 %v558
      %v584 = vunpack.c.l.b16 %v572
      %v585 = vpack.c.b16 %v578, %v577
      %v586 = vpack.c.b16 %v580, %v579
      %v587 = vpack.c.b16 %v582, %v581
      %v588 = vpack.c.b16 %v584, %v583
      %v593 = vunpack.c.l.b16 %v573
      %v594 = vunpack.c.l.b16 %v574
      %v595 = vunpack.c.l.b16 %v575
      %v596 = vunpack.c.l.b16 %v576
      %v597 = vpack.c.b16 %v594, %v593
      %v598 = vpack.c.b16 %v596, %v595
      %v602 = vsel %vm384, %v585, 0
      %v605 = vsel %vm384, %v586, 0
      %v608 = vsel %vm384, %v587, 0
      %v611 = vsel %vm384, %v588, 0
      %613 = vmatpush.bf16.msra.mxu0 0
      %614 = vmatpush.bf16.msra.mxu0 0
      %615 = vmatpush.bf16.msra.mxu0 0
      %616 = vmatpush.bf16.msra.mxu0 0
      %617 = vmatpush.bf16.msra.mxu0 0
      %618 = vmatpush.bf16.msra.mxu0 0
      %619 = vmatpush.bf16.msra.mxu0 %v598
      %620 = vmatpush.bf16.msra.mxu0 %v597
      %621 = vmatmul.bf16.gmra.mxu0 %v602
      %v622 = vpop.f32.mrf.mxu0
      %v623 = vadd.f32 0.0, %v622
      %v624 = vpop.f32.mrf.mxu0
      %v625 = vadd.f32 0.0, %v624
      %626 = vmatmul.bf16.gmra.mxu0 %v605
      %v627 = vpop.f32.mrf.mxu0
      %v628 = vadd.f32 0.0, %v627
      %v629 = vpop.f32.mrf.mxu0
      %v630 = vadd.f32 0.0, %v629
      %631 = vmatmul.bf16.gmra.mxu0 %v608
      %v632 = vpop.f32.mrf.mxu0
      %v633 = vadd.f32 0.0, %v632
      %v634 = vpop.f32.mrf.mxu0
      %v635 = vadd.f32 0.0, %v634
      %636 = vmatmul.bf16.gmra.mxu0 %v611
      %v637 = vpop.f32.mrf.mxu0
      %v638 = vadd.f32 0.0, %v637
      %v639 = vpop.f32.mrf.mxu0
      %v640 = vadd.f32 0.0, %v639
      %641 = vdwg.mxu0
      %v642 = vadd.f32 %v426, %v623
      %v643 = vadd.f32 %v427, %v625
      %v644 = vadd.f32 %v428, %v628
      %v645 = vadd.f32 %v429, %v630
      %v646 = vadd.f32 %v430, %v633
      %v647 = vadd.f32 %v431, %v635
      %v648 = vadd.f32 %v432, %v638
      %v649 = vadd.f32 %v433, %v640
      %v650 = vld [vmem:[%s2 + $0x20] sm:$0xf]
      %v651 = vld [vmem:[%s2 + $0x24] sm:$0xf]
      %v652 = vld [vmem:[%s2 + $0x28] sm:$0xf]
      %v653 = vld [vmem:[%s2 + $0x2c] sm:$0xf]
      %v655 = vunpack.c.l.b16 %v342
      %v656 = vpack.c.b16 %v362, %v361
      %v657 = vpack.c.b16 %v364, %v363
      %v658 = vpack.c.b16 %v366, %v365
      %v659 = vpack.c.b16 %v655, %v367
      %v664 = vunpack.c.l.b16 %v650
      %v665 = vunpack.c.l.b16 %v651
      %v666 = vunpack.c.l.b16 %v652
      %v667 = vunpack.c.l.b16 %v653
      %v668 = vpack.c.b16 %v665, %v664
      %v669 = vpack.c.b16 %v667, %v666
      %v673 = vsel %vm384, %v656, 0
      %v676 = vsel %vm384, %v657, 0
      %v679 = vsel %vm384, %v658, 0
      %v682 = vsel %vm384, %v659, 0
      %684 = vmatpush.bf16.msra.mxu0 0
      %685 = vmatpush.bf16.msra.mxu0 0
      %686 = vmatpush.bf16.msra.mxu0 0
      %687 = vmatpush.bf16.msra.mxu0 0
      %688 = vmatpush.bf16.msra.mxu0 0
      %689 = vmatpush.bf16.msra.mxu0 0
      %690 = vmatpush.bf16.msra.mxu0 %v669
      %691 = vmatpush.bf16.msra.mxu0 %v668
      %692 = vmatmul.bf16.gmra.mxu0 %v673
      %v693 = vpop.f32.mrf.mxu0
      %v694 = vadd.f32 0.0, %v693
      %v695 = vpop.f32.mrf.mxu0
      %v696 = vadd.f32 0.0, %v695
      %697 = vmatmul.bf16.gmra.mxu0 %v676
      %v698 = vpop.f32.mrf.mxu0
      %v699 = vadd.f32 0.0, %v698
      %v700 = vpop.f32.mrf.mxu0
      %v701 = vadd.f32 0.0, %v700
      %702 = vmatmul.bf16.gmra.mxu0 %v679
      %v703 = vpop.f32.mrf.mxu0
      %v704 = vadd.f32 0.0, %v703
      %v705 = vpop.f32.mrf.mxu0
      %v706 = vadd.f32 0.0, %v705
      %707 = vmatmul.bf16.gmra.mxu0 %v682
      %v708 = vpop.f32.mrf.mxu0
      %v709 = vadd.f32 0.0, %v708
      %v710 = vpop.f32.mrf.mxu0
      %v711 = vadd.f32 0.0, %v710
      %712 = vdwg.mxu0
      %v713 = vadd.f32 %v642, %v694
      %v714 = vadd.f32 %v643, %v696
      %v715 = vadd.f32 %v644, %v699
      %v716 = vadd.f32 %v645, %v701
      %v717 = vadd.f32 %v646, %v704
      %v718 = vadd.f32 %v647, %v706
      %v719 = vadd.f32 %v648, %v709
      %v720 = vadd.f32 %v649, %v711
      %v721 = vunpack.c.h.b16 %v342
      %v722 = vpack.c.b16 %v655, %v655
      %v723 = vpack.c.b16 %v721, %v721
      %v725 = vshrl.u32 %v722, 16
      %v727 = vrot.slane %v725, 4
      %v728 = vshll.u32 %v722, 16
      %v730 = vrot.slane %v728, 5
      %v731 = vor.u32 %v727, %v730
      %v732 = vrot.slane %v731, 4
      %v734 = vshll.u32 %v723, 16
      %v736 = vrot.slane %v734, 5
      %v737 = vsel %vm460, %v732, %v736
      %v738 = vld [vmem:[%s2 + $0x30] sm:$0xf]
      %v739 = vld [vmem:[%s2 + $0x34] sm:$0xf]
      %v740 = vld [vmem:[%s2 + $0x38] sm:$0xf]
      %v741 = vld [vmem:[%s2 + $0x3c] sm:$0xf]
      %v742 = vunpack.c.l.b16 %v737
      %v743 = vpack.c.b16 %v579, %v578
      %v744 = vpack.c.b16 %v581, %v580
      %v745 = vpack.c.b16 %v583, %v582
      %v746 = vpack.c.b16 %v742, %v584
      %v751 = vunpack.c.l.b16 %v738
      %v752 = vunpack.c.l.b16 %v739
      %v753 = vunpack.c.l.b16 %v740
      %v754 = vunpack.c.l.b16 %v741
      %v755 = vpack.c.b16 %v752, %v751
      %v756 = vpack.c.b16 %v754, %v753
      %v760 = vsel %vm384, %v743, 0
      %v763 = vsel %vm384, %v744, 0
      %v766 = vsel %vm384, %v745, 0
      %v769 = vsel %vm384, %v746, 0
      %771 = vmatpush.bf16.msra.mxu0 0
      %772 = vmatpush.bf16.msra.mxu0 0
      %773 = vmatpush.bf16.msra.mxu0 0
      %774 = vmatpush.bf16.msra.mxu0 0
      %775 = vmatpush.bf16.msra.mxu0 0
      %776 = vmatpush.bf16.msra.mxu0 0
      %777 = vmatpush.bf16.msra.mxu0 %v756
      %778 = vmatpush.bf16.msra.mxu0 %v755
      %779 = vmatmul.bf16.gmra.mxu0 %v760
      %v780 = vpop.f32.mrf.mxu0
      %v781 = vadd.f32 0.0, %v780
      %v782 = vpop.f32.mrf.mxu0
      %v783 = vadd.f32 0.0, %v782
      %784 = vmatmul.bf16.gmra.mxu0 %v763
      %v785 = vpop.f32.mrf.mxu0
      %v786 = vadd.f32 0.0, %v785
      %v787 = vpop.f32.mrf.mxu0
      %v788 = vadd.f32 0.0, %v787
      %789 = vmatmul.bf16.gmra.mxu0 %v766
      %v790 = vpop.f32.mrf.mxu0
      %v791 = vadd.f32 0.0, %v790
      %v792 = vpop.f32.mrf.mxu0
      %v793 = vadd.f32 0.0, %v792
      %794 = vmatmul.bf16.gmra.mxu0 %v769
      %v795 = vpop.f32.mrf.mxu0
      %v796 = vadd.f32 0.0, %v795
      %v797 = vpop.f32.mrf.mxu0
      %v798 = vadd.f32 0.0, %v797
      %799 = vdwg.mxu0
      %v800 = vadd.f32 %v713, %v781
      %v801 = vadd.f32 %v714, %v783
      %v802 = vadd.f32 %v715, %v786
      %v803 = vadd.f32 %v716, %v788
      %v804 = vadd.f32 %v717, %v791
      %v805 = vadd.f32 %v718, %v793
      %v806 = vadd.f32 %v719, %v796
      %v807 = vadd.f32 %v720, %v798
      %v808 = vadd.f32 %v800, %v801
      %v809 = vadd.f32 %v808, %v802
      %v810 = vadd.f32 %v809, %v803
      %v811 = vadd.f32 %v810, %v804
      %v812 = vadd.f32 %v811, %v805
      %v813 = vadd.f32 %v812, %v806
      %v814 = vadd.f32 %v813, %v807
      %v815 = vrot.slane %v814, 4
      %v816 = vadd.f32 %v814, %v815
      %v817 = vrot.slane %v816, 2
      %v818 = vadd.f32 %v816, %v817
      %v819 = vrot.slane %v818, 1
      %v820 = vadd.f32 %v818, %v819
      %v821 = vmul.f32 %v800, %v800
      %v822 = vmul.f32 %v801, %v801
      %v823 = vmul.f32 %v802, %v802
      %v824 = vmul.f32 %v803, %v803
      %v825 = vmul.f32 %v804, %v804
      %v826 = vmul.f32 %v805, %v805
      %v827 = vmul.f32 %v806, %v806
      %v828 = vmul.f32 %v807, %v807
      %v829 = vadd.f32 %v821, %v822
      %v830 = vadd.f32 %v829, %v823
      %v831 = vadd.f32 %v830, %v824
      %v832 = vadd.f32 %v831, %v825
      %v833 = vadd.f32 %v832, %v826
      %v834 = vadd.f32 %v833, %v827
      %v835 = vadd.f32 %v834, %v828
      %v836 = vrot.slane %v835, 4
      %v837 = vadd.f32 %v835, %v836
      %v838 = vrot.slane %v837, 2
      %v839 = vadd.f32 %v837, %v838
      %v840 = vrot.slane %v839, 1
      %v841 = vadd.f32 %v839, %v840
      %v842 = vlaneseq
      %v843 = vshrl.u32 %v842, 7
      %vm844 = vcmp.eq.s32.totalorder %v843, 0
      %v845 = vsel %vm844, %v820, 0.0
      %vm846 = vcmp.eq.s32.totalorder %v843, 1
      %v847 = vsel %vm846, %v841, 0.0
      %v848 = vadd.f32 %v845, %v847
      %849 = vst [vmem:[%s312] sm:$0xff] %v848
      %v850 = vpack.c.bf16 %v800, %v800
      %v851 = vpack.c.bf16 %v801, %v801
      %v852 = vpack.c.bf16 %v802, %v802
      %v853 = vpack.c.bf16 %v803, %v803
      %v854 = vpack.c.bf16 %v804, %v804
      %v855 = vpack.c.bf16 %v805, %v805
      %v856 = vpack.c.bf16 %v806, %v806
      %v857 = vpack.c.bf16 %v807, %v807
      %vm858 = vcmask 519168
      %859 = vst.msk [vmem:[%s304] sm:$0xf] %vm858, %v850
      %860 = vst.msk [vmem:[%s304 + $0x8] sm:$0xf] %vm858, %v851
      %861 = vst.msk [vmem:[%s304 + $0x10] sm:$0xf] %vm858, %v852
      %862 = vst.msk [vmem:[%s304 + $0x18] sm:$0xf] %vm858, %v853
      %863 = vst.msk [vmem:[%s304 + $0x20] sm:$0xf] %vm858, %v854
      %864 = vst.msk [vmem:[%s304 + $0x28] sm:$0xf] %vm858, %v855
      %865 = vst.msk [vmem:[%s304 + $0x30] sm:$0xf] %vm858, %v856
      %866 = vst.msk [vmem:[%s304 + $0x38] sm:$0xf] %vm858, %v857
      %875 = vrot.lane.b32.xlu0 %v850, 64
      %v876 = vpop.permute.xlu0 %875
      %877 = vrot.lane.b32.xlu0 %v851, 64
      %v878 = vpop.permute.xlu0 %877
      %879 = vrot.lane.b32.xlu0 %v852, 64
      %v880 = vpop.permute.xlu0 %879
      %881 = vrot.lane.b32.xlu0 %v853, 64
      %v882 = vpop.permute.xlu0 %881
      %883 = vrot.lane.b32.xlu0 %v854, 64
      %v884 = vpop.permute.xlu0 %883
      %885 = vrot.lane.b32.xlu0 %v855, 64
      %v886 = vpop.permute.xlu0 %885
      %887 = vrot.lane.b32.xlu0 %v856, 64
      %v888 = vpop.permute.xlu0 %887
      %889 = vrot.lane.b32.xlu0 %v857, 64
      %v890 = vpop.permute.xlu0 %889
      %s899 = scalar_lea.vmem %s304, 4
      %900 = vst.msk [vmem:[%s899] sm:$0xf] %vm858, %v876
      %901 = vst.msk [vmem:[%s899 + $0x8] sm:$0xf] %vm858, %v878
      %902 = vst.msk [vmem:[%s899 + $0x10] sm:$0xf] %vm858, %v880
      %903 = vst.msk [vmem:[%s899 + $0x18] sm:$0xf] %vm858, %v882
      %904 = vst.msk [vmem:[%s899 + $0x20] sm:$0xf] %vm858, %v884
      %905 = vst.msk [vmem:[%s899 + $0x28] sm:$0xf] %vm858, %v886
      %906 = vst.msk [vmem:[%s899 + $0x30] sm:$0xf] %vm858, %v888
      %907 = vst.msk [vmem:[%s899 + $0x38] sm:$0xf] %vm858, %v890
      %s908 = smul.u32 8, %s22
      %p909 = scmp.lt.s32.totalorder %s21, 1
      %s910 = scalar_select %p909, %s21, 1
      %p911 = scmp.lt.s32.totalorder %s908, 7
      %s912 = scalar_select %p911, %s908, 7
      %s913 = smul.addr %s912, 2
      %s914 = smul.addr %s910, 16
      %s915 = sadd.s32 %s913, %s914
      %s916 = smul.addr %s915, 4
      %s917 = scalar_lea.vmem %s4, %s916
      %p918 = scmp.lt.s32.totalorder %s21, 1
      %s919 = scalar_select %p918, %s21, 1
      %p920 = scmp.lt.s32.totalorder %s22, 0
      %s921 = scalar_select %p920, %s22, 0
      %s922 = sadd.s32 %s921, %s919
      %s923 = smul.addr %s922, 8
      %s924 = scalar_lea.vmem %s5, %s923
      // Predicated region
      $region37: #{decoder_forward.9} parent=35 // pred_check
        %p925 = pneg %p147
      $region38: #{decoder_forward.9} parent=35 // pred_check_branch
        %927 = sbr.rel (%p925) target = $region40
      $region39: #{decoder_forward.9} parent=35 // pred_region
        %s928 = smul.u32 8, %s22
      $region40: #{decoder_forward.9} parent=35 // pred_fallthru
        _
      // Predicated region
      $region41: #{decoder_forward.9} parent=35 // pred_check
        %p929 = pneg %p175
      $region42: #{decoder_forward.9} parent=35 // pred_check_branch
        %931 = sbr.rel (%p929) target = $region44
      $region43: #{decoder_forward.9} parent=35 // pred_region
        _
      $region44: #{decoder_forward.9} parent=35 // pred_fallthru
        _
    $region36: #{decoder_forward.9} parent=5 // pred_fallthru
      _
    %p932 = scmp.le.s32.totalorder 2, %s12
    // Predicated region
    $region45: #{decoder_forward.9} parent=5 // pred_check
      %p933 = pneg %p932
    $region46: #{decoder_forward.9} parent=5 // pred_check_branch
      %935 = sbr.rel (%p933) target = $region48
    $region47: #{decoder_forward.9} parent=5 // pred_region
      %s936 = ssub.s32 %s12, 2
      // Predicated region
      $region49: #{decoder_forward.9} parent=47 // pred_check
        %p937 = pneg %p153
      $region50: #{decoder_forward.9} parent=47 // pred_check_branch
        %939 = sbr.rel (%p937) target = $region52
      $region51: #{decoder_forward.9} parent=47 // pred_region
        %s940 = smul.u32 8, %s24
        %p941 = scmp.lt.s32.totalorder %s23, 1
        %s942 = scalar_select %p941, %s23, 1
        %p943 = scmp.lt.s32.totalorder %s940, 7
        %s944 = scalar_select %p943, %s940, 7
        %s945 = smul.addr %s944, 2
        %s946 = smul.addr %s942, 16
        %s947 = sadd.s32 %s945, %s946
        %s948 = smul.addr %s947, 4
        %s949 = scalar_lea.vmem %s4, %s948
      $region52: #{decoder_forward.9} parent=47 // pred_fallthru
        _
      // Predicated region
      $region53: #{decoder_forward.9} parent=47 // pred_check
        %p950 = pneg %p181
      $region54: #{decoder_forward.9} parent=47 // pred_check_branch
        %952 = sbr.rel (%p950) target = $region56
      $region55: #{decoder_forward.9} parent=47 // pred_region
        %p953 = scmp.lt.s32.totalorder %s23, 1
        %s954 = scalar_select %p953, %s23, 1
        %p955 = scmp.lt.s32.totalorder %s24, 0
        %s956 = scalar_select %p955, %s24, 0
        %s957 = sadd.s32 %s956, %s954
        %s958 = smul.addr %s957, 8
        %s959 = scalar_lea.vmem %s5, %s958
      $region56: #{decoder_forward.9} parent=47 // pred_fallthru
        _
    $region48: #{decoder_forward.9} parent=5 // pred_fallthru
      _
  $region6: #{decoder_forward.9} parent=0 // loop_footer
    %s16 = sadd.s32 1, %s12
  $region7: #{decoder_forward.9} parent=0 // loop_footer_branch
    %11 = sbr.rel target = $region3
  $region8: #{decoder_forward.9} parent=0 // loop_exit
    _

// kernel: decoder_forward.11
$region0: #{decoder_forward.11}
  #allocation0 [shape = 'u32[]', space=smem, size = 0x4, offset = 0x4, fixed_abs, tag = 'smem constant byte address 0x4 - core index']
  #allocation1 [shape = 'u32[72,128]{1,0:T(1,128)}', space=vmem, size = 0x9000, scoped, tag = 'internal scratch']
  %s0 = inlined_call_operand.vmem [shape: bf16[2,16,16,32], index: 0, kind: input, shape index: {}]
  %s1 = inlined_call_operand.vmem [shape: bf16[2,1,16,32], index: 1, kind: input, shape index: {}, may-alias: {1,2}]
  %s2 = inlined_call_operand.vmem [shape: bf16[2,1,16,32], index: 2, kind: input, shape index: {}, may-alias: {1,2}]
  %s3 = inlined_call_operand.vmem [shape: bf16[288,128], index: 3, kind: input, shape index: {}]
  %s4 = inlined_call_operand.vmem [shape: f32[1,128], index: 4, kind: input, shape index: {}]
  %s5 = inlined_call_operand.vmem [shape: f32[2,16,16,128], index: 5, kind: output, shape index: {}]
  %s6 = sld [smem:[#allocation0]]
  $region53: #{decoder_forward.11} parent=0
    _
  %s8 = ssub.s32 1, %s6
  %s9 = scalar_select 0, %s8, %s6
  loop: start=0, step=1, limit=4
  $region2: #{decoder_forward.11} parent=0 // loop_pre_header
    _
  $region3: #{decoder_forward.11} parent=0 // loop_header
    %s11 = sphi 0, %s15
    %p12 = scmp.ge.s32.totalorder %s11, 4
    %s18 = sphi 0, %s30
    %s19 = sphi 0, %s26
    %s20 = sphi 0, %s18
    %s21 = sphi 0, %s19
    %s22 = sphi 0, %s20
    %s23 = sphi 0, %s21
    %s35 = sphi 0, %s37
    %s38 = sphi 0, %s35
    %s39 = sphi 0, %s38
    %s55 = sphi 0, %s39
    %s63 = sphi 0, %s65
    %s66 = sphi 0, %s63
    %s67 = sphi 0, %s66
    %s83 = sphi 0, %s67
    %s91 = sphi 0, %s93
    %s94 = sphi 0, %s91
    %s95 = sphi 0, %s94
    %s111 = sphi 0, %s95
    %s115 = sphi 0, %s115
    %s117 = sphi 0, %s115
    %s118 = sphi 0, %s117
    %s132 = sphi 0, %s118
    %s136 = sphi 0, %s136
    %s138 = sphi 0, %s136
    %s139 = sphi 0, %s138
    %s153 = sphi 0, %s139
    %s161 = sphi 0, %s163
    %s164 = sphi 0, %s161
    %s165 = sphi 0, %s164
    %s181 = sphi 0, %s165
  $region4: #{decoder_forward.11} parent=0 // loop_header_branch
    %14 = sbr.rel (%p12) target = $region8
  $region5: #{decoder_forward.11} parent=0 // loop_body
    %s16 = ssub.s32 %s11, 1
    %s17 = ssub.s32 %s11, 2
    %s24 = sadd.s32 1, %s19
    %p25 = scmp.ge.s32.totalorder %s24, 1
    %s26 = scalar_select %p25, 0, %s24
    %s27 = sadd.s32 1, %s18
    %s28 = scalar_select %p25, %s27, %s18
    %p29 = scmp.ge.s32.totalorder %s28, 2
    %s30 = scalar_select %p29, 0, %s28
    %s31 = ssub.s32 %s18, %s30
    %s32 = ssub.s32 %s19, %s26
    %s33 = sor.u32 %s31, %s32
    %p34 = scmp.eq.s32.totalorder %s33, 0
    %s36 = sadd.s32 %s35, 1
    %s37 = scalar_select %p34, %s35, %s36
    %p40 = pneg %p34
    %p41 = scmp.eq.s32.totalorder %s11, 1
    %p42 = por %p40, %p41
    %p43 = scmp.ne.s32.totalorder %s35, %s38
    %p44 = scmp.eq.s32.totalorder %s11, 0
    %p45 = por %p43, %p44
    %p46 = scmp.ne.s32.totalorder %s35, %s38
    %p47 = scmp.eq.s32.totalorder %s16, 1
    %p48 = por %p46, %p47
    %p49 = scmp.ne.s32.totalorder %s38, %s39
    %p50 = scmp.eq.s32.totalorder %s16, 0
    %p51 = por %p49, %p50
    %p52 = scmp.ne.s32.totalorder %s38, %s39
    %p53 = scmp.eq.s32.totalorder %s17, 1
    %p54 = por %p52, %p53
    %p56 = scmp.ne.s32.totalorder %s39, %s55
    %p57 = scmp.eq.s32.totalorder %s17, 0
    %p58 = por %p56, %p57
    %s59 = ssub.s32 %s18, %s30
    %s60 = ssub.s32 %s19, %s26
    %s61 = sor.u32 %s59, %s60
    %p62 = scmp.eq.s32.totalorder %s61, 0
    %s64 = sadd.s32 %s63, 1
    %s65 = scalar_select %p62, %s63, %s64
    %p68 = pneg %p62
    %p69 = scmp.eq.s32.totalorder %s11, 1
    %p70 = por %p68, %p69
    %p71 = scmp.ne.s32.totalorder %s63, %s66
    %p72 = scmp.eq.s32.totalorder %s11, 0
    %p73 = por %p71, %p72
    %p74 = scmp.ne.s32.totalorder %s63, %s66
    %p75 = scmp.eq.s32.totalorder %s16, 1
    %p76 = por %p74, %p75
    %p77 = scmp.ne.s32.totalorder %s66, %s67
    %p78 = scmp.eq.s32.totalorder %s16, 0
    %p79 = por %p77, %p78
    %p80 = scmp.ne.s32.totalorder %s66, %s67
    %p81 = scmp.eq.s32.totalorder %s17, 1
    %p82 = por %p80, %p81
    %p84 = scmp.ne.s32.totalorder %s67, %s83
    %p85 = scmp.eq.s32.totalorder %s17, 0
    %p86 = por %p84, %p85
    %s87 = ssub.s32 %s18, %s30
    %s88 = ssub.s32 %s19, %s26
    %s89 = sor.u32 %s87, %s88
    %p90 = scmp.eq.s32.totalorder %s89, 0
    %s92 = sadd.s32 %s91, 1
    %s93 = scalar_select %p90, %s91, %s92
    %p96 = pneg %p90
    %p97 = scmp.eq.s32.totalorder %s11, 1
    %p98 = por %p96, %p97
    %p99 = scmp.ne.s32.totalorder %s91, %s94
    %p100 = scmp.eq.s32.totalorder %s11, 0
    %p101 = por %p99, %p100
    %p102 = scmp.ne.s32.totalorder %s91, %s94
    %p103 = scmp.eq.s32.totalorder %s16, 1
    %p104 = por %p102, %p103
    %p105 = scmp.ne.s32.totalorder %s94, %s95
    %p106 = scmp.eq.s32.totalorder %s16, 0
    %p107 = por %p105, %p106
    %p108 = scmp.ne.s32.totalorder %s94, %s95
    %p109 = scmp.eq.s32.totalorder %s17, 1
    %p110 = por %p108, %p109
    %p112 = scmp.ne.s32.totalorder %s95, %s111
    %p113 = scmp.eq.s32.totalorder %s17, 0
    %p114 = por %p112, %p113
    %s116 = sadd.s32 %s115, 1
    %p119 = scmp.eq.s32.totalorder %s11, 1
    %p120 = scmp.ne.s32.totalorder %s115, %s117
    %p121 = scmp.eq.s32.totalorder %s11, 0
    %p122 = por %p120, %p121
    %p123 = scmp.ne.s32.totalorder %s115, %s117
    %p124 = scmp.eq.s32.totalorder %s16, 1
    %p125 = por %p123, %p124
    %p126 = scmp.ne.s32.totalorder %s117, %s118
    %p127 = scmp.eq.s32.totalorder %s16, 0
    %p128 = por %p126, %p127
    %p129 = scmp.ne.s32.totalorder %s117, %s118
    %p130 = scmp.eq.s32.totalorder %s17, 1
    %p131 = por %p129, %p130
    %p133 = scmp.ne.s32.totalorder %s118, %s132
    %p134 = scmp.eq.s32.totalorder %s17, 0
    %p135 = por %p133, %p134
    %s137 = sadd.s32 %s136, 1
    %p140 = scmp.eq.s32.totalorder %s11, 1
    %p141 = scmp.ne.s32.totalorder %s136, %s138
    %p142 = scmp.eq.s32.totalorder %s11, 0
    %p143 = por %p141, %p142
    %p144 = scmp.ne.s32.totalorder %s136, %s138
    %p145 = scmp.eq.s32.totalorder %s16, 1
    %p146 = por %p144, %p145
    %p147 = scmp.ne.s32.totalorder %s138, %s139
    %p148 = scmp.eq.s32.totalorder %s16, 0
    %p149 = por %p147, %p148
    %p150 = scmp.ne.s32.totalorder %s138, %s139
    %p151 = scmp.eq.s32.totalorder %s17, 1
    %p152 = por %p150, %p151
    %p154 = scmp.ne.s32.totalorder %s139, %s153
    %p155 = scmp.eq.s32.totalorder %s17, 0
    %p156 = por %p154, %p155
    %s157 = ssub.s32 %s18, %s30
    %s158 = ssub.s32 %s19, %s26
    %s159 = sor.u32 %s157, %s158
    %p160 = scmp.eq.s32.totalorder %s159, 0
    %s162 = sadd.s32 %s161, 1
    %s163 = scalar_select %p160, %s161, %s162
    %p166 = pneg %p160
    %p167 = scmp.eq.s32.totalorder %s11, 1
    %p168 = por %p166, %p167
    %p169 = scmp.ne.s32.totalorder %s161, %s164
    %p170 = scmp.eq.s32.totalorder %s11, 0
    %p171 = por %p169, %p170
    %p172 = scmp.ne.s32.totalorder %s161, %s164
    %p173 = scmp.eq.s32.totalorder %s16, 1
    %p174 = por %p172, %p173
    %p175 = scmp.ne.s32.totalorder %s164, %s165
    %p176 = scmp.eq.s32.totalorder %s16, 0
    %p177 = por %p175, %p176
    %p178 = scmp.ne.s32.totalorder %s164, %s165
    %p179 = scmp.eq.s32.totalorder %s17, 1
    %p180 = por %p178, %p179
    %p182 = scmp.ne.s32.totalorder %s165, %s181
    %p183 = scmp.eq.s32.totalorder %s17, 0
    %p184 = por %p182, %p183
    %p185 = scmp.le.s32.totalorder 1, %s11
    %p186 = scmp.lt.s32.totalorder %s11, 3
    %p187 = pnand %p185, %p186
    %p188 = pneg %p187
    // Predicated region
    $region9: #{decoder_forward.11} parent=5 // pred_check
      _
    $region10: #{decoder_forward.11} parent=5 // pred_check_branch
      %190 = sbr.rel (%p187) target = $region12
    $region11: #{decoder_forward.11} parent=5 // pred_region
      %s191 = ssub.s32 %s11, 1
      // Predicated region
      $region13: #{decoder_forward.11} parent=11 // pred_check
        %p192 = pneg %p128
      $region14: #{decoder_forward.11} parent=11 // pred_check_branch
        %194 = sbr.rel (%p192) target = $region16
      $region15: #{decoder_forward.11} parent=11 // pred_region
        _
      $region16: #{decoder_forward.11} parent=11 // pred_fallthru
        _
      // Predicated region
      $region17: #{decoder_forward.11} parent=11 // pred_check
        %p195 = pneg %p149
      $region18: #{decoder_forward.11} parent=11 // pred_check_branch
        %197 = sbr.rel (%p195) target = $region20
      $region19: #{decoder_forward.11} parent=11 // pred_region
        _
      $region20: #{decoder_forward.11} parent=11 // pred_fallthru
        _
    $region12: #{decoder_forward.11} parent=5 // pred_fallthru
      _
    %p198 = scmp.lt.s32.totalorder %s11, 2
    // Predicated region
    $region21: #{decoder_forward.11} parent=5 // pred_check
      %p199 = pneg %p198
    $region22: #{decoder_forward.11} parent=5 // pred_check_branch
      %201 = sbr.rel (%p199) target = $region24
    $region23: #{decoder_forward.11} parent=5 // pred_region
      // Predicated region
      $region25: #{decoder_forward.11} parent=23 // pred_check
        %p202 = pneg %p45
      $region26: #{decoder_forward.11} parent=23 // pred_check_branch
        %204 = sbr.rel (%p202) target = $region28
      $region27: #{decoder_forward.11} parent=23 // pred_region
        %s205 = smul.u32 16, %s19
        %p206 = scmp.lt.s32.totalorder %s18, 1
        %s207 = scalar_select %p206, %s18, 1
        %p208 = scmp.lt.s32.totalorder %s205, 15
        %s209 = scalar_select %p208, %s205, 15
        %s210 = smul.addr %s209, 2
        %s211 = smul.addr %s207, 32
        %s212 = sadd.s32 %s210, %s211
        %s213 = smul.addr %s212, 4
        %s214 = scalar_lea.vmem %s0, %s213
        %s215 = smul.u32 16, %s19
      $region28: #{decoder_forward.11} parent=23 // pred_fallthru
        _
      // Predicated region
      $region29: #{decoder_forward.11} parent=23 // pred_check
        %p216 = pneg %p73
      $region30: #{decoder_forward.11} parent=23 // pred_check_branch
        %218 = sbr.rel (%p216) target = $region32
      $region31: #{decoder_forward.11} parent=23 // pred_region
        %p219 = scmp.lt.s32.totalorder %s18, 1
        %s220 = scalar_select %p219, %s18, 1
        %p221 = scmp.lt.s32.totalorder %s19, 0
        %s222 = scalar_select %p221, %s19, 0
        %s223 = smul.addr %s222, 2
        %s224 = smul.addr %s220, 2
        %s225 = sadd.s32 %s223, %s224
        %s226 = smul.addr %s225, 4
        %s227 = scalar_lea.vmem %s1, %s226
      $region32: #{decoder_forward.11} parent=23 // pred_fallthru
        _
      // Predicated region
      $region33: #{decoder_forward.11} parent=23 // pred_check
        %p228 = pneg %p101
      $region34: #{decoder_forward.11} parent=23 // pred_check_branch
        %230 = sbr.rel (%p228) target = $region36
      $region35: #{decoder_forward.11} parent=23 // pred_region
        %p231 = scmp.lt.s32.totalorder %s18, 1
        %s232 = scalar_select %p231, %s18, 1
        %p233 = scmp.lt.s32.totalorder %s19, 0
        %s234 = scalar_select %p233, %s19, 0
        %s235 = smul.addr %s234, 2
        %s236 = smul.addr %s232, 2
        %s237 = sadd.s32 %s235, %s236
        %s238 = smul.addr %s237, 4
        %s239 = scalar_lea.vmem %s2, %s238
      $region36: #{decoder_forward.11} parent=23 // pred_fallthru
        _
    $region24: #{decoder_forward.11} parent=5 // pred_fallthru
      _
    %p240 = scmp.le.s32.totalorder 1, %s11
    %p241 = scmp.lt.s32.totalorder %s11, 3
    %p242 = pnand %p240, %p241
    %p243 = pneg %p242
    // Predicated region
    $region37: #{decoder_forward.11} parent=5 // pred_check
      _
    $region38: #{decoder_forward.11} parent=5 // pred_check_branch
      %245 = sbr.rel (%p242) target = $region40
    $region39: #{decoder_forward.11} parent=5 // pred_region
      %s246 = ssub.s32 %s11, 1
      %s247 = smul.u32 16, %s21
      %p248 = scmp.lt.s32.totalorder %s20, 1
      %s249 = scalar_select %p248, %s20, 1
      %p250 = scmp.lt.s32.totalorder %s247, 15
      %s251 = scalar_select %p250, %s247, 15
      %s252 = smul.addr %s251, 2
      %s253 = smul.addr %s249, 32
      %s254 = sadd.s32 %s252, %s253
      %s255 = smul.addr %s254, 4
      %s256 = scalar_lea.vmem %s0, %s255
      %p257 = pneg %p51
      %p258 = pneg %p48
      %p259 = scmp.lt.s32.totalorder %s20, 1
      %s260 = scalar_select %p259, %s20, 1
      %p261 = scmp.lt.s32.totalorder %s21, 0
      %s262 = scalar_select %p261, %s21, 0
      %s263 = smul.addr %s262, 2
      %s264 = smul.addr %s260, 2
      %s265 = sadd.s32 %s263, %s264
      %s266 = smul.addr %s265, 4
      %s267 = scalar_lea.vmem %s1, %s266
      %p268 = pneg %p79
      %p269 = pneg %p76
      %p270 = scmp.lt.s32.totalorder %s20, 1
      %s271 = scalar_select %p270, %s20, 1
      %p272 = scmp.lt.s32.totalorder %s21, 0
      %s273 = scalar_select %p272, %s21, 0
      %s274 = smul.addr %s273, 2
      %s275 = smul.addr %s271, 2
      %s276 = sadd.s32 %s274, %s275
      %s277 = smul.addr %s276, 4
      %s278 = scalar_lea.vmem %s2, %s277
      %p279 = pneg %p107
      %p280 = pneg %p104
      %p281 = pneg %p128
      %p282 = pneg %p125
      %p283 = pneg %p149
      %p284 = pneg %p146
      %p285 = pneg %p177
      %p286 = pneg %p174
      %s287 = smul.u32 16, %s21
      %p288 = scmp.lt.s32.totalorder %s20, 1
      %s289 = scalar_select %p288, %s20, 1
      %p290 = scmp.lt.s32.totalorder %s287, 15
      %s291 = scalar_select %p290, %s287, 15
      %s292 = smul.addr %s291, 2
      %s293 = smul.addr %s289, 32
      %s294 = sadd.s32 %s292, %s293
      %s295 = smul.addr %s294, 8
      %s296 = scalar_lea.vmem %s5, %s295
      %s297 = smul.u32 16, %s21
      %p298 = scmp.lt.s32.totalorder %s20, 1
      %s299 = scalar_select %p298, %s20, 1
      %p300 = scmp.lt.s32.totalorder %s297, 15
      %s301 = scalar_select %p300, %s297, 15
      %s302 = smul.addr %s301, 2
      %s303 = smul.addr %s299, 32
      %s304 = sadd.s32 %s302, %s303
      %s305 = smul.addr %s304, 4
      %s306 = scalar_lea.vmem %s0, %s305
      %s307 = smul.u32 16, %s21
      %p308 = scmp.lt.s32.totalorder %s20, 1
      %s309 = scalar_select %p308, %s20, 1
      %p310 = scmp.lt.s32.totalorder %s21, 0
      %s311 = scalar_select %p310, %s21, 0
      %s312 = smul.addr %s311, 2
      %s313 = smul.addr %s309, 2
      %s314 = sadd.s32 %s312, %s313
      %s315 = smul.addr %s314, 4
      %s316 = scalar_lea.vmem %s1, %s315
      %p317 = scmp.lt.s32.totalorder %s20, 1
      %s318 = scalar_select %p317, %s20, 1
      %p319 = scmp.lt.s32.totalorder %s21, 0
      %s320 = scalar_select %p319, %s21, 0
      %s321 = smul.addr %s320, 2
      %s322 = smul.addr %s318, 2
      %s323 = sadd.s32 %s321, %s322
      %s324 = smul.addr %s323, 4
      %s325 = scalar_lea.vmem %s2, %s324
      %s326 = smul.u32 16, %s21
      %p327 = scmp.lt.s32.totalorder %s20, 1
      %s328 = scalar_select %p327, %s20, 1
      %p329 = scmp.lt.s32.totalorder %s326, 15
      %s330 = scalar_select %p329, %s326, 15
      %s331 = smul.addr %s330, 2
      %s332 = smul.addr %s328, 32
      %s333 = sadd.s32 %s331, %s332
      %s334 = smul.addr %s333, 8
      %s335 = scalar_lea.vmem %s5, %s334
      %s336 = smul.u32 16, %s21
      %v338 = vld [vmem:[%s316] sm:$0xf]
      %v339 = vld [vmem:[%s316 + $0x4] sm:$0xf]
      %v340 = vld [vmem:[%s306] sm:$0xf]
      %v341 = vld [vmem:[%s306 + $0x4] sm:$0xf]
      %v342 = vld [vmem:[%s306 + $0x8] sm:$0xf]
      %v343 = vld [vmem:[%s306 + $0xc] sm:$0xf]
      %v344 = vld [vmem:[%s306 + $0x10] sm:$0xf]
      %v345 = vld [vmem:[%s306 + $0x14] sm:$0xf]
      %v346 = vld [vmem:[%s306 + $0x18] sm:$0xf]
      %v347 = vld [vmem:[%s306 + $0x1c] sm:$0xf]
      %v348 = vld [vmem:[%s306 + $0x20] sm:$0xf]
      %v349 = vld [vmem:[%s306 + $0x24] sm:$0xf]
      %v350 = vld [vmem:[%s306 + $0x28] sm:$0xf]
      %v351 = vld [vmem:[%s306 + $0x2c] sm:$0xf]
      %v352 = vld [vmem:[%s306 + $0x30] sm:$0xf]
      %v353 = vld [vmem:[%s306 + $0x34] sm:$0xf]
      %v354 = vld [vmem:[%s306 + $0x38] sm:$0xf]
      %v355 = vld [vmem:[%s306 + $0x3c] sm:$0xf]
      %v356 = vld [vmem:[%s306 + $0x40] sm:$0xf]
      %v357 = vld [vmem:[%s306 + $0x44] sm:$0xf]
      %v358 = vld [vmem:[%s306 + $0x48] sm:$0xf]
      %v359 = vld [vmem:[%s306 + $0x4c] sm:$0xf]
      %v360 = vld [vmem:[%s306 + $0x50] sm:$0xf]
      %v361 = vld [vmem:[%s306 + $0x54] sm:$0xf]
      %v362 = vld [vmem:[%s306 + $0x58] sm:$0xf]
      %v363 = vld [vmem:[%s306 + $0x5c] sm:$0xf]
      %v364 = vld [vmem:[%s306 + $0x60] sm:$0xf]
      %v365 = vld [vmem:[%s306 + $0x64] sm:$0xf]
      %v366 = vld [vmem:[%s306 + $0x68] sm:$0xf]
      %v367 = vld [vmem:[%s306 + $0x6c] sm:$0xf]
      %v368 = vld [vmem:[%s306 + $0x70] sm:$0xf]
      %v369 = vld [vmem:[%s306 + $0x74] sm:$0xf]
      %v370 = vld [vmem:[%s306 + $0x78] sm:$0xf]
      %v371 = vld [vmem:[%s306 + $0x7c] sm:$0xf]
      %v372 = vld [vmem:[%s325] sm:$0xf]
      %v373 = vld [vmem:[%s325 + $0x4] sm:$0xf]
      %v410 = vunpack.c.l.b16 %v338
      %v411 = vunpack.c.l.b16 %v339
      %v412 = vunpack.c.l.b16 %v340
      %v413 = vunpack.c.l.b16 %v341
      %v414 = vunpack.c.l.b16 %v342
      %v415 = vunpack.c.l.b16 %v343
      %v416 = vunpack.c.l.b16 %v344
      %v417 = vunpack.c.l.b16 %v345
      %v418 = vunpack.c.l.b16 %v346
      %v419 = vunpack.c.l.b16 %v347
      %v420 = vunpack.c.l.b16 %v348
      %v421 = vunpack.c.l.b16 %v349
      %v422 = vunpack.c.l.b16 %v350
      %v423 = vunpack.c.l.b16 %v351
      %v424 = vunpack.c.l.b16 %v352
      %v425 = vunpack.c.l.b16 %v353
      %v426 = vunpack.c.l.b16 %v354
      %v427 = vunpack.c.l.b16 %v355
      %v428 = vunpack.c.l.b16 %v356
      %v429 = vunpack.c.l.b16 %v357
      %v430 = vunpack.c.l.b16 %v358
      %v431 = vunpack.c.l.b16 %v359
      %v432 = vunpack.c.l.b16 %v360
      %v433 = vunpack.c.l.b16 %v361
      %v434 = vunpack.c.l.b16 %v362
      %v435 = vunpack.c.l.b16 %v363
      %v436 = vunpack.c.l.b16 %v364
      %v437 = vunpack.c.l.b16 %v365
      %v438 = vunpack.c.l.b16 %v366
      %v439 = vunpack.c.l.b16 %v367
      %v440 = vunpack.c.l.b16 %v368
      %v441 = vunpack.c.l.b16 %v369
      %v442 = vunpack.c.l.b16 %v370
      %v443 = vunpack.c.l.b16 %v371
      %v444 = vunpack.c.l.b16 %v372
      %v445 = vunpack.c.l.b16 %v373
      %v446 = vpack.c.b16 %v411, %v410
      %v447 = vpack.c.b16 %v413, %v412
      %v448 = vpack.c.b16 %v415, %v414
      %v449 = vpack.c.b16 %v417, %v416
      %v450 = vpack.c.b16 %v419, %v418
      %v451 = vpack.c.b16 %v421, %v420
      %v452 = vpack.c.b16 %v423, %v422
      %v453 = vpack.c.b16 %v425, %v424
      %v454 = vpack.c.b16 %v427, %v426
      %v455 = vpack.c.b16 %v429, %v428
      %v456 = vpack.c.b16 %v431, %v430
      %v457 = vpack.c.b16 %v433, %v432
      %v458 = vpack.c.b16 %v435, %v434
      %v459 = vpack.c.b16 %v437, %v436
      %v460 = vpack.c.b16 %v439, %v438
      %v461 = vpack.c.b16 %v441, %v440
      %v462 = vpack.c.b16 %v443, %v442
      %v463 = vpack.c.b16 %v445, %v444
      %v465 = vshrl.u32 %v446, 16
      %v467 = vrot.slane %v465, 7
      %v468 = vshll.u32 %v446, 16
      %v470 = vor.u32 %v467, %v468
      %v472 = vshrl.u32 %v447, 16
      %v474 = vrot.slane %v472, 7
      %v475 = vshll.u32 %v447, 16
      %v477 = vor.u32 %v474, %v475
      %v479 = vshrl.u32 %v448, 16
      %v481 = vrot.slane %v479, 7
      %v482 = vshll.u32 %v448, 16
      %v484 = vor.u32 %v481, %v482
      %v486 = vshrl.u32 %v449, 16
      %v488 = vrot.slane %v486, 7
      %v489 = vshll.u32 %v449, 16
      %v491 = vor.u32 %v488, %v489
      %v493 = vshrl.u32 %v450, 16
      %v495 = vrot.slane %v493, 7
      %v496 = vshll.u32 %v450, 16
      %v498 = vor.u32 %v495, %v496
      %v500 = vshrl.u32 %v451, 16
      %v502 = vrot.slane %v500, 7
      %v503 = vshll.u32 %v451, 16
      %v505 = vor.u32 %v502, %v503
      %v507 = vshrl.u32 %v452, 16
      %v509 = vrot.slane %v507, 7
      %v510 = vshll.u32 %v452, 16
      %v512 = vor.u32 %v509, %v510
      %v514 = vshrl.u32 %v453, 16
      %v516 = vrot.slane %v514, 7
      %v517 = vshll.u32 %v453, 16
      %v519 = vor.u32 %v516, %v517
      %v521 = vshrl.u32 %v454, 16
      %v523 = vrot.slane %v521, 7
      %v524 = vshll.u32 %v454, 16
      %v526 = vor.u32 %v523, %v524
      %v528 = vshrl.u32 %v455, 16
      %v530 = vrot.slane %v528, 7
      %v531 = vshll.u32 %v455, 16
      %v533 = vor.u32 %v530, %v531
      %v535 = vshrl.u32 %v456, 16
      %v537 = vrot.slane %v535, 7
      %v538 = vshll.u32 %v456, 16
      %v540 = vor.u32 %v537, %v538
      %v542 = vshrl.u32 %v457, 16
      %v544 = vrot.slane %v542, 7
      %v545 = vshll.u32 %v457, 16
      %v547 = vor.u32 %v544, %v545
      %v549 = vshrl.u32 %v458, 16
      %v551 = vrot.slane %v549, 7
      %v552 = vshll.u32 %v458, 16
      %v554 = vor.u32 %v551, %v552
      %v556 = vshrl.u32 %v459, 16
      %v558 = vrot.slane %v556, 7
      %v559 = vshll.u32 %v459, 16
      %v561 = vor.u32 %v558, %v559
      %v563 = vshrl.u32 %v460, 16
      %v565 = vrot.slane %v563, 7
      %v566 = vshll.u32 %v460, 16
      %v568 = vor.u32 %v565, %v566
      %v570 = vshrl.u32 %v461, 16
      %v572 = vrot.slane %v570, 7
      %v573 = vshll.u32 %v461, 16
      %v575 = vor.u32 %v572, %v573
      %v577 = vshrl.u32 %v462, 16
      %v579 = vrot.slane %v577, 7
      %v580 = vshll.u32 %v462, 16
      %v582 = vor.u32 %v579, %v580
      %v584 = vshrl.u32 %v463, 16
      %v586 = vrot.slane %v584, 7
      %v587 = vshll.u32 %v463, 16
      %v589 = vor.u32 %v586, %v587
      %vm626 = vcmask 1040384
      %vm627 = vsmask.f32 256
      %vm628 = vmand %vm626, %vm627
      %v629 = vsel %vm628, 0, %v470
      %v630 = vsel %vm628, 0, %v477
      %v631 = vsel %vm628, 0, %v484
      %v632 = vsel %vm628, 0, %v491
      %v633 = vsel %vm628, 0, %v498
      %v634 = vsel %vm628, 0, %v505
      %v635 = vsel %vm628, 0, %v512
      %v636 = vsel %vm628, 0, %v519
      %v637 = vsel %vm628, 0, %v526
      %v638 = vsel %vm628, 0, %v533
      %v639 = vsel %vm628, 0, %v540
      %v640 = vsel %vm628, 0, %v547
      %v641 = vsel %vm628, 0, %v554
      %v642 = vsel %vm628, 0, %v561
      %v643 = vsel %vm628, 0, %v568
      %v644 = vsel %vm628, 0, %v575
      %v645 = vsel %vm628, 0, %v582
      %v646 = vsel %vm628, 0, %v589
      %v647 = vsel %vm628, %v467, 0
      %v648 = vsel %vm628, %v474, 0
      %v649 = vsel %vm628, %v481, 0
      %v650 = vsel %vm628, %v488, 0
      %v651 = vsel %vm628, %v495, 0
      %v652 = vsel %vm628, %v502, 0
      %v653 = vsel %vm628, %v509, 0
      %v654 = vsel %vm628, %v516, 0
      %v655 = vsel %vm628, %v523, 0
      %v656 = vsel %vm628, %v530, 0
      %v657 = vsel %vm628, %v537, 0
      %v658 = vsel %vm628, %v544, 0
      %v659 = vsel %vm628, %v551, 0
      %v660 = vsel %vm628, %v558, 0
      %v661 = vsel %vm628, %v565, 0
      %v662 = vsel %vm628, %v572, 0
      %v663 = vsel %vm628, %v579, 0
      %v664 = vsel %vm628, %v586, 0
      %v665 = vld [vmem:[%s4] sm:$0x1]
      %v667 = vperm.slane %v665, 0
      %v669 = vadd.f32 %v667, 0.0
      %v670 = vld [vmem:[%s3] sm:$0xf]
      %v671 = vld [vmem:[%s3 + $0x4] sm:$0xf]
      %v672 = vld [vmem:[%s3 + $0x8] sm:$0xf]
      %v673 = vld [vmem:[%s3 + $0xc] sm:$0xf]
      %v678 = vunpack.c.l.b16 %v670
      %v679 = vunpack.c.l.b16 %v671
      %v680 = vunpack.c.l.b16 %v672
      %v681 = vunpack.c.l.b16 %v673
      %v682 = vpack.c.b16 %v679, %v678
      %v683 = vpack.c.b16 %v681, %v680
      %vm686 = vcmask 261120
      %v688 = vsel %vm686, %v629, 0
      %v691 = vsel %vm686, %v630, 0
      %v694 = vsel %vm686, %v631, 0
      %v697 = vsel %vm686, %v632, 0
      %v700 = vsel %vm686, %v633, 0
      %v703 = vsel %vm686, %v634, 0
      %v706 = vsel %vm686, %v635, 0
      %v709 = vsel %vm686, %v636, 0
      %v712 = vsel %vm686, %v637, 0
      %v715 = vsel %vm686, %v638, 0
      %v718 = vsel %vm686, %v639, 0
      %v721 = vsel %vm686, %v640, 0
      %v724 = vsel %vm686, %v641, 0
      %v727 = vsel %vm686, %v642, 0
      %v730 = vsel %vm686, %v643, 0
      %v733 = vsel %vm686, %v644, 0
      %735 = vmatpush.bf16.msra.mxu0 0
      %736 = vmatpush.bf16.msra.mxu0 0
      %737 = vmatpush.bf16.msra.mxu0 0
      %738 = vmatpush.bf16.msra.mxu0 0
      %739 = vmatpush.bf16.msra.mxu0 0
      %740 = vmatpush.bf16.msra.mxu0 0
      %741 = vmatpush.bf16.msra.mxu0 %v683
      %742 = vmatpush.bf16.msra.mxu0 %v682
      %743 = vmatmul.bf16.gmra.mxu0 %v688
      %v744 = vpop.f32.mrf.mxu0
      %v745 = vadd.f32 0.0, %v744
      %v746 = vpop.f32.mrf.mxu0
      %v747 = vadd.f32 0.0, %v746
      %748 = vmatmul.bf16.gmra.mxu0 %v691
      %v749 = vpop.f32.mrf.mxu0
      %v750 = vadd.f32 0.0, %v749
      %v751 = vpop.f32.mrf.mxu0
      %v752 = vadd.f32 0.0, %v751
      %753 = vmatmul.bf16.gmra.mxu0 %v694
      %v754 = vpop.f32.mrf.mxu0
      %v755 = vadd.f32 0.0, %v754
      %v756 = vpop.f32.mrf.mxu0
      %v757 = vadd.f32 0.0, %v756
      %758 = vmatmul.bf16.gmra.mxu0 %v697
      %v759 = vpop.f32.mrf.mxu0
      %v760 = vadd.f32 0.0, %v759
      %v761 = vpop.f32.mrf.mxu0
      %v762 = vadd.f32 0.0, %v761
      %763 = vmatmul.bf16.gmra.mxu0 %v700
      %v764 = vpop.f32.mrf.mxu0
      %v765 = vadd.f32 0.0, %v764
      %v766 = vpop.f32.mrf.mxu0
      %v767 = vadd.f32 0.0, %v766
      %768 = vmatmul.bf16.gmra.mxu0 %v703
      %v769 = vpop.f32.mrf.mxu0
      %v770 = vadd.f32 0.0, %v769
      %v771 = vpop.f32.mrf.mxu0
      %v772 = vadd.f32 0.0, %v771
      %773 = vmatmul.bf16.gmra.mxu0 %v706
      %v774 = vpop.f32.mrf.mxu0
      %v775 = vadd.f32 0.0, %v774
      %v776 = vpop.f32.mrf.mxu0
      %v777 = vadd.f32 0.0, %v776
      %778 = vmatmul.bf16.gmra.mxu0 %v709
      %v779 = vpop.f32.mrf.mxu0
      %v780 = vadd.f32 0.0, %v779
      %v781 = vpop.f32.mrf.mxu0
      %v782 = vadd.f32 0.0, %v781
      %783 = vmatmul.bf16.gmra.mxu0 %v712
      %v784 = vpop.f32.mrf.mxu0
      %v785 = vadd.f32 0.0, %v784
      %v786 = vpop.f32.mrf.mxu0
      %v787 = vadd.f32 0.0, %v786
      %788 = vmatmul.bf16.gmra.mxu0 %v715
      %v789 = vpop.f32.mrf.mxu0
      %v790 = vadd.f32 0.0, %v789
      %v791 = vpop.f32.mrf.mxu0
      %v792 = vadd.f32 0.0, %v791
      %793 = vmatmul.bf16.gmra.mxu0 %v718
      %v794 = vpop.f32.mrf.mxu0
      %v795 = vadd.f32 0.0, %v794
      %v796 = vpop.f32.mrf.mxu0
      %v797 = vadd.f32 0.0, %v796
      %798 = vmatmul.bf16.gmra.mxu0 %v721
      %v799 = vpop.f32.mrf.mxu0
      %v800 = vadd.f32 0.0, %v799
      %v801 = vpop.f32.mrf.mxu0
      %v802 = vadd.f32 0.0, %v801
      %803 = vmatmul.bf16.gmra.mxu0 %v724
      %v804 = vpop.f32.mrf.mxu0
      %v805 = vadd.f32 0.0, %v804
      %v806 = vpop.f32.mrf.mxu0
      %v807 = vadd.f32 0.0, %v806
      %808 = vmatmul.bf16.gmra.mxu0 %v727
      %v809 = vpop.f32.mrf.mxu0
      %v810 = vadd.f32 0.0, %v809
      %v811 = vpop.f32.mrf.mxu0
      %v812 = vadd.f32 0.0, %v811
      %813 = vmatmul.bf16.gmra.mxu0 %v730
      %v814 = vpop.f32.mrf.mxu0
      %v815 = vadd.f32 0.0, %v814
      %v816 = vpop.f32.mrf.mxu0
      %v817 = vadd.f32 0.0, %v816
      %818 = vmatmul.bf16.gmra.mxu0 %v733
      %v819 = vpop.f32.mrf.mxu0
      %v820 = vadd.f32 0.0, %v819
      %v821 = vpop.f32.mrf.mxu0
      %v822 = vadd.f32 0.0, %v821
      %823 = vdwg.mxu0
      %v824 = vadd.f32 %v669, %v745
      %v825 = vadd.f32 %v669, %v747
      %v826 = vadd.f32 %v669, %v750
      %v827 = vadd.f32 %v669, %v752
      %v828 = vadd.f32 %v669, %v755
      %v829 = vadd.f32 %v669, %v757
      %v830 = vadd.f32 %v669, %v760
      %v831 = vadd.f32 %v669, %v762
      %v832 = vadd.f32 %v669, %v765
      %v833 = vadd.f32 %v669, %v767
      %v834 = vadd.f32 %v669, %v770
      %v835 = vadd.f32 %v669, %v772
      %v836 = vadd.f32 %v669, %v775
      %v837 = vadd.f32 %v669, %v777
      %v838 = vadd.f32 %v669, %v780
      %v839 = vadd.f32 %v669, %v782
      %v840 = vadd.f32 %v669, %v785
      %v841 = vadd.f32 %v669, %v787
      %v842 = vadd.f32 %v669, %v790
      %v843 = vadd.f32 %v669, %v792
      %v844 = vadd.f32 %v669, %v795
      %v845 = vadd.f32 %v669, %v797
      %v846 = vadd.f32 %v669, %v800
      %v847 = vadd.f32 %v669, %v802
      %v848 = vadd.f32 %v669, %v805
      %v849 = vadd.f32 %v669, %v807
      %v850 = vadd.f32 %v669, %v810
      %v851 = vadd.f32 %v669, %v812
      %v852 = vadd.f32 %v669, %v815
      %v853 = vadd.f32 %v669, %v817
      %v854 = vadd.f32 %v669, %v820
      %v855 = vadd.f32 %v669, %v822
      %vm856 = vsmask.f32 7424
      %v857 = vshrl.u32 %v629, 16
      %v859 = vshll.u32 %v629, 16
      %v861 = vrot.slane %v859, 1
      %v862 = vor.u32 %v857, %v861
      %v864 = vshll.u32 %v647, 16
      %v866 = vrot.slane %v864, 1
      %v867 = vsel %vm856, %v862, %v866
      %v868 = vshrl.u32 %v630, 16
      %v870 = vshll.u32 %v630, 16
      %v872 = vrot.slane %v870, 1
      %v873 = vor.u32 %v868, %v872
      %v875 = vshll.u32 %v648, 16
      %v877 = vrot.slane %v875, 1
      %v878 = vsel %vm856, %v873, %v877
      %v879 = vshrl.u32 %v631, 16
      %v881 = vshll.u32 %v631, 16
      %v883 = vrot.slane %v881, 1
      %v884 = vor.u32 %v879, %v883
      %v886 = vshll.u32 %v649, 16
      %v888 = vrot.slane %v886, 1
      %v889 = vsel %vm856, %v884, %v888
      %v890 = vshrl.u32 %v632, 16
      %v892 = vshll.u32 %v632, 16
      %v894 = vrot.slane %v892, 1
      %v895 = vor.u32 %v890, %v894
      %v897 = vshll.u32 %v650, 16
      %v899 = vrot.slane %v897, 1
      %v900 = vsel %vm856, %v895, %v899
      %v901 = vshrl.u32 %v633, 16
      %v903 = vshll.u32 %v633, 16
      %v905 = vrot.slane %v903, 1
      %v906 = vor.u32 %v901, %v905
      %v908 = vshll.u32 %v651, 16
      %v910 = vrot.slane %v908, 1
      %v911 = vsel %vm856, %v906, %v910
      %v912 = vshrl.u32 %v634, 16
      %v914 = vshll.u32 %v634, 16
      %v916 = vrot.slane %v914, 1
      %v917 = vor.u32 %v912, %v916
      %v919 = vshll.u32 %v652, 16
      %v921 = vrot.slane %v919, 1
      %v922 = vsel %vm856, %v917, %v921
      %v923 = vshrl.u32 %v635, 16
      %v925 = vshll.u32 %v635, 16
      %v927 = vrot.slane %v925, 1
      %v928 = vor.u32 %v923, %v927
      %v930 = vshll.u32 %v653, 16
      %v932 = vrot.slane %v930, 1
      %v933 = vsel %vm856, %v928, %v932
      %v934 = vshrl.u32 %v636, 16
      %v936 = vshll.u32 %v636, 16
      %v938 = vrot.slane %v936, 1
      %v939 = vor.u32 %v934, %v938
      %v941 = vshll.u32 %v654, 16
      %v943 = vrot.slane %v941, 1
      %v944 = vsel %vm856, %v939, %v943
      %v945 = vshrl.u32 %v637, 16
      %v947 = vshll.u32 %v637, 16
      %v949 = vrot.slane %v947, 1
      %v950 = vor.u32 %v945, %v949
      %v952 = vshll.u32 %v655, 16
      %v954 = vrot.slane %v952, 1
      %v955 = vsel %vm856, %v950, %v954
      %v956 = vshrl.u32 %v638, 16
      %v958 = vshll.u32 %v638, 16
      %v960 = vrot.slane %v958, 1
      %v961 = vor.u32 %v956, %v960
      %v963 = vshll.u32 %v656, 16
      %v965 = vrot.slane %v963, 1
      %v966 = vsel %vm856, %v961, %v965
      %v967 = vshrl.u32 %v639, 16
      %v969 = vshll.u32 %v639, 16
      %v971 = vrot.slane %v969, 1
      %v972 = vor.u32 %v967, %v971
      %v974 = vshll.u32 %v657, 16
      %v976 = vrot.slane %v974, 1
      %v977 = vsel %vm856, %v972, %v976
      %v978 = vshrl.u32 %v640, 16
      %v980 = vshll.u32 %v640, 16
      %v982 = vrot.slane %v980, 1
      %v983 = vor.u32 %v978, %v982
      %v985 = vshll.u32 %v658, 16
      %v987 = vrot.slane %v985, 1
      %v988 = vsel %vm856, %v983, %v987
      %v989 = vshrl.u32 %v641, 16
      %v991 = vshll.u32 %v641, 16
      %v993 = vrot.slane %v991, 1
      %v994 = vor.u32 %v989, %v993
      %v996 = vshll.u32 %v659, 16
      %v998 = vrot.slane %v996, 1
      %v999 = vsel %vm856, %v994, %v998
      %v1000 = vshrl.u32 %v642, 16
      %v1002 = vshll.u32 %v642, 16
      %v1004 = vrot.slane %v1002, 1
      %v1005 = vor.u32 %v1000, %v1004
      %v1007 = vshll.u32 %v660, 16
      %v1009 = vrot.slane %v1007, 1
      %v1010 = vsel %vm856, %v1005, %v1009
      %v1011 = vshrl.u32 %v643, 16
      %v1013 = vshll.u32 %v643, 16
      %v1015 = vrot.slane %v1013, 1
      %v1016 = vor.u32 %v1011, %v1015
      %v1018 = vshll.u32 %v661, 16
      %v1020 = vrot.slane %v1018, 1
      %v1021 = vsel %vm856, %v1016, %v1020
      %v1022 = vshrl.u32 %v644, 16
      %v1024 = vshll.u32 %v644, 16
      %v1026 = vrot.slane %v1024, 1
      %v1027 = vor.u32 %v1022, %v1026
      %v1029 = vshll.u32 %v662, 16
      %v1031 = vrot.slane %v1029, 1
      %v1032 = vsel %vm856, %v1027, %v1031
      %v1033 = vld [vmem:[%s3 + $0x10] sm:$0xf]
      %v1034 = vld [vmem:[%s3 + $0x14] sm:$0xf]
      %v1035 = vld [vmem:[%s3 + $0x18] sm:$0xf]
      %v1036 = vld [vmem:[%s3 + $0x1c] sm:$0xf]
      %v1041 = vunpack.c.l.b16 %v1033
      %v1042 = vunpack.c.l.b16 %v1034
      %v1043 = vunpack.c.l.b16 %v1035
      %v1044 = vunpack.c.l.b16 %v1036
      %v1045 = vpack.c.b16 %v1042, %v1041
      %v1046 = vpack.c.b16 %v1044, %v1043
      %v1050 = vsel %vm686, %v867, 0
      %v1053 = vsel %vm686, %v878, 0
      %v1056 = vsel %vm686, %v889, 0
      %v1059 = vsel %vm686, %v900, 0
      %v1062 = vsel %vm686, %v911, 0
      %v1065 = vsel %vm686, %v922, 0
      %v1068 = vsel %vm686, %v933, 0
      %v1071 = vsel %vm686, %v944, 0
      %v1074 = vsel %vm686, %v955, 0
      %v1077 = vsel %vm686, %v966, 0
      %v1080 = vsel %vm686, %v977, 0
      %v1083 = vsel %vm686, %v988, 0
      %v1086 = vsel %vm686, %v999, 0
      %v1089 = vsel %vm686, %v1010, 0
      %v1092 = vsel %vm686, %v1021, 0
      %v1095 = vsel %vm686, %v1032, 0
      %1097 = vmatpush.bf16.msra.mxu0 0
      %1098 = vmatpush.bf16.msra.mxu0 0
      %1099 = vmatpush.bf16.msra.mxu0 0
      %1100 = vmatpush.bf16.msra.mxu0 0
      %1101 = vmatpush.bf16.msra.mxu0 0
      %1102 = vmatpush.bf16.msra.mxu0 0
      %1103 = vmatpush.bf16.msra.mxu0 %v1046
      %1104 = vmatpush.bf16.msra.mxu0 %v1045
      %1105 = vmatmul.bf16.gmra.mxu0 %v1050
      %v1106 = vpop.f32.mrf.mxu0
      %v1107 = vadd.f32 0.0, %v1106
      %v1108 = vpop.f32.mrf.mxu0
      %v1109 = vadd.f32 0.0, %v1108
      %1110 = vmatmul.bf16.gmra.mxu0 %v1053
      %v1111 = vpop.f32.mrf.mxu0
      %v1112 = vadd.f32 0.0, %v1111
      %v1113 = vpop.f32.mrf.mxu0
      %v1114 = vadd.f32 0.0, %v1113
      %1115 = vmatmul.bf16.gmra.mxu0 %v1056
      %v1116 = vpop.f32.mrf.mxu0
      %v1117 = vadd.f32 0.0, %v1116
      %v1118 = vpop.f32.mrf.mxu0
      %v1119 = vadd.f32 0.0, %v1118
      %1120 = vmatmul.bf16.gmra.mxu0 %v1059
      %v1121 = vpop.f32.mrf.mxu0
      %v1122 = vadd.f32 0.0, %v1121
      %v1123 = vpop.f32.mrf.mxu0
      %v1124 = vadd.f32 0.0, %v1123
      %1125 = vmatmul.bf16.gmra.mxu0 %v1062
      %v1126 = vpop.f32.mrf.mxu0
      %v1127 = vadd.f32 0.0, %v1126
      %v1128 = vpop.f32.mrf.mxu0
      %v1129 = vadd.f32 0.0, %v1128
      %1130 = vmatmul.bf16.gmra.mxu0 %v1065
      %v1131 = vpop.f32.mrf.mxu0
      %v1132 = vadd.f32 0.0, %v1131
      %v1133 = vpop.f32.mrf.mxu0
      %v1134 = vadd.f32 0.0, %v1133
      %1135 = vmatmul.bf16.gmra.mxu0 %v1068
      %v1136 = vpop.f32.mrf.mxu0
      %v1137 = vadd.f32 0.0, %v1136
      %v1138 = vpop.f32.mrf.mxu0
      %v1139 = vadd.f32 0.0, %v1138
      %1140 = vmatmul.bf16.gmra.mxu0 %v1071
      %v1141 = vpop.f32.mrf.mxu0
      %v1142 = vadd.f32 0.0, %v1141
      %v1143 = vpop.f32.mrf.mxu0
      %v1144 = vadd.f32 0.0, %v1143
      %1145 = vmatmul.bf16.gmra.mxu0 %v1074
      %v1146 = vpop.f32.mrf.mxu0
      %v1147 = vadd.f32 0.0, %v1146
      %v1148 = vpop.f32.mrf.mxu0
      %v1149 = vadd.f32 0.0, %v1148
      %1150 = vmatmul.bf16.gmra.mxu0 %v1077
      %v1151 = vpop.f32.mrf.mxu0
      %v1152 = vadd.f32 0.0, %v1151
      %v1153 = vpop.f32.mrf.mxu0
      %v1154 = vadd.f32 0.0, %v1153
      %1155 = vmatmul.bf16.gmra.mxu0 %v1080
      %v1156 = vpop.f32.mrf.mxu0
      %v1157 = vadd.f32 0.0, %v1156
      %v1158 = vpop.f32.mrf.mxu0
      %v1159 = vadd.f32 0.0, %v1158
      %1160 = vmatmul.bf16.gmra.mxu0 %v1083
      %v1161 = vpop.f32.mrf.mxu0
      %v1162 = vadd.f32 0.0, %v1161
      %v1163 = vpop.f32.mrf.mxu0
      %v1164 = vadd.f32 0.0, %v1163
      %1165 = vmatmul.bf16.gmra.mxu0 %v1086
      %v1166 = vpop.f32.mrf.mxu0
      %v1167 = vadd.f32 0.0, %v1166
      %v1168 = vpop.f32.mrf.mxu0
      %v1169 = vadd.f32 0.0, %v1168
      %1170 = vmatmul.bf16.gmra.mxu0 %v1089
      %v1171 = vpop.f32.mrf.mxu0
      %v1172 = vadd.f32 0.0, %v1171
      %v1173 = vpop.f32.mrf.mxu0
      %v1174 = vadd.f32 0.0, %v1173
      %1175 = vmatmul.bf16.gmra.mxu0 %v1092
      %v1176 = vpop.f32.mrf.mxu0
      %v1177 = vadd.f32 0.0, %v1176
      %v1178 = vpop.f32.mrf.mxu0
      %v1179 = vadd.f32 0.0, %v1178
      %1180 = vmatmul.bf16.gmra.mxu0 %v1095
      %v1181 = vpop.f32.mrf.mxu0
      %v1182 = vadd.f32 0.0, %v1181
      %v1183 = vpop.f32.mrf.mxu0
      %v1184 = vadd.f32 0.0, %v1183
      %1185 = vdwg.mxu0
      %v1186 = vadd.f32 %v824, %v1107
      %v1187 = vadd.f32 %v825, %v1109
      %v1188 = vadd.f32 %v826, %v1112
      %v1189 = vadd.f32 %v827, %v1114
      %v1190 = vadd.f32 %v828, %v1117
      %v1191 = vadd.f32 %v829, %v1119
      %v1192 = vadd.f32 %v830, %v1122
      %v1193 = vadd.f32 %v831, %v1124
      %v1194 = vadd.f32 %v832, %v1127
      %v1195 = vadd.f32 %v833, %v1129
      %v1196 = vadd.f32 %v834, %v1132
      %v1197 = vadd.f32 %v835, %v1134
      %v1198 = vadd.f32 %v836, %v1137
      %v1199 = vadd.f32 %v837, %v1139
      %v1200 = vadd.f32 %v838, %v1142
      %v1201 = vadd.f32 %v839, %v1144
      %v1202 = vadd.f32 %v840, %v1147
      %v1203 = vadd.f32 %v841, %v1149
      %v1204 = vadd.f32 %v842, %v1152
      %v1205 = vadd.f32 %v843, %v1154
      %v1206 = vadd.f32 %v844, %v1157
      %v1207 = vadd.f32 %v845, %v1159
      %v1208 = vadd.f32 %v846, %v1162
      %v1209 = vadd.f32 %v847, %v1164
      %v1210 = vadd.f32 %v848, %v1167
      %v1211 = vadd.f32 %v849, %v1169
      %v1212 = vadd.f32 %v850, %v1172
      %v1213 = vadd.f32 %v851, %v1174
      %v1214 = vadd.f32 %v852, %v1177
      %v1215 = vadd.f32 %v853, %v1179
      %v1216 = vadd.f32 %v854, %v1182
      %v1217 = vadd.f32 %v855, %v1184
      %vm1250 = vcmask 1046528
      %v1251 = vrot.slane %v629, 1
      %v1252 = vrot.slane %v647, 1
      %v1253 = vsel %vm1250, %v1251, %v1252
      %v1254 = vrot.slane %v630, 1
      %v1255 = vrot.slane %v648, 1
      %v1256 = vsel %vm1250, %v1254, %v1255
      %v1257 = vrot.slane %v631, 1
      %v1258 = vrot.slane %v649, 1
      %v1259 = vsel %vm1250, %v1257, %v1258
      %v1260 = vrot.slane %v632, 1
      %v1261 = vrot.slane %v650, 1
      %v1262 = vsel %vm1250, %v1260, %v1261
      %v1263 = vrot.slane %v633, 1
      %v1264 = vrot.slane %v651, 1
      %v1265 = vsel %vm1250, %v1263, %v1264
      %v1266 = vrot.slane %v634, 1
      %v1267 = vrot.slane %v652, 1
      %v1268 = vsel %vm1250, %v1266, %v1267
      %v1269 = vrot.slane %v635, 1
      %v1270 = vrot.slane %v653, 1
      %v1271 = vsel %vm1250, %v1269, %v1270
      %v1272 = vrot.slane %v636, 1
      %v1273 = vrot.slane %v654, 1
      %v1274 = vsel %vm1250, %v1272, %v1273
      %v1275 = vrot.slane %v637, 1
      %v1276 = vrot.slane %v655, 1
      %v1277 = vsel %vm1250, %v1275, %v1276
      %v1278 = vrot.slane %v638, 1
      %v1279 = vrot.slane %v656, 1
      %v1280 = vsel %vm1250, %v1278, %v1279
      %v1281 = vrot.slane %v639, 1
      %v1282 = vrot.slane %v657, 1
      %v1283 = vsel %vm1250, %v1281, %v1282
      %v1284 = vrot.slane %v640, 1
      %v1285 = vrot.slane %v658, 1
      %v1286 = vsel %vm1250, %v1284, %v1285
      %v1287 = vrot.slane %v641, 1
      %v1288 = vrot.slane %v659, 1
      %v1289 = vsel %vm1250, %v1287, %v1288
      %v1290 = vrot.slane %v642, 1
      %v1291 = vrot.slane %v660, 1
      %v1292 = vsel %vm1250, %v1290, %v1291
      %v1293 = vrot.slane %v643, 1
      %v1294 = vrot.slane %v661, 1
      %v1295 = vsel %vm1250, %v1293, %v1294
      %v1296 = vrot.slane %v644, 1
      %v1297 = vrot.slane %v662, 1
      %v1298 = vsel %vm1250, %v1296, %v1297
      %v1299 = vld [vmem:[%s3 + $0x20] sm:$0xf]
      %v1300 = vld [vmem:[%s3 + $0x24] sm:$0xf]
      %v1301 = vld [vmem:[%s3 + $0x28] sm:$0xf]
      %v1302 = vld [vmem:[%s3 + $0x2c] sm:$0xf]
      %v1307 = vunpack.c.l.b16 %v1299
      %v1308 = vunpack.c.l.b16 %v1300
      %v1309 = vunpack.c.l.b16 %v1301
      %v1310 = vunpack.c.l.b16 %v1302
      %v1311 = vpack.c.b16 %v1308, %v1307
      %v1312 = vpack.c.b16 %v1310, %v1309
      %v1316 = vsel %vm686, %v1253, 0
      %v1319 = vsel %vm686, %v1256, 0
      %v1322 = vsel %vm686, %v1259, 0
      %v1325 = vsel %vm686, %v1262, 0
      %v1328 = vsel %vm686, %v1265, 0
      %v1331 = vsel %vm686, %v1268, 0
      %v1334 = vsel %vm686, %v1271, 0
      %v1337 = vsel %vm686, %v1274, 0
      %v1340 = vsel %vm686, %v1277, 0
      %v1343 = vsel %vm686, %v1280, 0
      %v1346 = vsel %vm686, %v1283, 0
      %v1349 = vsel %vm686, %v1286, 0
      %v1352 = vsel %vm686, %v1289, 0
      %v1355 = vsel %vm686, %v1292, 0
      %v1358 = vsel %vm686, %v1295, 0
      %v1361 = vsel %vm686, %v1298, 0
      %1363 = vmatpush.bf16.msra.mxu0 0
      %1364 = vmatpush.bf16.msra.mxu0 0
      %1365 = vmatpush.bf16.msra.mxu0 0
      %1366 = vmatpush.bf16.msra.mxu0 0
      %1367 = vmatpush.bf16.msra.mxu0 0
      %1368 = vmatpush.bf16.msra.mxu0 0
      %1369 = vmatpush.bf16.msra.mxu0 %v1312
      %1370 = vmatpush.bf16.msra.mxu0 %v1311
      %1371 = vmatmul.bf16.gmra.mxu0 %v1316
      %v1372 = vpop.f32.mrf.mxu0
      %v1373 = vadd.f32 0.0, %v1372
      %v1374 = vpop.f32.mrf.mxu0
      %v1375 = vadd.f32 0.0, %v1374
      %1376 = vmatmul.bf16.gmra.mxu0 %v1319
      %v1377 = vpop.f32.mrf.mxu0
      %v1378 = vadd.f32 0.0, %v1377
      %v1379 = vpop.f32.mrf.mxu0
      %v1380 = vadd.f32 0.0, %v1379
      %1381 = vmatmul.bf16.gmra.mxu0 %v1322
      %v1382 = vpop.f32.mrf.mxu0
      %v1383 = vadd.f32 0.0, %v1382
      %v1384 = vpop.f32.mrf.mxu0
      %v1385 = vadd.f32 0.0, %v1384
      %1386 = vmatmul.bf16.gmra.mxu0 %v1325
      %v1387 = vpop.f32.mrf.mxu0
      %v1388 = vadd.f32 0.0, %v1387
      %v1389 = vpop.f32.mrf.mxu0
      %v1390 = vadd.f32 0.0, %v1389
      %1391 = vmatmul.bf16.gmra.mxu0 %v1328
      %v1392 = vpop.f32.mrf.mxu0
      %v1393 = vadd.f32 0.0, %v1392
      %v1394 = vpop.f32.mrf.mxu0
      %v1395 = vadd.f32 0.0, %v1394
      %1396 = vmatmul.bf16.gmra.mxu0 %v1331
      %v1397 = vpop.f32.mrf.mxu0
      %v1398 = vadd.f32 0.0, %v1397
      %v1399 = vpop.f32.mrf.mxu0
      %v1400 = vadd.f32 0.0, %v1399
      %1401 = vmatmul.bf16.gmra.mxu0 %v1334
      %v1402 = vpop.f32.mrf.mxu0
      %v1403 = vadd.f32 0.0, %v1402
      %v1404 = vpop.f32.mrf.mxu0
      %v1405 = vadd.f32 0.0, %v1404
      %1406 = vmatmul.bf16.gmra.mxu0 %v1337
      %v1407 = vpop.f32.mrf.mxu0
      %v1408 = vadd.f32 0.0, %v1407
      %v1409 = vpop.f32.mrf.mxu0
      %v1410 = vadd.f32 0.0, %v1409
      %1411 = vmatmul.bf16.gmra.mxu0 %v1340
      %v1412 = vpop.f32.mrf.mxu0
      %v1413 = vadd.f32 0.0, %v1412
      %v1414 = vpop.f32.mrf.mxu0
      %v1415 = vadd.f32 0.0, %v1414
      %1416 = vmatmul.bf16.gmra.mxu0 %v1343
      %v1417 = vpop.f32.mrf.mxu0
      %v1418 = vadd.f32 0.0, %v1417
      %v1419 = vpop.f32.mrf.mxu0
      %v1420 = vadd.f32 0.0, %v1419
      %1421 = vmatmul.bf16.gmra.mxu0 %v1346
      %v1422 = vpop.f32.mrf.mxu0
      %v1423 = vadd.f32 0.0, %v1422
      %v1424 = vpop.f32.mrf.mxu0
      %v1425 = vadd.f32 0.0, %v1424
      %1426 = vmatmul.bf16.gmra.mxu0 %v1349
      %v1427 = vpop.f32.mrf.mxu0
      %v1428 = vadd.f32 0.0, %v1427
      %v1429 = vpop.f32.mrf.mxu0
      %v1430 = vadd.f32 0.0, %v1429
      %1431 = vmatmul.bf16.gmra.mxu0 %v1352
      %v1432 = vpop.f32.mrf.mxu0
      %v1433 = vadd.f32 0.0, %v1432
      %v1434 = vpop.f32.mrf.mxu0
      %v1435 = vadd.f32 0.0, %v1434
      %1436 = vmatmul.bf16.gmra.mxu0 %v1355
      %v1437 = vpop.f32.mrf.mxu0
      %v1438 = vadd.f32 0.0, %v1437
      %v1439 = vpop.f32.mrf.mxu0
      %v1440 = vadd.f32 0.0, %v1439
      %1441 = vmatmul.bf16.gmra.mxu0 %v1358
      %v1442 = vpop.f32.mrf.mxu0
      %v1443 = vadd.f32 0.0, %v1442
      %v1444 = vpop.f32.mrf.mxu0
      %v1445 = vadd.f32 0.0, %v1444
      %1446 = vmatmul.bf16.gmra.mxu0 %v1361
      %v1447 = vpop.f32.mrf.mxu0
      %v1448 = vadd.f32 0.0, %v1447
      %v1449 = vpop.f32.mrf.mxu0
      %v1450 = vadd.f32 0.0, %v1449
      %1451 = vdwg.mxu0
      %v1452 = vadd.f32 %v1186, %v1373
      %v1453 = vadd.f32 %v1187, %v1375
      %v1454 = vadd.f32 %v1188, %v1378
      %v1455 = vadd.f32 %v1189, %v1380
      %v1456 = vadd.f32 %v1190, %v1383
      %v1457 = vadd.f32 %v1191, %v1385
      %v1458 = vadd.f32 %v1192, %v1388
      %v1459 = vadd.f32 %v1193, %v1390
      %v1460 = vadd.f32 %v1194, %v1393
      %v1461 = vadd.f32 %v1195, %v1395
      %v1462 = vadd.f32 %v1196, %v1398
      %v1463 = vadd.f32 %v1197, %v1400
      %v1464 = vadd.f32 %v1198, %v1403
      %v1465 = vadd.f32 %v1199, %v1405
      %v1466 = vadd.f32 %v1200, %v1408
      %v1467 = vadd.f32 %v1201, %v1410
      %v1468 = vadd.f32 %v1202, %v1413
      %v1469 = vadd.f32 %v1203, %v1415
      %v1470 = vadd.f32 %v1204, %v1418
      %v1471 = vadd.f32 %v1205, %v1420
      %v1472 = vadd.f32 %v1206, %v1423
      %v1473 = vadd.f32 %v1207, %v1425
      %v1474 = vadd.f32 %v1208, %v1428
      %v1475 = vadd.f32 %v1209, %v1430
      %v1476 = vadd.f32 %v1210, %v1433
      %v1477 = vadd.f32 %v1211, %v1435
      %v1478 = vadd.f32 %v1212, %v1438
      %v1479 = vadd.f32 %v1213, %v1440
      %v1480 = vadd.f32 %v1214, %v1443
      %v1481 = vadd.f32 %v1215, %v1445
      %v1482 = vadd.f32 %v1216, %v1448
      %v1483 = vadd.f32 %v1217, %v1450
      %v1484 = vld [vmem:[%s3 + $0x30] sm:$0xf]
      %v1485 = vld [vmem:[%s3 + $0x34] sm:$0xf]
      %v1486 = vld [vmem:[%s3 + $0x38] sm:$0xf]
      %v1487 = vld [vmem:[%s3 + $0x3c] sm:$0xf]
      %v1492 = vunpack.c.l.b16 %v1484
      %v1493 = vunpack.c.l.b16 %v1485
      %v1494 = vunpack.c.l.b16 %v1486
      %v1495 = vunpack.c.l.b16 %v1487
      %v1496 = vpack.c.b16 %v1493, %v1492
      %v1497 = vpack.c.b16 %v1495, %v1494
      %v1501 = vsel %vm686, %v645, 0
      %1503 = vmatpush.bf16.msra.mxu0 0
      %1504 = vmatpush.bf16.msra.mxu0 0
      %1505 = vmatpush.bf16.msra.mxu0 0
      %1506 = vmatpush.bf16.msra.mxu0 0
      %1507 = vmatpush.bf16.msra.mxu0 0
      %1508 = vmatpush.bf16.msra.mxu0 0
      %1509 = vmatpush.bf16.msra.mxu0 %v1497
      %1510 = vmatpush.bf16.msra.mxu0 %v1496
      %1511 = vmatmul.bf16.gmra.mxu0 %v691
      %v1512 = vpop.f32.mrf.mxu0
      %v1513 = vadd.f32 0.0, %v1512
      %v1514 = vpop.f32.mrf.mxu0
      %v1515 = vadd.f32 0.0, %v1514
      %1516 = vmatmul.bf16.gmra.mxu0 %v694
      %v1517 = vpop.f32.mrf.mxu0
      %v1518 = vadd.f32 0.0, %v1517
      %v1519 = vpop.f32.mrf.mxu0
      %v1520 = vadd.f32 0.0, %v1519
      %1521 = vmatmul.bf16.gmra.mxu0 %v697
      %v1522 = vpop.f32.mrf.mxu0
      %v1523 = vadd.f32 0.0, %v1522
      %v1524 = vpop.f32.mrf.mxu0
      %v1525 = vadd.f32 0.0, %v1524
      %1526 = vmatmul.bf16.gmra.mxu0 %v700
      %v1527 = vpop.f32.mrf.mxu0
      %v1528 = vadd.f32 0.0, %v1527
      %v1529 = vpop.f32.mrf.mxu0
      %v1530 = vadd.f32 0.0, %v1529
      %1531 = vmatmul.bf16.gmra.mxu0 %v703
      %v1532 = vpop.f32.mrf.mxu0
      %v1533 = vadd.f32 0.0, %v1532
      %v1534 = vpop.f32.mrf.mxu0
      %v1535 = vadd.f32 0.0, %v1534
      %1536 = vmatmul.bf16.gmra.mxu0 %v706
      %v1537 = vpop.f32.mrf.mxu0
      %v1538 = vadd.f32 0.0, %v1537
      %v1539 = vpop.f32.mrf.mxu0
      %v1540 = vadd.f32 0.0, %v1539
      %1541 = vmatmul.bf16.gmra.mxu0 %v709
      %v1542 = vpop.f32.mrf.mxu0
      %v1543 = vadd.f32 0.0, %v1542
      %v1544 = vpop.f32.mrf.mxu0
      %v1545 = vadd.f32 0.0, %v1544
      %1546 = vmatmul.bf16.gmra.mxu0 %v712
      %v1547 = vpop.f32.mrf.mxu0
      %v1548 = vadd.f32 0.0, %v1547
      %v1549 = vpop.f32.mrf.mxu0
      %v1550 = vadd.f32 0.0, %v1549
      %1551 = vmatmul.bf16.gmra.mxu0 %v715
      %v1552 = vpop.f32.mrf.mxu0
      %v1553 = vadd.f32 0.0, %v1552
      %v1554 = vpop.f32.mrf.mxu0
      %v1555 = vadd.f32 0.0, %v1554
      %1556 = vmatmul.bf16.gmra.mxu0 %v718
      %v1557 = vpop.f32.mrf.mxu0
      %v1558 = vadd.f32 0.0, %v1557
      %v1559 = vpop.f32.mrf.mxu0
      %v1560 = vadd.f32 0.0, %v1559
      %1561 = vmatmul.bf16.gmra.mxu0 %v721
      %v1562 = vpop.f32.mrf.mxu0
      %v1563 = vadd.f32 0.0, %v1562
      %v1564 = vpop.f32.mrf.mxu0
      %v1565 = vadd.f32 0.0, %v1564
      %1566 = vmatmul.bf16.gmra.mxu0 %v724
      %v1567 = vpop.f32.mrf.mxu0
      %v1568 = vadd.f32 0.0, %v1567
      %v1569 = vpop.f32.mrf.mxu0
      %v1570 = vadd.f32 0.0, %v1569
      %1571 = vmatmul.bf16.gmra.mxu0 %v727
      %v1572 = vpop.f32.mrf.mxu0
      %v1573 = vadd.f32 0.0, %v1572
      %v1574 = vpop.f32.mrf.mxu0
      %v1575 = vadd.f32 0.0, %v1574
      %1576 = vmatmul.bf16.gmra.mxu0 %v730
      %v1577 = vpop.f32.mrf.mxu0
      %v1578 = vadd.f32 0.0, %v1577
      %v1579 = vpop.f32.mrf.mxu0
      %v1580 = vadd.f32 0.0, %v1579
      %1581 = vmatmul.bf16.gmra.mxu0 %v733
      %v1582 = vpop.f32.mrf.mxu0
      %v1583 = vadd.f32 0.0, %v1582
      %v1584 = vpop.f32.mrf.mxu0
      %v1585 = vadd.f32 0.0, %v1584
      %1586 = vmatmul.bf16.gmra.mxu0 %v1501
      %v1587 = vpop.f32.mrf.mxu0
      %v1588 = vadd.f32 0.0, %v1587
      %v1589 = vpop.f32.mrf.mxu0
      %v1590 = vadd.f32 0.0, %v1589
      %1591 = vdwg.mxu0
      %v1592 = vadd.f32 %v1452, %v1513
      %v1593 = vadd.f32 %v1453, %v1515
      %v1594 = vadd.f32 %v1454, %v1518
      %v1595 = vadd.f32 %v1455, %v1520
      %v1596 = vadd.f32 %v1456, %v1523
      %v1597 = vadd.f32 %v1457, %v1525
      %v1598 = vadd.f32 %v1458, %v1528
      %v1599 = vadd.f32 %v1459, %v1530
      %v1600 = vadd.f32 %v1460, %v1533
      %v1601 = vadd.f32 %v1461, %v1535
      %v1602 = vadd.f32 %v1462, %v1538
      %v1603 = vadd.f32 %v1463, %v1540
      %v1604 = vadd.f32 %v1464, %v1543
      %v1605 = vadd.f32 %v1465, %v1545
      %v1606 = vadd.f32 %v1466, %v1548
      %v1607 = vadd.f32 %v1467, %v1550
      %v1608 = vadd.f32 %v1468, %v1553
      %v1609 = vadd.f32 %v1469, %v1555
      %v1610 = vadd.f32 %v1470, %v1558
      %v1611 = vadd.f32 %v1471, %v1560
      %v1612 = vadd.f32 %v1472, %v1563
      %v1613 = vadd.f32 %v1473, %v1565
      %v1614 = vadd.f32 %v1474, %v1568
      %v1615 = vadd.f32 %v1475, %v1570
      %v1616 = vadd.f32 %v1476, %v1573
      %v1617 = vadd.f32 %v1477, %v1575
      %v1618 = vadd.f32 %v1478, %v1578
      %v1619 = vadd.f32 %v1479, %v1580
      %v1620 = vadd.f32 %v1480, %v1583
      %v1621 = vadd.f32 %v1481, %v1585
      %v1622 = vadd.f32 %v1482, %v1588
      %v1623 = vadd.f32 %v1483, %v1590
      %v1624 = vshrl.u32 %v645, 16
      %v1626 = vshll.u32 %v645, 16
      %v1628 = vrot.slane %v1626, 1
      %v1629 = vor.u32 %v1624, %v1628
      %v1631 = vshll.u32 %v663, 16
      %v1633 = vrot.slane %v1631, 1
      %v1634 = vsel %vm856, %v1629, %v1633
      %v1635 = vld [vmem:[%s3 + $0x40] sm:$0xf]
      %v1636 = vld [vmem:[%s3 + $0x44] sm:$0xf]
      %v1637 = vld [vmem:[%s3 + $0x48] sm:$0xf]
      %v1638 = vld [vmem:[%s3 + $0x4c] sm:$0xf]
      %v1643 = vunpack.c.l.b16 %v1635
      %v1644 = vunpack.c.l.b16 %v1636
      %v1645 = vunpack.c.l.b16 %v1637
      %v1646 = vunpack.c.l.b16 %v1638
      %v1647 = vpack.c.b16 %v1644, %v1643
      %v1648 = vpack.c.b16 %v1646, %v1645
      %v1652 = vsel %vm686, %v1634, 0
      %1654 = vmatpush.bf16.msra.mxu0 0
      %1655 = vmatpush.bf16.msra.mxu0 0
      %1656 = vmatpush.bf16.msra.mxu0 0
      %1657 = vmatpush.bf16.msra.mxu0 0
      %1658 = vmatpush.bf16.msra.mxu0 0
      %1659 = vmatpush.bf16.msra.mxu0 0
      %1660 = vmatpush.bf16.msra.mxu0 %v1648
      %1661 = vmatpush.bf16.msra.mxu0 %v1647
      %1662 = vmatmul.bf16.gmra.mxu0 %v1053
      %v1663 = vpop.f32.mrf.mxu0
      %v1664 = vadd.f32 0.0, %v1663
      %v1665 = vpop.f32.mrf.mxu0
      %v1666 = vadd.f32 0.0, %v1665
      %1667 = vmatmul.bf16.gmra.mxu0 %v1056
      %v1668 = vpop.f32.mrf.mxu0
      %v1669 = vadd.f32 0.0, %v1668
      %v1670 = vpop.f32.mrf.mxu0
      %v1671 = vadd.f32 0.0, %v1670
      %1672 = vmatmul.bf16.gmra.mxu0 %v1059
      %v1673 = vpop.f32.mrf.mxu0
      %v1674 = vadd.f32 0.0, %v1673
      %v1675 = vpop.f32.mrf.mxu0
      %v1676 = vadd.f32 0.0, %v1675
      %1677 = vmatmul.bf16.gmra.mxu0 %v1062
      %v1678 = vpop.f32.mrf.mxu0
      %v1679 = vadd.f32 0.0, %v1678
      %v1680 = vpop.f32.mrf.mxu0
      %v1681 = vadd.f32 0.0, %v1680
      %1682 = vmatmul.bf16.gmra.mxu0 %v1065
      %v1683 = vpop.f32.mrf.mxu0
      %v1684 = vadd.f32 0.0, %v1683
      %v1685 = vpop.f32.mrf.mxu0
      %v1686 = vadd.f32 0.0, %v1685
      %1687 = vmatmul.bf16.gmra.mxu0 %v1068
      %v1688 = vpop.f32.mrf.mxu0
      %v1689 = vadd.f32 0.0, %v1688
      %v1690 = vpop.f32.mrf.mxu0
      %v1691 = vadd.f32 0.0, %v1690
      %1692 = vmatmul.bf16.gmra.mxu0 %v1071
      %v1693 = vpop.f32.mrf.mxu0
      %v1694 = vadd.f32 0.0, %v1693
      %v1695 = vpop.f32.mrf.mxu0
      %v1696 = vadd.f32 0.0, %v1695
      %1697 = vmatmul.bf16.gmra.mxu0 %v1074
      %v1698 = vpop.f32.mrf.mxu0
      %v1699 = vadd.f32 0.0, %v1698
      %v1700 = vpop.f32.mrf.mxu0
      %v1701 = vadd.f32 0.0, %v1700
      %1702 = vmatmul.bf16.gmra.mxu0 %v1077
      %v1703 = vpop.f32.mrf.mxu0
      %v1704 = vadd.f32 0.0, %v1703
      %v1705 = vpop.f32.mrf.mxu0
      %v1706 = vadd.f32 0.0, %v1705
      %1707 = vmatmul.bf16.gmra.mxu0 %v1080
      %v1708 = vpop.f32.mrf.mxu0
      %v1709 = vadd.f32 0.0, %v1708
      %v1710 = vpop.f32.mrf.mxu0
      %v1711 = vadd.f32 0.0, %v1710
      %1712 = vmatmul.bf16.gmra.mxu0 %v1083
      %v1713 = vpop.f32.mrf.mxu0
      %v1714 = vadd.f32 0.0, %v1713
      %v1715 = vpop.f32.mrf.mxu0
      %v1716 = vadd.f32 0.0, %v1715
      %1717 = vmatmul.bf16.gmra.mxu0 %v1086
      %v1718 = vpop.f32.mrf.mxu0
      %v1719 = vadd.f32 0.0, %v1718
      %v1720 = vpop.f32.mrf.mxu0
      %v1721 = vadd.f32 0.0, %v1720
      %1722 = vmatmul.bf16.gmra.mxu0 %v1089
      %v1723 = vpop.f32.mrf.mxu0
      %v1724 = vadd.f32 0.0, %v1723
      %v1725 = vpop.f32.mrf.mxu0
      %v1726 = vadd.f32 0.0, %v1725
      %1727 = vmatmul.bf16.gmra.mxu0 %v1092
      %v1728 = vpop.f32.mrf.mxu0
      %v1729 = vadd.f32 0.0, %v1728
      %v1730 = vpop.f32.mrf.mxu0
      %v1731 = vadd.f32 0.0, %v1730
      %1732 = vmatmul.bf16.gmra.mxu0 %v1095
      %v1733 = vpop.f32.mrf.mxu0
      %v1734 = vadd.f32 0.0, %v1733
      %v1735 = vpop.f32.mrf.mxu0
      %v1736 = vadd.f32 0.0, %v1735
      %1737 = vmatmul.bf16.gmra.mxu0 %v1652
      %v1738 = vpop.f32.mrf.mxu0
      %v1739 = vadd.f32 0.0, %v1738
      %v1740 = vpop.f32.mrf.mxu0
      %v1741 = vadd.f32 0.0, %v1740
      %1742 = vdwg.mxu0
      %v1743 = vadd.f32 %v1592, %v1664
      %v1744 = vadd.f32 %v1593, %v1666
      %v1745 = vadd.f32 %v1594, %v1669
      %v1746 = vadd.f32 %v1595, %v1671
      %v1747 = vadd.f32 %v1596, %v1674
      %v1748 = vadd.f32 %v1597, %v1676
      %v1749 = vadd.f32 %v1598, %v1679
      %v1750 = vadd.f32 %v1599, %v1681
      %v1751 = vadd.f32 %v1600, %v1684
      %v1752 = vadd.f32 %v1601, %v1686
      %v1753 = vadd.f32 %v1602, %v1689
      %v1754 = vadd.f32 %v1603, %v1691
      %v1755 = vadd.f32 %v1604, %v1694
      %v1756 = vadd.f32 %v1605, %v1696
      %v1757 = vadd.f32 %v1606, %v1699
      %v1758 = vadd.f32 %v1607, %v1701
      %v1759 = vadd.f32 %v1608, %v1704
      %v1760 = vadd.f32 %v1609, %v1706
      %v1761 = vadd.f32 %v1610, %v1709
      %v1762 = vadd.f32 %v1611, %v1711
      %v1763 = vadd.f32 %v1612, %v1714
      %v1764 = vadd.f32 %v1613, %v1716
      %v1765 = vadd.f32 %v1614, %v1719
      %v1766 = vadd.f32 %v1615, %v1721
      %v1767 = vadd.f32 %v1616, %v1724
      %v1768 = vadd.f32 %v1617, %v1726
      %v1769 = vadd.f32 %v1618, %v1729
      %v1770 = vadd.f32 %v1619, %v1731
      %v1771 = vadd.f32 %v1620, %v1734
      %v1772 = vadd.f32 %v1621, %v1736
      %v1773 = vadd.f32 %v1622, %v1739
      %v1774 = vadd.f32 %v1623, %v1741
      %v1777 = vrot.slane %v645, 1
      %v1778 = vrot.slane %v663, 1
      %v1779 = vsel %vm1250, %v1777, %v1778
      %v1780 = vld [vmem:[%s3 + $0x50] sm:$0xf]
      %v1781 = vld [vmem:[%s3 + $0x54] sm:$0xf]
      %v1782 = vld [vmem:[%s3 + $0x58] sm:$0xf]
      %v1783 = vld [vmem:[%s3 + $0x5c] sm:$0xf]
      %v1788 = vunpack.c.l.b16 %v1780
      %v1789 = vunpack.c.l.b16 %v1781
      %v1790 = vunpack.c.l.b16 %v1782
      %v1791 = vunpack.c.l.b16 %v1783
      %v1792 = vpack.c.b16 %v1789, %v1788
      %v1793 = vpack.c.b16 %v1791, %v1790
      %v1797 = vsel %vm686, %v1779, 0
      %1799 = vmatpush.bf16.msra.mxu0 0
      %1800 = vmatpush.bf16.msra.mxu0 0
      %1801 = vmatpush.bf16.msra.mxu0 0
      %1802 = vmatpush.bf16.msra.mxu0 0
      %1803 = vmatpush.bf16.msra.mxu0 0
      %1804 = vmatpush.bf16.msra.mxu0 0
      %1805 = vmatpush.bf16.msra.mxu0 %v1793
      %1806 = vmatpush.bf16.msra.mxu0 %v1792
      %1807 = vmatmul.bf16.gmra.mxu0 %v1319
      %v1808 = vpop.f32.mrf.mxu0
      %v1809 = vadd.f32 0.0, %v1808
      %v1810 = vpop.f32.mrf.mxu0
      %v1811 = vadd.f32 0.0, %v1810
      %1812 = vmatmul.bf16.gmra.mxu0 %v1322
      %v1813 = vpop.f32.mrf.mxu0
      %v1814 = vadd.f32 0.0, %v1813
      %v1815 = vpop.f32.mrf.mxu0
      %v1816 = vadd.f32 0.0, %v1815
      %1817 = vmatmul.bf16.gmra.mxu0 %v1325
      %v1818 = vpop.f32.mrf.mxu0
      %v1819 = vadd.f32 0.0, %v1818
      %v1820 = vpop.f32.mrf.mxu0
      %v1821 = vadd.f32 0.0, %v1820
      %1822 = vmatmul.bf16.gmra.mxu0 %v1328
      %v1823 = vpop.f32.mrf.mxu0
      %v1824 = vadd.f32 0.0, %v1823
      %v1825 = vpop.f32.mrf.mxu0
      %v1826 = vadd.f32 0.0, %v1825
      %1827 = vmatmul.bf16.gmra.mxu0 %v1331
      %v1828 = vpop.f32.mrf.mxu0
      %v1829 = vadd.f32 0.0, %v1828
      %v1830 = vpop.f32.mrf.mxu0
      %v1831 = vadd.f32 0.0, %v1830
      %1832 = vmatmul.bf16.gmra.mxu0 %v1334
      %v1833 = vpop.f32.mrf.mxu0
      %v1834 = vadd.f32 0.0, %v1833
      %v1835 = vpop.f32.mrf.mxu0
      %v1836 = vadd.f32 0.0, %v1835
      %1837 = vmatmul.bf16.gmra.mxu0 %v1337
      %v1838 = vpop.f32.mrf.mxu0
      %v1839 = vadd.f32 0.0, %v1838
      %v1840 = vpop.f32.mrf.mxu0
      %v1841 = vadd.f32 0.0, %v1840
      %1842 = vmatmul.bf16.gmra.mxu0 %v1340
      %v1843 = vpop.f32.mrf.mxu0
      %v1844 = vadd.f32 0.0, %v1843
      %v1845 = vpop.f32.mrf.mxu0
      %v1846 = vadd.f32 0.0, %v1845
      %1847 = vmatmul.bf16.gmra.mxu0 %v1343
      %v1848 = vpop.f32.mrf.mxu0
      %v1849 = vadd.f32 0.0, %v1848
      %v1850 = vpop.f32.mrf.mxu0
      %v1851 = vadd.f32 0.0, %v1850
      %1852 = vmatmul.bf16.gmra.mxu0 %v1346
      %v1853 = vpop.f32.mrf.mxu0
      %v1854 = vadd.f32 0.0, %v1853
      %v1855 = vpop.f32.mrf.mxu0
      %v1856 = vadd.f32 0.0, %v1855
      %1857 = vmatmul.bf16.gmra.mxu0 %v1349
      %v1858 = vpop.f32.mrf.mxu0
      %v1859 = vadd.f32 0.0, %v1858
      %v1860 = vpop.f32.mrf.mxu0
      %v1861 = vadd.f32 0.0, %v1860
      %1862 = vmatmul.bf16.gmra.mxu0 %v1352
      %v1863 = vpop.f32.mrf.mxu0
      %v1864 = vadd.f32 0.0, %v1863
      %v1865 = vpop.f32.mrf.mxu0
      %v1866 = vadd.f32 0.0, %v1865
      %1867 = vmatmul.bf16.gmra.mxu0 %v1355
      %v1868 = vpop.f32.mrf.mxu0
      %v1869 = vadd.f32 0.0, %v1868
      %v1870 = vpop.f32.mrf.mxu0
      %v1871 = vadd.f32 0.0, %v1870
      %1872 = vmatmul.bf16.gmra.mxu0 %v1358
      %v1873 = vpop.f32.mrf.mxu0
      %v1874 = vadd.f32 0.0, %v1873
      %v1875 = vpop.f32.mrf.mxu0
      %v1876 = vadd.f32 0.0, %v1875
      %1877 = vmatmul.bf16.gmra.mxu0 %v1361
      %v1878 = vpop.f32.mrf.mxu0
      %v1879 = vadd.f32 0.0, %v1878
      %v1880 = vpop.f32.mrf.mxu0
      %v1881 = vadd.f32 0.0, %v1880
      %1882 = vmatmul.bf16.gmra.mxu0 %v1797
      %v1883 = vpop.f32.mrf.mxu0
      %v1884 = vadd.f32 0.0, %v1883
      %v1885 = vpop.f32.mrf.mxu0
      %v1886 = vadd.f32 0.0, %v1885
      %1887 = vdwg.mxu0
      %v1888 = vadd.f32 %v1743, %v1809
      %v1889 = vadd.f32 %v1744, %v1811
      %v1890 = vadd.f32 %v1745, %v1814
      %v1891 = vadd.f32 %v1746, %v1816
      %v1892 = vadd.f32 %v1747, %v1819
      %v1893 = vadd.f32 %v1748, %v1821
      %v1894 = vadd.f32 %v1749, %v1824
      %v1895 = vadd.f32 %v1750, %v1826
      %v1896 = vadd.f32 %v1751, %v1829
      %v1897 = vadd.f32 %v1752, %v1831
      %v1898 = vadd.f32 %v1753, %v1834
      %v1899 = vadd.f32 %v1754, %v1836
      %v1900 = vadd.f32 %v1755, %v1839
      %v1901 = vadd.f32 %v1756, %v1841
      %v1902 = vadd.f32 %v1757, %v1844
      %v1903 = vadd.f32 %v1758, %v1846
      %v1904 = vadd.f32 %v1759, %v1849
      %v1905 = vadd.f32 %v1760, %v1851
      %v1906 = vadd.f32 %v1761, %v1854
      %v1907 = vadd.f32 %v1762, %v1856
      %v1908 = vadd.f32 %v1763, %v1859
      %v1909 = vadd.f32 %v1764, %v1861
      %v1910 = vadd.f32 %v1765, %v1864
      %v1911 = vadd.f32 %v1766, %v1866
      %v1912 = vadd.f32 %v1767, %v1869
      %v1913 = vadd.f32 %v1768, %v1871
      %v1914 = vadd.f32 %v1769, %v1874
      %v1915 = vadd.f32 %v1770, %v1876
      %v1916 = vadd.f32 %v1771, %v1879
      %v1917 = vadd.f32 %v1772, %v1881
      %v1918 = vadd.f32 %v1773, %v1884
      %v1919 = vadd.f32 %v1774, %v1886
      %v1920 = vld [vmem:[%s3 + $0x60] sm:$0xf]
      %v1921 = vld [vmem:[%s3 + $0x64] sm:$0xf]
      %v1922 = vld [vmem:[%s3 + $0x68] sm:$0xf]
      %v1923 = vld [vmem:[%s3 + $0x6c] sm:$0xf]
      %v1928 = vunpack.c.l.b16 %v1920
      %v1929 = vunpack.c.l.b16 %v1921
      %v1930 = vunpack.c.l.b16 %v1922
      %v1931 = vunpack.c.l.b16 %v1923
      %v1932 = vpack.c.b16 %v1929, %v1928
      %v1933 = vpack.c.b16 %v1931, %v1930
      %v1937 = vsel %vm686, %v646, 0
      %1939 = vmatpush.bf16.msra.mxu0 0
      %1940 = vmatpush.bf16.msra.mxu0 0
      %1941 = vmatpush.bf16.msra.mxu0 0
      %1942 = vmatpush.bf16.msra.mxu0 0
      %1943 = vmatpush.bf16.msra.mxu0 0
      %1944 = vmatpush.bf16.msra.mxu0 0
      %1945 = vmatpush.bf16.msra.mxu0 %v1933
      %1946 = vmatpush.bf16.msra.mxu0 %v1932
      %1947 = vmatmul.bf16.gmra.mxu0 %v694
      %v1948 = vpop.f32.mrf.mxu0
      %v1949 = vadd.f32 0.0, %v1948
      %v1950 = vpop.f32.mrf.mxu0
      %v1951 = vadd.f32 0.0, %v1950
      %1952 = vmatmul.bf16.gmra.mxu0 %v697
      %v1953 = vpop.f32.mrf.mxu0
      %v1954 = vadd.f32 0.0, %v1953
      %v1955 = vpop.f32.mrf.mxu0
      %v1956 = vadd.f32 0.0, %v1955
      %1957 = vmatmul.bf16.gmra.mxu0 %v700
      %v1958 = vpop.f32.mrf.mxu0
      %v1959 = vadd.f32 0.0, %v1958
      %v1960 = vpop.f32.mrf.mxu0
      %v1961 = vadd.f32 0.0, %v1960
      %1962 = vmatmul.bf16.gmra.mxu0 %v703
      %v1963 = vpop.f32.mrf.mxu0
      %v1964 = vadd.f32 0.0, %v1963
      %v1965 = vpop.f32.mrf.mxu0
      %v1966 = vadd.f32 0.0, %v1965
      %1967 = vmatmul.bf16.gmra.mxu0 %v706
      %v1968 = vpop.f32.mrf.mxu0
      %v1969 = vadd.f32 0.0, %v1968
      %v1970 = vpop.f32.mrf.mxu0
      %v1971 = vadd.f32 0.0, %v1970
      %1972 = vmatmul.bf16.gmra.mxu0 %v709
      %v1973 = vpop.f32.mrf.mxu0
      %v1974 = vadd.f32 0.0, %v1973
      %v1975 = vpop.f32.mrf.mxu0
      %v1976 = vadd.f32 0.0, %v1975
      %1977 = vmatmul.bf16.gmra.mxu0 %v712
      %v1978 = vpop.f32.mrf.mxu0
      %v1979 = vadd.f32 0.0, %v1978
      %v1980 = vpop.f32.mrf.mxu0
      %v1981 = vadd.f32 0.0, %v1980
      %1982 = vmatmul.bf16.gmra.mxu0 %v715
      %v1983 = vpop.f32.mrf.mxu0
      %v1984 = vadd.f32 0.0, %v1983
      %v1985 = vpop.f32.mrf.mxu0
      %v1986 = vadd.f32 0.0, %v1985
      %1987 = vmatmul.bf16.gmra.mxu0 %v718
      %v1988 = vpop.f32.mrf.mxu0
      %v1989 = vadd.f32 0.0, %v1988
      %v1990 = vpop.f32.mrf.mxu0
      %v1991 = vadd.f32 0.0, %v1990
      %1992 = vmatmul.bf16.gmra.mxu0 %v721
      %v1993 = vpop.f32.mrf.mxu0
      %v1994 = vadd.f32 0.0, %v1993
      %v1995 = vpop.f32.mrf.mxu0
      %v1996 = vadd.f32 0.0, %v1995
      %1997 = vmatmul.bf16.gmra.mxu0 %v724
      %v1998 = vpop.f32.mrf.mxu0
      %v1999 = vadd.f32 0.0, %v1998
      %v2000 = vpop.f32.mrf.mxu0
      %v2001 = vadd.f32 0.0, %v2000
      %2002 = vmatmul.bf16.gmra.mxu0 %v727
      %v2003 = vpop.f32.mrf.mxu0
      %v2004 = vadd.f32 0.0, %v2003
      %v2005 = vpop.f32.mrf.mxu0
      %v2006 = vadd.f32 0.0, %v2005
      %2007 = vmatmul.bf16.gmra.mxu0 %v730
      %v2008 = vpop.f32.mrf.mxu0
      %v2009 = vadd.f32 0.0, %v2008
      %v2010 = vpop.f32.mrf.mxu0
      %v2011 = vadd.f32 0.0, %v2010
      %2012 = vmatmul.bf16.gmra.mxu0 %v733
      %v2013 = vpop.f32.mrf.mxu0
      %v2014 = vadd.f32 0.0, %v2013
      %v2015 = vpop.f32.mrf.mxu0
      %v2016 = vadd.f32 0.0, %v2015
      %2017 = vmatmul.bf16.gmra.mxu0 %v1501
      %v2018 = vpop.f32.mrf.mxu0
      %v2019 = vadd.f32 0.0, %v2018
      %v2020 = vpop.f32.mrf.mxu0
      %v2021 = vadd.f32 0.0, %v2020
      %2022 = vmatmul.bf16.gmra.mxu0 %v1937
      %v2023 = vpop.f32.mrf.mxu0
      %v2024 = vadd.f32 0.0, %v2023
      %v2025 = vpop.f32.mrf.mxu0
      %v2026 = vadd.f32 0.0, %v2025
      %2027 = vdwg.mxu0
      %v2028 = vadd.f32 %v1888, %v1949
      %v2029 = vadd.f32 %v1889, %v1951
      %v2030 = vadd.f32 %v1890, %v1954
      %v2031 = vadd.f32 %v1891, %v1956
      %v2032 = vadd.f32 %v1892, %v1959
      %v2033 = vadd.f32 %v1893, %v1961
      %v2034 = vadd.f32 %v1894, %v1964
      %v2035 = vadd.f32 %v1895, %v1966
      %v2036 = vadd.f32 %v1896, %v1969
      %v2037 = vadd.f32 %v1897, %v1971
      %v2038 = vadd.f32 %v1898, %v1974
      %v2039 = vadd.f32 %v1899, %v1976
      %v2040 = vadd.f32 %v1900, %v1979
      %v2041 = vadd.f32 %v1901, %v1981
      %v2042 = vadd.f32 %v1902, %v1984
      %v2043 = vadd.f32 %v1903, %v1986
      %v2044 = vadd.f32 %v1904, %v1989
      %v2045 = vadd.f32 %v1905, %v1991
      %v2046 = vadd.f32 %v1906, %v1994
      %v2047 = vadd.f32 %v1907, %v1996
      %v2048 = vadd.f32 %v1908, %v1999
      %v2049 = vadd.f32 %v1909, %v2001
      %v2050 = vadd.f32 %v1910, %v2004
      %v2051 = vadd.f32 %v1911, %v2006
      %v2052 = vadd.f32 %v1912, %v2009
      %v2053 = vadd.f32 %v1913, %v2011
      %v2054 = vadd.f32 %v1914, %v2014
      %v2055 = vadd.f32 %v1915, %v2016
      %v2056 = vadd.f32 %v1916, %v2019
      %v2057 = vadd.f32 %v1917, %v2021
      %v2058 = vadd.f32 %v1918, %v2024
      %v2059 = vadd.f32 %v1919, %v2026
      %v2060 = vshrl.u32 %v646, 16
      %v2062 = vshll.u32 %v646, 16
      %v2064 = vrot.slane %v2062, 1
      %v2065 = vor.u32 %v2060, %v2064
      %v2067 = vshll.u32 %v664, 16
      %v2069 = vrot.slane %v2067, 1
      %v2070 = vsel %vm856, %v2065, %v2069
      %v2071 = vld [vmem:[%s3 + $0x70] sm:$0xf]
      %v2072 = vld [vmem:[%s3 + $0x74] sm:$0xf]
      %v2073 = vld [vmem:[%s3 + $0x78] sm:$0xf]
      %v2074 = vld [vmem:[%s3 + $0x7c] sm:$0xf]
      %v2079 = vunpack.c.l.b16 %v2071
      %v2080 = vunpack.c.l.b16 %v2072
      %v2081 = vunpack.c.l.b16 %v2073
      %v2082 = vunpack.c.l.b16 %v2074
      %v2083 = vpack.c.b16 %v2080, %v2079
      %v2084 = vpack.c.b16 %v2082, %v2081
      %v2088 = vsel %vm686, %v2070, 0
      %2090 = vmatpush.bf16.msra.mxu0 0
      %2091 = vmatpush.bf16.msra.mxu0 0
      %2092 = vmatpush.bf16.msra.mxu0 0
      %2093 = vmatpush.bf16.msra.mxu0 0
      %2094 = vmatpush.bf16.msra.mxu0 0
      %2095 = vmatpush.bf16.msra.mxu0 0
      %2096 = vmatpush.bf16.msra.mxu0 %v2084
      %2097 = vmatpush.bf16.msra.mxu0 %v2083
      %2098 = vmatmul.bf16.gmra.mxu0 %v1056
      %v2099 = vpop.f32.mrf.mxu0
      %v2100 = vadd.f32 0.0, %v2099
      %v2101 = vpop.f32.mrf.mxu0
      %v2102 = vadd.f32 0.0, %v2101
      %2103 = vmatmul.bf16.gmra.mxu0 %v1059
      %v2104 = vpop.f32.mrf.mxu0
      %v2105 = vadd.f32 0.0, %v2104
      %v2106 = vpop.f32.mrf.mxu0
      %v2107 = vadd.f32 0.0, %v2106
      %2108 = vmatmul.bf16.gmra.mxu0 %v1062
      %v2109 = vpop.f32.mrf.mxu0
      %v2110 = vadd.f32 0.0, %v2109
      %v2111 = vpop.f32.mrf.mxu0
      %v2112 = vadd.f32 0.0, %v2111
      %2113 = vmatmul.bf16.gmra.mxu0 %v1065
      %v2114 = vpop.f32.mrf.mxu0
      %v2115 = vadd.f32 0.0, %v2114
      %v2116 = vpop.f32.mrf.mxu0
      %v2117 = vadd.f32 0.0, %v2116
      %2118 = vmatmul.bf16.gmra.mxu0 %v1068
      %v2119 = vpop.f32.mrf.mxu0
      %v2120 = vadd.f32 0.0, %v2119
      %v2121 = vpop.f32.mrf.mxu0
      %v2122 = vadd.f32 0.0, %v2121
      %2123 = vmatmul.bf16.gmra.mxu0 %v1071
      %v2124 = vpop.f32.mrf.mxu0
      %v2125 = vadd.f32 0.0, %v2124
      %v2126 = vpop.f32.mrf.mxu0
      %v2127 = vadd.f32 0.0, %v2126
      %2128 = vmatmul.bf16.gmra.mxu0 %v1074
      %v2129 = vpop.f32.mrf.mxu0
      %v2130 = vadd.f32 0.0, %v2129
      %v2131 = vpop.f32.mrf.mxu0
      %v2132 = vadd.f32 0.0, %v2131
      %2133 = vmatmul.bf16.gmra.mxu0 %v1077
      %v2134 = vpop.f32.mrf.mxu0
      %v2135 = vadd.f32 0.0, %v2134
      %v2136 = vpop.f32.mrf.mxu0
      %v2137 = vadd.f32 0.0, %v2136
      %2138 = vmatmul.bf16.gmra.mxu0 %v1080
      %v2139 = vpop.f32.mrf.mxu0
      %v2140 = vadd.f32 0.0, %v2139
      %v2141 = vpop.f32.mrf.mxu0
      %v2142 = vadd.f32 0.0, %v2141
      %2143 = vmatmul.bf16.gmra.mxu0 %v1083
      %v2144 = vpop.f32.mrf.mxu0
      %v2145 = vadd.f32 0.0, %v2144
      %v2146 = vpop.f32.mrf.mxu0
      %v2147 = vadd.f32 0.0, %v2146
      %2148 = vmatmul.bf16.gmra.mxu0 %v1086
      %v2149 = vpop.f32.mrf.mxu0
      %v2150 = vadd.f32 0.0, %v2149
      %v2151 = vpop.f32.mrf.mxu0
      %v2152 = vadd.f32 0.0, %v2151
      %2153 = vmatmul.bf16.gmra.mxu0 %v1089
      %v2154 = vpop.f32.mrf.mxu0
      %v2155 = vadd.f32 0.0, %v2154
      %v2156 = vpop.f32.mrf.mxu0
      %v2157 = vadd.f32 0.0, %v2156
      %2158 = vmatmul.bf16.gmra.mxu0 %v1092
      %v2159 = vpop.f32.mrf.mxu0
      %v2160 = vadd.f32 0.0, %v2159
      %v2161 = vpop.f32.mrf.mxu0
      %v2162 = vadd.f32 0.0, %v2161
      %2163 = vmatmul.bf16.gmra.mxu0 %v1095
      %v2164 = vpop.f32.mrf.mxu0
      %v2165 = vadd.f32 0.0, %v2164
      %v2166 = vpop.f32.mrf.mxu0
      %v2167 = vadd.f32 0.0, %v2166
      %2168 = vmatmul.bf16.gmra.mxu0 %v1652
      %v2169 = vpop.f32.mrf.mxu0
      %v2170 = vadd.f32 0.0, %v2169
      %v2171 = vpop.f32.mrf.mxu0
      %v2172 = vadd.f32 0.0, %v2171
      %2173 = vmatmul.bf16.gmra.mxu0 %v2088
      %v2174 = vpop.f32.mrf.mxu0
      %v2175 = vadd.f32 0.0, %v2174
      %v2176 = vpop.f32.mrf.mxu0
      %v2177 = vadd.f32 0.0, %v2176
      %2178 = vdwg.mxu0
      %v2179 = vadd.f32 %v2028, %v2100
      %v2180 = vadd.f32 %v2029, %v2102
      %v2181 = vadd.f32 %v2030, %v2105
      %v2182 = vadd.f32 %v2031, %v2107
      %v2183 = vadd.f32 %v2032, %v2110
      %v2184 = vadd.f32 %v2033, %v2112
      %v2185 = vadd.f32 %v2034, %v2115
      %v2186 = vadd.f32 %v2035, %v2117
      %v2187 = vadd.f32 %v2036, %v2120
      %v2188 = vadd.f32 %v2037, %v2122
      %v2189 = vadd.f32 %v2038, %v2125
      %v2190 = vadd.f32 %v2039, %v2127
      %v2191 = vadd.f32 %v2040, %v2130
      %v2192 = vadd.f32 %v2041, %v2132
      %v2193 = vadd.f32 %v2042, %v2135
      %v2194 = vadd.f32 %v2043, %v2137
      %v2195 = vadd.f32 %v2044, %v2140
      %v2196 = vadd.f32 %v2045, %v2142
      %v2197 = vadd.f32 %v2046, %v2145
      %v2198 = vadd.f32 %v2047, %v2147
      %v2199 = vadd.f32 %v2048, %v2150
      %v2200 = vadd.f32 %v2049, %v2152
      %v2201 = vadd.f32 %v2050, %v2155
      %v2202 = vadd.f32 %v2051, %v2157
      %v2203 = vadd.f32 %v2052, %v2160
      %v2204 = vadd.f32 %v2053, %v2162
      %v2205 = vadd.f32 %v2054, %v2165
      %v2206 = vadd.f32 %v2055, %v2167
      %v2207 = vadd.f32 %v2056, %v2170
      %v2208 = vadd.f32 %v2057, %v2172
      %v2209 = vadd.f32 %v2058, %v2175
      %v2210 = vadd.f32 %v2059, %v2177
      %v2213 = vrot.slane %v646, 1
      %v2214 = vrot.slane %v664, 1
      %v2215 = vsel %vm1250, %v2213, %v2214
      %v2216 = vld [vmem:[%s3 + $0x80] sm:$0xf]
      %v2217 = vld [vmem:[%s3 + $0x84] sm:$0xf]
      %v2218 = vld [vmem:[%s3 + $0x88] sm:$0xf]
      %v2219 = vld [vmem:[%s3 + $0x8c] sm:$0xf]
      %v2224 = vunpack.c.l.b16 %v2216
      %v2225 = vunpack.c.l.b16 %v2217
      %v2226 = vunpack.c.l.b16 %v2218
      %v2227 = vunpack.c.l.b16 %v2219
      %v2228 = vpack.c.b16 %v2225, %v2224
      %v2229 = vpack.c.b16 %v2227, %v2226
      %v2233 = vsel %vm686, %v2215, 0
      %2235 = vmatpush.bf16.msra.mxu0 0
      %2236 = vmatpush.bf16.msra.mxu0 0
      %2237 = vmatpush.bf16.msra.mxu0 0
      %2238 = vmatpush.bf16.msra.mxu0 0
      %2239 = vmatpush.bf16.msra.mxu0 0
      %2240 = vmatpush.bf16.msra.mxu0 0
      %2241 = vmatpush.bf16.msra.mxu0 %v2229
      %2242 = vmatpush.bf16.msra.mxu0 %v2228
      %2243 = vmatmul.bf16.gmra.mxu0 %v1322
      %v2244 = vpop.f32.mrf.mxu0
      %v2245 = vadd.f32 0.0, %v2244
      %v2246 = vpop.f32.mrf.mxu0
      %v2247 = vadd.f32 0.0, %v2246
      %2248 = vmatmul.bf16.gmra.mxu0 %v1325
      %v2249 = vpop.f32.mrf.mxu0
      %v2250 = vadd.f32 0.0, %v2249
      %v2251 = vpop.f32.mrf.mxu0
      %v2252 = vadd.f32 0.0, %v2251
      %2253 = vmatmul.bf16.gmra.mxu0 %v1328
      %v2254 = vpop.f32.mrf.mxu0
      %v2255 = vadd.f32 0.0, %v2254
      %v2256 = vpop.f32.mrf.mxu0
      %v2257 = vadd.f32 0.0, %v2256
      %2258 = vmatmul.bf16.gmra.mxu0 %v1331
      %v2259 = vpop.f32.mrf.mxu0
      %v2260 = vadd.f32 0.0, %v2259
      %v2261 = vpop.f32.mrf.mxu0
      %v2262 = vadd.f32 0.0, %v2261
      %2263 = vmatmul.bf16.gmra.mxu0 %v1334
      %v2264 = vpop.f32.mrf.mxu0
      %v2265 = vadd.f32 0.0, %v2264
      %v2266 = vpop.f32.mrf.mxu0
      %v2267 = vadd.f32 0.0, %v2266
      %2268 = vmatmul.bf16.gmra.mxu0 %v1337
      %v2269 = vpop.f32.mrf.mxu0
      %v2270 = vadd.f32 0.0, %v2269
      %v2271 = vpop.f32.mrf.mxu0
      %v2272 = vadd.f32 0.0, %v2271
      %2273 = vmatmul.bf16.gmra.mxu0 %v1340
      %v2274 = vpop.f32.mrf.mxu0
      %v2275 = vadd.f32 0.0, %v2274
      %v2276 = vpop.f32.mrf.mxu0
      %v2277 = vadd.f32 0.0, %v2276
      %2278 = vmatmul.bf16.gmra.mxu0 %v1343
      %v2279 = vpop.f32.mrf.mxu0
      %v2280 = vadd.f32 0.0, %v2279
      %v2281 = vpop.f32.mrf.mxu0
      %v2282 = vadd.f32 0.0, %v2281
      %2283 = vmatmul.bf16.gmra.mxu0 %v1346
      %v2284 = vpop.f32.mrf.mxu0
      %v2285 = vadd.f32 0.0, %v2284
      %v2286 = vpop.f32.mrf.mxu0
      %v2287 = vadd.f32 0.0, %v2286
      %2288 = vmatmul.bf16.gmra.mxu0 %v1349
      %v2289 = vpop.f32.mrf.mxu0
      %v2290 = vadd.f32 0.0, %v2289
      %v2291 = vpop.f32.mrf.mxu0
      %v2292 = vadd.f32 0.0, %v2291
      %2293 = vmatmul.bf16.gmra.mxu0 %v1352
      %v2294 = vpop.f32.mrf.mxu0
      %v2295 = vadd.f32 0.0, %v2294
      %v2296 = vpop.f32.mrf.mxu0
      %v2297 = vadd.f32 0.0, %v2296
      %2298 = vmatmul.bf16.gmra.mxu0 %v1355
      %v2299 = vpop.f32.mrf.mxu0
      %v2300 = vadd.f32 0.0, %v2299
      %v2301 = vpop.f32.mrf.mxu0
      %v2302 = vadd.f32 0.0, %v2301
      %2303 = vmatmul.bf16.gmra.mxu0 %v1358
      %v2304 = vpop.f32.mrf.mxu0
      %v2305 = vadd.f32 0.0, %v2304
      %v2306 = vpop.f32.mrf.mxu0
      %v2307 = vadd.f32 0.0, %v2306
      %2308 = vmatmul.bf16.gmra.mxu0 %v1361
      %v2309 = vpop.f32.mrf.mxu0
      %v2310 = vadd.f32 0.0, %v2309
      %v2311 = vpop.f32.mrf.mxu0
      %v2312 = vadd.f32 0.0, %v2311
      %2313 = vmatmul.bf16.gmra.mxu0 %v1797
      %v2314 = vpop.f32.mrf.mxu0
      %v2315 = vadd.f32 0.0, %v2314
      %v2316 = vpop.f32.mrf.mxu0
      %v2317 = vadd.f32 0.0, %v2316
      %2318 = vmatmul.bf16.gmra.mxu0 %v2233
      %v2319 = vpop.f32.mrf.mxu0
      %v2320 = vadd.f32 0.0, %v2319
      %v2321 = vpop.f32.mrf.mxu0
      %v2322 = vadd.f32 0.0, %v2321
      %2323 = vdwg.mxu0
      %v2324 = vadd.f32 %v2179, %v2245
      %v2325 = vadd.f32 %v2180, %v2247
      %v2326 = vadd.f32 %v2181, %v2250
      %v2327 = vadd.f32 %v2182, %v2252
      %v2328 = vadd.f32 %v2183, %v2255
      %v2329 = vadd.f32 %v2184, %v2257
      %v2330 = vadd.f32 %v2185, %v2260
      %v2331 = vadd.f32 %v2186, %v2262
      %v2332 = vadd.f32 %v2187, %v2265
      %v2333 = vadd.f32 %v2188, %v2267
      %v2334 = vadd.f32 %v2189, %v2270
      %v2335 = vadd.f32 %v2190, %v2272
      %v2336 = vadd.f32 %v2191, %v2275
      %v2337 = vadd.f32 %v2192, %v2277
      %v2338 = vadd.f32 %v2193, %v2280
      %v2339 = vadd.f32 %v2194, %v2282
      %v2340 = vadd.f32 %v2195, %v2285
      %v2341 = vadd.f32 %v2196, %v2287
      %v2342 = vadd.f32 %v2197, %v2290
      %v2343 = vadd.f32 %v2198, %v2292
      %v2344 = vadd.f32 %v2199, %v2295
      %v2345 = vadd.f32 %v2200, %v2297
      %v2346 = vadd.f32 %v2201, %v2300
      %v2347 = vadd.f32 %v2202, %v2302
      %v2348 = vadd.f32 %v2203, %v2305
      %v2349 = vadd.f32 %v2204, %v2307
      %v2350 = vadd.f32 %v2205, %v2310
      %v2351 = vadd.f32 %v2206, %v2312
      %v2352 = vadd.f32 %v2207, %v2315
      %v2353 = vadd.f32 %v2208, %v2317
      %v2354 = vadd.f32 %v2209, %v2320
      %v2355 = vadd.f32 %v2210, %v2322
      %v2356 = vtanh.pop %v2324
      %v2357 = vtanh.pop %v2325
      %v2358 = vtanh.pop %v2326
      %v2359 = vtanh.pop %v2327
      %v2360 = vtanh.pop %v2328
      %v2361 = vtanh.pop %v2329
      %v2362 = vtanh.pop %v2330
      %v2363 = vtanh.pop %v2331
      %v2364 = vtanh.pop %v2332
      %v2365 = vtanh.pop %v2333
      %v2366 = vtanh.pop %v2334
      %v2367 = vtanh.pop %v2335
      %v2368 = vtanh.pop %v2336
      %v2369 = vtanh.pop %v2337
      %v2370 = vtanh.pop %v2338
      %v2371 = vtanh.pop %v2339
      %v2372 = vtanh.pop %v2340
      %v2373 = vtanh.pop %v2341
      %v2374 = vtanh.pop %v2342
      %v2375 = vtanh.pop %v2343
      %v2376 = vtanh.pop %v2344
      %v2377 = vtanh.pop %v2345
      %v2378 = vtanh.pop %v2346
      %v2379 = vtanh.pop %v2347
      %v2380 = vtanh.pop %v2348
      %v2381 = vtanh.pop %v2349
      %v2382 = vtanh.pop %v2350
      %v2383 = vtanh.pop %v2351
      %v2384 = vtanh.pop %v2352
      %v2385 = vtanh.pop %v2353
      %v2386 = vtanh.pop %v2354
      %v2387 = vtanh.pop %v2355
      %2388 = vst [vmem:[%s335] sm:$0xff] %v2356
      %2389 = vst [vmem:[%s335 + $0x8] sm:$0xff] %v2357
      %2390 = vst [vmem:[%s335 + $0x10] sm:$0xff] %v2358
      %2391 = vst [vmem:[%s335 + $0x18] sm:$0xff] %v2359
      %2392 = vst [vmem:[%s335 + $0x20] sm:$0xff] %v2360
      %2393 = vst [vmem:[%s335 + $0x28] sm:$0xff] %v2361
      %2394 = vst [vmem:[%s335 + $0x30] sm:$0xff] %v2362
      %2395 = vst [vmem:[%s335 + $0x38] sm:$0xff] %v2363
      %2396 = vst [vmem:[%s335 + $0x40] sm:$0xff] %v2364
      %2397 = vst [vmem:[%s335 + $0x48] sm:$0xff] %v2365
      %2398 = vst [vmem:[%s335 + $0x50] sm:$0xff] %v2366
      %2399 = vst [vmem:[%s335 + $0x58] sm:$0xff] %v2367
      %2400 = vst [vmem:[%s335 + $0x60] sm:$0xff] %v2368
      %2401 = vst [vmem:[%s335 + $0x68] sm:$0xff] %v2369
      %2402 = vst [vmem:[%s335 + $0x70] sm:$0xff] %v2370
      %2403 = vst [vmem:[%s335 + $0x78] sm:$0xff] %v2371
      %2404 = vst [vmem:[%s335 + $0x80] sm:$0xff] %v2372
      %2405 = vst [vmem:[%s335 + $0x88] sm:$0xff] %v2373
      %2406 = vst [vmem:[%s335 + $0x90] sm:$0xff] %v2374
      %2407 = vst [vmem:[%s335 + $0x98] sm:$0xff] %v2375
      %2408 = vst [vmem:[%s335 + $0xa0] sm:$0xff] %v2376
      %2409 = vst [vmem:[%s335 + $0xa8] sm:$0xff] %v2377
      %2410 = vst [vmem:[%s335 + $0xb0] sm:$0xff] %v2378
      %2411 = vst [vmem:[%s335 + $0xb8] sm:$0xff] %v2379
      %2412 = vst [vmem:[%s335 + $0xc0] sm:$0xff] %v2380
      %2413 = vst [vmem:[%s335 + $0xc8] sm:$0xff] %v2381
      %2414 = vst [vmem:[%s335 + $0xd0] sm:$0xff] %v2382
      %2415 = vst [vmem:[%s335 + $0xd8] sm:$0xff] %v2383
      %2416 = vst [vmem:[%s335 + $0xe0] sm:$0xff] %v2384
      %2417 = vst [vmem:[%s335 + $0xe8] sm:$0xff] %v2385
      %2418 = vst [vmem:[%s335 + $0xf0] sm:$0xff] %v2386
      %2419 = vst [vmem:[%s335 + $0xf8] sm:$0xff] %v2387
      %s2420 = smul.u32 16, %s21
      %p2421 = scmp.lt.s32.totalorder %s20, 1
      %s2422 = scalar_select %p2421, %s20, 1
      %p2423 = scmp.lt.s32.totalorder %s2420, 15
      %s2424 = scalar_select %p2423, %s2420, 15
      %s2425 = smul.addr %s2424, 2
      %s2426 = smul.addr %s2422, 32
      %s2427 = sadd.s32 %s2425, %s2426
      %s2428 = smul.addr %s2427, 8
      %s2429 = scalar_lea.vmem %s5, %s2428
      // Predicated region
      $region41: #{decoder_forward.11} parent=39 // pred_check
        %p2430 = pneg %p174
      $region42: #{decoder_forward.11} parent=39 // pred_check_branch
        %2432 = sbr.rel (%p2430) target = $region44
      $region43: #{decoder_forward.11} parent=39 // pred_region
        %s2433 = smul.u32 16, %s21
      $region44: #{decoder_forward.11} parent=39 // pred_fallthru
        _
    $region40: #{decoder_forward.11} parent=5 // pred_fallthru
      _
    %p2434 = scmp.le.s32.totalorder 2, %s11
    // Predicated region
    $region45: #{decoder_forward.11} parent=5 // pred_check
      %p2435 = pneg %p2434
    $region46: #{decoder_forward.11} parent=5 // pred_check_branch
      %2437 = sbr.rel (%p2435) target = $region48
    $region47: #{decoder_forward.11} parent=5 // pred_region
      %s2438 = ssub.s32 %s11, 2
      // Predicated region
      $region49: #{decoder_forward.11} parent=47 // pred_check
        %p2439 = pneg %p180
      $region50: #{decoder_forward.11} parent=47 // pred_check_branch
        %2441 = sbr.rel (%p2439) target = $region52
      $region51: #{decoder_forward.11} parent=47 // pred_region
        %s2442 = smul.u32 16, %s23
        %p2443 = scmp.lt.s32.totalorder %s22, 1
        %s2444 = scalar_select %p2443, %s22, 1
        %p2445 = scmp.lt.s32.totalorder %s2442, 15
        %s2446 = scalar_select %p2445, %s2442, 15
        %s2447 = smul.addr %s2446, 2
        %s2448 = smul.addr %s2444, 32
        %s2449 = sadd.s32 %s2447, %s2448
        %s2450 = smul.addr %s2449, 8
        %s2451 = scalar_lea.vmem %s5, %s2450
      $region52: #{decoder_forward.11} parent=47 // pred_fallthru
        _
    $region48: #{decoder_forward.11} parent=5 // pred_fallthru
      _
  $region6: #{decoder_forward.11} parent=0 // loop_footer
    %s15 = sadd.s32 1, %s11
  $region7: #{decoder_forward.11} parent=0 // loop_footer_branch
    %10 = sbr.rel target = $region3
  $region8: #{decoder_forward.11} parent=0 // loop_exit
    _

</llo_original>
